<compile_context>
chip_gen: v7x
topology: tpu7x:2x2x1
jax: 0.10.0
libtpu: 0.0.40
codegen_flags: <defaults>
</compile_context>

<pallas_src>
import functools

import jax
import jax.numpy as jnp
from jax.experimental import pallas as pl
from jax.experimental.pallas import tpu as pltpu


def _round_up(v, m):
    return (v + m - 1) // m * m


# -----------------------------------------------------------------------------
# Pallas kernel: one EnBaseLayer forward over a block of TN nodes.
# -----------------------------------------------------------------------------
def _egnn_layer_kernel(h_ref, bnbr_ref, dm_ref,
                       w1hi_ref, b1e_ref, w2e_ref, b2e_ref,
                       winf_ref, binf_ref,
                       wn1_ref, bn1_ref, wn2_ref, bn2_ref,
                       gamma_ref, beta_ref, o_ref):
    TN, H = h_ref.shape
    KP = bnbr_ref.shape[1]

    h = h_ref[...]                                   # [TN, H]  f32
    hb = h.astype(jnp.bfloat16)                      # matmul operand

    # ---- edge_mlp layer 1: relu(hi @ W1_dst + (h @ W1_src)[nbr] + b1) ----
    # (src-side projection is hoisted per-node in the wrapper, gathered, and
    #  streamed here as bf16; the add + ReLU are done in f32)
    a = jnp.dot(hb, w1hi_ref[...], preferred_element_type=jnp.float32)        # [TN, H]
    z1 = jnp.maximum(
        a[:, None, :] + bnbr_ref[...].astype(jnp.float32) + b1e_ref[...], 0.0)  # [TN, KP, H]

    # ---- edge_mlp layer 2: relu(z1 @ W2 + b2) ----
    m = jnp.maximum(
        jnp.dot(z1.reshape(TN * KP, H).astype(jnp.bfloat16), w2e_ref[...],
                preferred_element_type=jnp.float32) + b2e_ref[...], 0.0)      # [TN*KP, H]
    m3 = m.reshape(TN, KP, H)

    # ---- edge gating: sigmoid(edge_inf(mij) * sigmoid(tem/(||rel_x||+eps))) ----
    dm = dm_ref[...]                                                           # [TN, KP, 2]
    dis = dm[:, :, 0:1]                                                        # precomputed gate
    msk = dm[:, :, 1:2]                                                        # validity mask
    eij = jnp.sum(m3 * winf_ref[...], axis=-1, keepdims=True) + binf_ref[...]  # [TN, KP, 1]
    ew = jax.nn.sigmoid(eij * dis) * msk                                       # [TN, KP, 1]

    # ---- scatter_sum(mij * w, dst) == per-node sum over the KP neighbour slots ----
    mi = jnp.sum(m3 * ew, axis=1)                                              # [TN, H]

    # ---- node_mlp: relu(cat([mi, h]) @ W1 + b1) @ W2 + b2  (single 2H matmul) ----
    cat = jnp.concatenate([mi.astype(jnp.bfloat16), hb], axis=-1)              # [TN, 2H]
    z = jnp.maximum(
        jnp.dot(cat, wn1_ref[...], preferred_element_type=jnp.float32)
        + bn1_ref[...], 0.0)
    upd = jnp.dot(z.astype(jnp.bfloat16), wn2_ref[...],
                  preferred_element_type=jnp.float32) + bn2_ref[...]

    # ---- residual + LayerNorm over hidden dim ----
    hres = h + upd
    mu = jnp.mean(hres, axis=-1, keepdims=True)
    var = jnp.mean((hres - mu) ** 2, axis=-1, keepdims=True)
    hn = (hres - mu) * jax.lax.rsqrt(var + 1e-5)
    o_ref[...] = (hn * gamma_ref[...] + beta_ref[...]).astype(o_ref.dtype)


# -----------------------------------------------------------------------------
# One EnBaseLayer (wrapper: project + gather neighbours, call pallas kernel).
# Graph-dependent tensors (nbr_p, dm_p) are layer-invariant and prepared once
# in protein3d_forward.
# -----------------------------------------------------------------------------
def en_base_layer(h, nbr_p, dm_p, params, *, tn, Np, KP):
    N, H = h.shape
    (w1hi_b, w1hj_b, b1e, w2e_b, b2e, winf, binf,
     wn1_b, bn1, wn2_b, bn2, gamma, beta) = params

    bf16, f32 = jnp.bfloat16, jnp.float32

    # Hoisted src-side projection: per-node instead of per-edge (K x fewer FLOPs).
    # The gathered per-edge stream is kept in bf16 -> half the dominant DMA.
    bh = jnp.dot(h.astype(bf16), w1hj_b, preferred_element_type=f32).astype(bf16)  # [N, H]
    bnbr = bh[nbr_p]                                                                # [Np, KP, H] bf16

    h_p = jnp.pad(h, ((0, Np - N), (0, 0)))

    full2 = lambda i: (0, 0)
    h_new = pl.pallas_call(
        _egnn_layer_kernel,
        out_shape=jax.ShapeDtypeStruct((Np, H), h.dtype),
        grid=(Np // tn,),
        in_specs=[
            pl.BlockSpec((tn, H), lambda i: (i, 0)),            # h
            pl.BlockSpec((tn, KP, H), lambda i: (i, 0, 0)),     # (h @ W1_src)[nbr] (bf16)
            pl.BlockSpec((tn, KP, 2), lambda i: (i, 0, 0)),     # [distance gate, mask]
            pl.BlockSpec((H, H), full2),                        # edge_mlp W1[:H] (bf16)
            pl.BlockSpec((1, H), full2),                        # edge_mlp b1
            pl.BlockSpec((H, H), full2),                        # edge_mlp W2 (bf16)
            pl.BlockSpec((1, H), full2),                        # edge_mlp b2
            pl.BlockSpec((1, H), full2),                        # edge_inf w
            pl.BlockSpec((1, 1), full2),                        # edge_inf b
            pl.BlockSpec((2 * H, H), full2),                    # node_mlp W1 (fused, bf16)
            pl.BlockSpec((1, H), full2),                        # node_mlp b1
            pl.BlockSpec((H, H), full2),                        # node_mlp W2 (bf16)
            pl.BlockSpec((1, H), full2),                        # node_mlp b2
            pl.BlockSpec((1, H), full2),                        # layernorm gamma
            pl.BlockSpec((1, H), full2),                        # layernorm beta
        ],
        out_specs=pl.BlockSpec((tn, H), lambda i: (i, 0)),
        compiler_params=pltpu.CompilerParams(dimension_semantics=("parallel",)),
    )(h_p, bnbr, dm_p,
      w1hi_b, b1e, w2e_b, b2e, winf, binf,
      wn1_b, bn1, wn2_b, bn2, gamma, beta)
    return h_new[:N]


# -----------------------------------------------------------------------------
# knn_graph (torch_geometric semantics, flow='source_to_target', loop=False).
# Plain-JAX glue: top-k neighbour search per node within the same batch.
# Distance matrix via ||xi||^2 + ||xj||^2 - 2 x x^T (no [N,N,3] intermediate).
# -----------------------------------------------------------------------------
def knn_graph(x, batch, k):
    N = x.shape[0]
    sq = jnp.sum(x * x, axis=-1)
    d = sq[:, None] + sq[None, :] - 2.0 * (x @ x.T)
    d = jnp.maximum(d, 0.0)                                 # guard tiny negatives (sqrt later)
    invalid = (batch[:, None] != batch[None, :]) | jnp.eye(N, dtype=bool)
    d = jnp.where(invalid, jnp.inf, d)
    neg_d, nbr = jax.lax.top_k(-d, k)                       # nbr[i] = k nearest srcs of dst i
    dist = -neg_d
    valid = jnp.isfinite(dist)
    return nbr.astype(jnp.int32), dist, valid               # [N,k], [N,k], [N,k]


# -----------------------------------------------------------------------------
# Cast matmul weights to bf16 once per forward; fuse node_mlp W1 into [2H, H].
# -----------------------------------------------------------------------------
def _prep_layer_params(params):
    (w1hi, w1hj, b1e, w2e, b2e, winf, binf,
     wn1mi, wn1h, bn1, wn2, bn2, gamma, beta) = params
    bf16 = jnp.bfloat16
    wn1 = jnp.concatenate([wn1mi, wn1h], axis=0)            # row order matches cat([mi, h])
    return (w1hi.astype(bf16), w1hj.astype(bf16), b1e, w2e.astype(bf16), b2e,
            winf, binf, wn1.astype(bf16), bn1, wn2.astype(bf16), bn2, gamma, beta)


# -----------------------------------------------------------------------------
# Protein3D_Representation forward.
# -----------------------------------------------------------------------------
def protein3d_forward(h, x, prot_batchs, layer_params, k, *, tn=256):
    N, H = h.shape

    # --- graph is layer-invariant (x is a pure pass-through): compute once ---
    nbr, dsq, valid = knn_graph(x, prot_batchs, k)
    src = nbr.reshape(-1).astype(jnp.int32)
    dst = jnp.repeat(jnp.arange(N, dtype=jnp.int32), k)
    # TODO(synk): with static shapes, invalid edges (proteins with < k+1 residues)
    # cannot be dropped from edge_index; they ARE excluded from message passing via `valid`.
    edge_index = jnp.stack([src, dst])

    # Distance gate sigmoid(tem / (||rel_x|| + eps)) precomputed once, lane-dense,
    # merged with the validity mask into a single [N, K, 2] tensor.
    edge_dis = jax.nn.sigmoid(30.0 / (jnp.sqrt(dsq) + 1e-8))       # [N, K]
    mask = valid.astype(jnp.float32)                               # [N, K]
    dm = jnp.stack([edge_dis, mask], axis=-1)                      # [N, K, 2]

    # --- padding: K -> KP (sublane aligned), N -> Np (multiple of node tile) ---
    KP = _round_up(max(k, 8), 8)
    # clamp tn so the grid has >= 2 steps when possible (v7x 2-TensorCore sharding)
    tn = max(8, min(_round_up(tn, 8), _round_up((N + 1) // 2, 8)))
    Np = _round_up(N, tn)
    nbr_p = jnp.pad(nbr, ((0, Np - N), (0, KP - k)))               # pad slots -> node 0 (masked)
    dm_p = jnp.pad(dm, ((0, Np - N), (0, KP - k), (0, 0)))         # pad slots -> gate 0, mask 0

    # --- weights cast to bf16 once per forward ---
    prepped = [_prep_layer_params(p) for p in layer_params]

    all_h, all_x = [], []
    for params in prepped:
        h = en_base_layer(h, nbr_p, dm_p, params, tn=tn, Np=Np, KP=KP)
        all_h.append(h)
        all_x.append(x)
    return h, x, all_h, edge_index


# -----------------------------------------------------------------------------
# Deterministic parameter init (mirrors EnBaseLayer __init__ shapes).
# -----------------------------------------------------------------------------
def init_layer_params(key, H):
    ks = jax.random.split(key, 10)
    def lin_w(k, fan_in, shape):
        return jax.random.normal(k, shape, jnp.float32) / jnp.sqrt(fan_in)
    # edge_mlp: Linear(2H,H) relu Linear(H,H) relu
    w1 = lin_w(ks[0], 2 * H, (2 * H, H))
    b1e = 0.1 * jax.random.normal(ks[1], (1, H), jnp.float32)
    w2e = lin_w(ks[2], H, (H, H))
    b2e = 0.1 * jax.random.normal(ks[3], (1, H), jnp.float32)
    # edge_inf: Linear(H, 1)
    winf = lin_w(ks[4], H, (1, H))
    binf = 0.1 * jax.random.normal(ks[5], (1, 1), jnp.float32)
    # node_mlp: Linear(2H,H) relu Linear(H,H)
    wn1 = lin_w(ks[6], 2 * H, (2 * H, H))
    bn1 = 0.1 * jax.random.normal(ks[7], (1, H), jnp.float32)
    wn2 = lin_w(ks[8], H, (H, H))
    bn2 = 0.1 * jax.random.normal(ks[9], (1, H), jnp.float32)
    # LayerNorm(H): default gamma=1, beta=0
    gamma = jnp.ones((1, H), jnp.float32)
    beta = jnp.zeros((1, H), jnp.float32)
    return (w1[:H], w1[H:], b1e, w2e, b2e, winf, binf,
            wn1[:H], wn1[H:], bn1, wn2, bn2, gamma, beta)


# -----------------------------------------------------------------------------
# Pure-JAX reference of one EnBaseLayer (mirrors the bf16-at-matmul math,
# including the bf16-streamed neighbour projection).
# -----------------------------------------------------------------------------
def ref_layer(h, x, nbr, dsq, valid, params):
    (w1hi, w1hj, b1e, w2e, b2e, winf, binf,
     wn1mi, wn1h, bn1, wn2, bn2, gamma, beta) = params
    bf16, f32 = jnp.bfloat16, jnp.float32
    hb = h.astype(bf16)
    a = jnp.dot(hb, w1hi.astype(bf16), preferred_element_type=f32)       # [N,H]
    bh = jnp.dot(hb, w1hj.astype(bf16), preferred_element_type=f32).astype(bf16)
    z1 = jax.nn.relu(a[:, None, :] + bh[nbr].astype(f32) + b1e)          # [N,K,H]
    m = jax.nn.relu(jnp.einsum('nkh,hg->nkg', z1.astype(bf16), w2e.astype(bf16),
                               preferred_element_type=f32) + b2e)        # [N,K,H]
    eij = jnp.sum(m * winf, -1, keepdims=True) + binf[0, 0]              # [N,K,1]
    edge_dis = jax.nn.sigmoid(30.0 / (jnp.sqrt(dsq)[..., None] + 1e-8))  # [N,K,1]
    ew = jax.nn.sigmoid(eij * edge_dis) * valid.astype(f32)[..., None]
    mi = jnp.sum(m * ew, axis=1)                                         # [N,H]
    z = jax.nn.relu(jnp.dot(mi.astype(bf16), wn1mi.astype(bf16), preferred_element_type=f32)
                    + jnp.dot(hb, wn1h.astype(bf16), preferred_element_type=f32) + bn1)
    hres = h + jnp.dot(z.astype(bf16), wn2.astype(bf16), preferred_element_type=f32) + bn2
    mu = hres.mean(-1, keepdims=True)
    var = ((hres - mu) ** 2).mean(-1, keepdims=True)
    return (hres - mu) * jax.lax.rsqrt(var + 1e-5) * gamma + beta, x


if __name__ == "__main__":
    # Small deterministic problem: 2 proteins x 64 residues, hidden 128, k=10.
    num_layers, H, K = 2, 128, 10
    N_per, n_prot = 64, 2
    N = N_per * n_prot

    key = jax.random.PRNGKey(0)
    kh, kx, kp = jax.random.split(key, 3)
    h0 = jax.random.normal(kh, (N, H), jnp.float32)
    x0 = jax.random.normal(kx, (N, 3), jnp.float32) * 3.0
    prot_batchs = jnp.repeat(jnp.arange(n_prot, dtype=jnp.int32), N_per)

    layer_params = [init_layer_params(jax.random.fold_in(kp, l), H)
                    for l in range(num_layers)]

    # Default tn=256; the wrapper clamps it so this small demo still runs a
    # >= 2-step grid (keeps both v7x TensorCores busy).
    fwd = jax.jit(functools.partial(protein3d_forward, k=K, tn=256))
    h_out, x_out, all_h, edge_index = fwd(h0, x0, prot_batchs, layer_params)
    jax.block_until_ready(h_out)

    # Pure-JAX reference of the full forward pass (graph hoisted, same as kernel path).
    nbr, dsq, valid = knn_graph(x0, prot_batchs, K)
    h_ref, x_ref = h0, x0
    for params in layer_params:
        h_ref, x_ref = ref_layer(h_ref, x_ref, nbr, dsq, valid, params)

    assert jnp.allclose(h_out, h_ref, atol=2e-3, rtol=2e-3), "mismatch vs reference"
    assert jnp.allclose(x_out, x0), "x must pass through unchanged"
    assert edge_index.shape == (2, N * K)
    assert len(all_h) == num_layers

    print("KERNEL_OK")
</pallas_src>

<mosaic_0001>
module attributes {stable_mosaic.version = 11 : i64} {
  func.func @_egnn_layer_kernel(%arg0: i32, %arg1: memref<64x128xf32, #tpu.memory_space<vmem>>, %arg2: memref<64x16x128xbf16, #tpu.memory_space<vmem>>, %arg3: memref<64x16x2xf32, #tpu.memory_space<vmem>>, %arg4: memref<128x128xbf16, #tpu.memory_space<vmem>>, %arg5: memref<1x128xf32, #tpu.memory_space<vmem>>, %arg6: memref<128x128xbf16, #tpu.memory_space<vmem>>, %arg7: memref<1x128xf32, #tpu.memory_space<vmem>>, %arg8: memref<1x128xf32, #tpu.memory_space<vmem>>, %arg9: memref<1x1xf32, #tpu.memory_space<vmem>>, %arg10: memref<256x128xbf16, #tpu.memory_space<vmem>>, %arg11: memref<1x128xf32, #tpu.memory_space<vmem>>, %arg12: memref<128x128xbf16, #tpu.memory_space<vmem>>, %arg13: memref<1x128xf32, #tpu.memory_space<vmem>>, %arg14: memref<1x128xf32, #tpu.memory_space<vmem>>, %arg15: memref<1x128xf32, #tpu.memory_space<vmem>>, %arg16: memref<64x128xf32, #tpu.memory_space<vmem>>) attributes {dimension_semantics = [#tpu.dimension_semantics<parallel>], iteration_bounds = array<i64: 2>, scalar_prefetch = 0 : i64, scratch_operands = 0 : i64, tpu.core_type = #tpu.core_type<tc>, window_params = [{transform_indices = @transform_0, window_bounds = array<i64: 64, 128>}, {transform_indices = @transform_1, window_bounds = array<i64: 64, 16, 128>}, {transform_indices = @transform_2, window_bounds = array<i64: 64, 16, 2>}, {pipeline_mode = #tpu.pipeline_mode<synchronous>, transform_indices = @transform_3, window_bounds = array<i64: 128, 128>}, {pipeline_mode = #tpu.pipeline_mode<synchronous>, transform_indices = @transform_4, window_bounds = array<i64: 1, 128>}, {pipeline_mode = #tpu.pipeline_mode<synchronous>, transform_indices = @transform_5, window_bounds = array<i64: 128, 128>}, {pipeline_mode = #tpu.pipeline_mode<synchronous>, transform_indices = @transform_6, window_bounds = array<i64: 1, 128>}, {pipeline_mode = #tpu.pipeline_mode<synchronous>, transform_indices = @transform_7, window_bounds = array<i64: 1, 128>}, {pipeline_mode = #tpu.pipeline_mode<synchronous>, transform_indices = @transform_8, window_bounds = array<i64: 1, 1>}, {pipeline_mode = #tpu.pipeline_mode<synchronous>, transform_indices = @transform_9, window_bounds = array<i64: 256, 128>}, {pipeline_mode = #tpu.pipeline_mode<synchronous>, transform_indices = @transform_10, window_bounds = array<i64: 1, 128>}, {pipeline_mode = #tpu.pipeline_mode<synchronous>, transform_indices = @transform_11, window_bounds = array<i64: 128, 128>}, {pipeline_mode = #tpu.pipeline_mode<synchronous>, transform_indices = @transform_12, window_bounds = array<i64: 1, 128>}, {pipeline_mode = #tpu.pipeline_mode<synchronous>, transform_indices = @transform_13, window_bounds = array<i64: 1, 128>}, {pipeline_mode = #tpu.pipeline_mode<synchronous>, transform_indices = @transform_14, window_bounds = array<i64: 1, 128>}, {transform_indices = @transform_15, window_bounds = array<i64: 64, 128>}]} {
    %c0 = arith.constant 0 : index
    %c0_0 = arith.constant 0 : index
    %0 = vector.load %arg1[%c0, %c0_0] : memref<64x128xf32, #tpu.memory_space<vmem>>, vector<64x128xf32>
    %1 = arith.truncf %0 : vector<64x128xf32> to vector<64x128xbf16>
    %c0_1 = arith.constant 0 : index
    %c0_2 = arith.constant 0 : index
    %2 = vector.load %arg4[%c0_1, %c0_2] : memref<128x128xbf16, #tpu.memory_space<vmem>>, vector<128x128xbf16>
    %cst = arith.constant dense<0.000000e+00> : vector<64x128xf32>
    %3 = tpu.matmul %1, %2, %cst {dimension_numbers = #tpu.dot_dimension_numbers<[1], [0], [0], [1], [0, 0, 1, 1], [], []>} : vector<64x128xbf16>, vector<128x128xbf16>, vector<64x128xf32> -> vector<64x128xf32>
    %4 = vector.shape_cast %3 : vector<64x128xf32> to vector<64x1x128xf32>
    %c0_3 = arith.constant 0 : index
    %c0_4 = arith.constant 0 : index
    %c0_5 = arith.constant 0 : index
    %5 = vector.load %arg2[%c0_3, %c0_4, %c0_5] : memref<64x16x128xbf16, #tpu.memory_space<vmem>>, vector<64x16x128xbf16>
    %6 = arith.extf %5 : vector<64x16x128xbf16> to vector<64x16x128xf32>
    %7 = vector.broadcast %4 : vector<64x1x128xf32> to vector<64x16x128xf32>
    %8 = arith.addf %7, %6 : vector<64x16x128xf32>
    %c0_6 = arith.constant 0 : index
    %c0_7 = arith.constant 0 : index
    %9 = vector.load %arg5[%c0_6, %c0_7] : memref<1x128xf32, #tpu.memory_space<vmem>>, vector<1x128xf32>
    %10 = vector.shape_cast %9 : vector<1x128xf32> to vector<1x1x128xf32>
    %11 = vector.broadcast %10 : vector<1x1x128xf32> to vector<64x16x128xf32>
    %12 = arith.addf %8, %11 : vector<64x16x128xf32>
    %cst_8 = arith.constant 0.000000e+00 : f32
    %13 = vector.broadcast %cst_8 : f32 to vector<64x16x128xf32>
    %14 = arith.maximumf %12, %13 : vector<64x16x128xf32>
    %15 = vector.shape_cast %14 : vector<64x16x128xf32> to vector<1024x128xf32>
    %16 = arith.truncf %15 : vector<1024x128xf32> to vector<1024x128xbf16>
    %c0_9 = arith.constant 0 : index
    %c0_10 = arith.constant 0 : index
    %17 = vector.load %arg6[%c0_9, %c0_10] : memref<128x128xbf16, #tpu.memory_space<vmem>>, vector<128x128xbf16>
    %cst_11 = arith.constant dense<0.000000e+00> : vector<1024x128xf32>
    %18 = tpu.matmul %16, %17, %cst_11 {dimension_numbers = #tpu.dot_dimension_numbers<[1], [0], [0], [1], [0, 0, 1, 1], [], []>} : vector<1024x128xbf16>, vector<128x128xbf16>, vector<1024x128xf32> -> vector<1024x128xf32>
    %c0_12 = arith.constant 0 : index
    %c0_13 = arith.constant 0 : index
    %19 = vector.load %arg7[%c0_12, %c0_13] : memref<1x128xf32, #tpu.memory_space<vmem>>, vector<1x128xf32>
    %20 = vector.broadcast %19 : vector<1x128xf32> to vector<1024x128xf32>
    %21 = arith.addf %18, %20 : vector<1024x128xf32>
    %cst_14 = arith.constant 0.000000e+00 : f32
    %22 = vector.broadcast %cst_14 : f32 to vector<1024x128xf32>
    %23 = arith.maximumf %21, %22 : vector<1024x128xf32>
    %24 = vector.shape_cast %23 : vector<1024x128xf32> to vector<64x16x128xf32>
    %c0_15 = arith.constant 0 : index
    %c0_16 = arith.constant 0 : index
    %c0_17 = arith.constant 0 : index
    %25 = vector.load %arg3[%c0_15, %c0_16, %c0_17] : memref<64x16x2xf32, #tpu.memory_space<vmem>>, vector<64x16x2xf32>
    %26 = vector.extract_strided_slice %25 {offsets = [0, 0, 0], sizes = [64, 16, 1], strides = [1, 1, 1]} : vector<64x16x2xf32> to vector<64x16x1xf32>
    %27 = vector.extract_strided_slice %25 {offsets = [0, 0, 1], sizes = [64, 16, 1], strides = [1, 1, 1]} : vector<64x16x2xf32> to vector<64x16x1xf32>
    %c0_18 = arith.constant 0 : index
    %c0_19 = arith.constant 0 : index
    %28 = vector.load %arg8[%c0_18, %c0_19] : memref<1x128xf32, #tpu.memory_space<vmem>>, vector<1x128xf32>
    %29 = vector.shape_cast %28 : vector<1x128xf32> to vector<1x1x128xf32>
    %30 = vector.broadcast %29 : vector<1x1x128xf32> to vector<64x16x128xf32>
    %31 = arith.mulf %24, %30 : vector<64x16x128xf32>
    %cst_20 = arith.constant dense<0.000000e+00> : vector<64x16xf32>
    %32 = vector.multi_reduction <add>, %31, %cst_20 [2] : vector<64x16x128xf32> to vector<64x16xf32>
    %33 = vector.shape_cast %32 : vector<64x16xf32> to vector<64x16x1xf32>
    %c0_21 = arith.constant 0 : index
    %c0_22 = arith.constant 0 : index
    %34 = vector.load %arg9[%c0_21, %c0_22] : memref<1x1xf32, #tpu.memory_space<vmem>>, vector<1x1xf32>
    %35 = vector.shape_cast %34 : vector<1x1xf32> to vector<1x1x1xf32>
    %36 = vector.broadcast %35 : vector<1x1x1xf32> to vector<64x16x1xf32>
    %37 = arith.addf %33, %36 : vector<64x16x1xf32>
    %38 = arith.mulf %37, %26 : vector<64x16x1xf32>
    %39 = arith.negf %38 : vector<64x16x1xf32>
    %40 = math.exp %39 : vector<64x16x1xf32>
    %cst_23 = arith.constant 1.000000e+00 : f32
    %41 = vector.broadcast %cst_23 : f32 to vector<64x16x1xf32>
    %42 = arith.addf %41, %40 : vector<64x16x1xf32>
    %43 = arith.divf %41, %42 : vector<64x16x1xf32>
    %44 = arith.mulf %43, %27 : vector<64x16x1xf32>
    %45 = vector.broadcast %44 : vector<64x16x1xf32> to vector<64x16x128xf32>
    %46 = arith.mulf %24, %45 : vector<64x16x128xf32>
    %cst_24 = arith.constant dense<0.000000e+00> : vector<64x128xf32>
    %47 = vector.multi_reduction <add>, %46, %cst_24 [1] : vector<64x16x128xf32> to vector<64x128xf32>
    %48 = arith.truncf %47 : vector<64x128xf32> to vector<64x128xbf16>
    %49 = tpu.concatenate %48, %1 in 1 : vector<64x128xbf16>, vector<64x128xbf16> -> vector<64x256xbf16>
    %c0_25 = arith.constant 0 : index
    %c0_26 = arith.constant 0 : index
    %50 = vector.load %arg10[%c0_25, %c0_26] : memref<256x128xbf16, #tpu.memory_space<vmem>>, vector<256x128xbf16>
    %cst_27 = arith.constant dense<0.000000e+00> : vector<64x128xf32>
    %51 = tpu.matmul %49, %50, %cst_27 {dimension_numbers = #tpu.dot_dimension_numbers<[1], [0], [0], [1], [0, 0, 1, 1], [], []>} : vector<64x256xbf16>, vector<256x128xbf16>, vector<64x128xf32> -> vector<64x128xf32>
    %c0_28 = arith.constant 0 : index
    %c0_29 = arith.constant 0 : index
    %52 = vector.load %arg11[%c0_28, %c0_29] : memref<1x128xf32, #tpu.memory_space<vmem>>, vector<1x128xf32>
    %53 = vector.broadcast %52 : vector<1x128xf32> to vector<64x128xf32>
    %54 = arith.addf %51, %53 : vector<64x128xf32>
    %cst_30 = arith.constant 0.000000e+00 : f32
    %55 = vector.broadcast %cst_30 : f32 to vector<64x128xf32>
    %56 = arith.maximumf %54, %55 : vector<64x128xf32>
    %57 = arith.truncf %56 : vector<64x128xf32> to vector<64x128xbf16>
    %c0_31 = arith.constant 0 : index
    %c0_32 = arith.constant 0 : index
    %58 = vector.load %arg12[%c0_31, %c0_32] : memref<128x128xbf16, #tpu.memory_space<vmem>>, vector<128x128xbf16>
    %cst_33 = arith.constant dense<0.000000e+00> : vector<64x128xf32>
    %59 = tpu.matmul %57, %58, %cst_33 {dimension_numbers = #tpu.dot_dimension_numbers<[1], [0], [0], [1], [0, 0, 1, 1], [], []>} : vector<64x128xbf16>, vector<128x128xbf16>, vector<64x128xf32> -> vector<64x128xf32>
    %c0_34 = arith.constant 0 : index
    %c0_35 = arith.constant 0 : index
    %60 = vector.load %arg13[%c0_34, %c0_35] : memref<1x128xf32, #tpu.memory_space<vmem>>, vector<1x128xf32>
    %61 = vector.broadcast %60 : vector<1x128xf32> to vector<64x128xf32>
    %62 = arith.addf %59, %61 : vector<64x128xf32>
    %63 = arith.addf %0, %62 : vector<64x128xf32>
    %cst_36 = arith.constant dense<0.000000e+00> : vector<64xf32>
    %64 = vector.multi_reduction <add>, %63, %cst_36 [1] : vector<64x128xf32> to vector<64xf32>
    %65 = vector.shape_cast %64 : vector<64xf32> to vector<64x1xf32>
    %cst_37 = arith.constant 1.280000e+02 : f32
    %66 = vector.broadcast %cst_37 : f32 to vector<64x1xf32>
    %67 = arith.divf %65, %66 : vector<64x1xf32>
    %68 = vector.broadcast %67 : vector<64x1xf32> to vector<64x128xf32>
    %69 = arith.subf %63, %68 : vector<64x128xf32>
    %70 = arith.mulf %69, %69 : vector<64x128xf32>
    %cst_38 = arith.constant dense<0.000000e+00> : vector<64xf32>
    %71 = vector.multi_reduction <add>, %70, %cst_38 [1] : vector<64x128xf32> to vector<64xf32>
    %72 = vector.shape_cast %71 : vector<64xf32> to vector<64x1xf32>
    %cst_39 = arith.constant 1.280000e+02 : f32
    %73 = vector.broadcast %cst_39 : f32 to vector<64x1xf32>
    %74 = arith.divf %72, %73 : vector<64x1xf32>
    %75 = vector.broadcast %67 : vector<64x1xf32> to vector<64x128xf32>
    %76 = arith.subf %63, %75 : vector<64x128xf32>
    %cst_40 = arith.constant 9.99999974E-6 : f32
    %77 = vector.broadcast %cst_40 : f32 to vector<64x1xf32>
    %78 = arith.addf %74, %77 : vector<64x1xf32>
    %79 = math.rsqrt %78 : vector<64x1xf32>
    %80 = vector.broadcast %79 : vector<64x1xf32> to vector<64x128xf32>
    %81 = arith.mulf %76, %80 : vector<64x128xf32>
    %c0_41 = arith.constant 0 : index
    %c0_42 = arith.constant 0 : index
    %82 = vector.load %arg14[%c0_41, %c0_42] : memref<1x128xf32, #tpu.memory_space<vmem>>, vector<1x128xf32>
    %83 = vector.broadcast %82 : vector<1x128xf32> to vector<64x128xf32>
    %84 = arith.mulf %81, %83 : vector<64x128xf32>
    %c0_43 = arith.constant 0 : index
    %c0_44 = arith.constant 0 : index
    %85 = vector.load %arg15[%c0_43, %c0_44] : memref<1x128xf32, #tpu.memory_space<vmem>>, vector<1x128xf32>
    %86 = vector.broadcast %85 : vector<1x128xf32> to vector<64x128xf32>
    %87 = arith.addf %84, %86 : vector<64x128xf32>
    %c0_45 = arith.constant 0 : index
    %c0_46 = arith.constant 0 : index
    %88 = vector.load %arg16[%c0_45, %c0_46] : memref<64x128xf32, #tpu.memory_space<vmem>>, vector<64x128xf32>
    tpu.vector_store %arg16[%c0_45, %c0_46], %87 {strides = array<i32>} : memref<64x128xf32, #tpu.memory_space<vmem>>, vector<64x128xf32>,
    return
  }
  func.func @transform_0(%arg0: i32) -> (i32, i32) {
    %c0_i32 = arith.constant 0 : i32
    %c0_i32_0 = arith.constant 0 : i32
    return %arg0, %c0_i32 : i32, i32
  }
  func.func @transform_1(%arg0: i32) -> (i32, i32, i32) {
    %c0_i32 = arith.constant 0 : i32
    %c0_i32_0 = arith.constant 0 : i32
    %c0_i32_1 = arith.constant 0 : i32
    return %arg0, %c0_i32, %c0_i32_0 : i32, i32, i32
  }
  func.func @transform_2(%arg0: i32) -> (i32, i32, i32) {
    %c0_i32 = arith.constant 0 : i32
    %c0_i32_0 = arith.constant 0 : i32
    %c0_i32_1 = arith.constant 0 : i32
    return %arg0, %c0_i32, %c0_i32_0 : i32, i32, i32
  }
  func.func @transform_3(%arg0: i32) -> (i32, i32) {
    %c0_i32 = arith.constant 0 : i32
    %c0_i32_0 = arith.constant 0 : i32
    %c0_i32_1 = arith.constant 0 : i32
    return %c0_i32, %c0_i32_0 : i32, i32
  }
  func.func @transform_4(%arg0: i32) -> (i32, i32) {
    %c0_i32 = arith.constant 0 : i32
    %c0_i32_0 = arith.constant 0 : i32
    %c0_i32_1 = arith.constant 0 : i32
    return %c0_i32, %c0_i32_0 : i32, i32
  }
  func.func @transform_5(%arg0: i32) -> (i32, i32) {
    %c0_i32 = arith.constant 0 : i32
    %c0_i32_0 = arith.constant 0 : i32
    %c0_i32_1 = arith.constant 0 : i32
    return %c0_i32, %c0_i32_0 : i32, i32
  }
  func.func @transform_6(%arg0: i32) -> (i32, i32) {
    %c0_i32 = arith.constant 0 : i32
    %c0_i32_0 = arith.constant 0 : i32
    %c0_i32_1 = arith.constant 0 : i32
    return %c0_i32, %c0_i32_0 : i32, i32
  }
  func.func @transform_7(%arg0: i32) -> (i32, i32) {
    %c0_i32 = arith.constant 0 : i32
    %c0_i32_0 = arith.constant 0 : i32
    %c0_i32_1 = arith.constant 0 : i32
    return %c0_i32, %c0_i32_0 : i32, i32
  }
  func.func @transform_8(%arg0: i32) -> (i32, i32) {
    %c0_i32 = arith.constant 0 : i32
    %c0_i32_0 = arith.constant 0 : i32
    %c0_i32_1 = arith.constant 0 : i32
    return %c0_i32, %c0_i32_0 : i32, i32
  }
  func.func @transform_9(%arg0: i32) -> (i32, i32) {
    %c0_i32 = arith.constant 0 : i32
    %c0_i32_0 = arith.constant 0 : i32
    %c0_i32_1 = arith.constant 0 : i32
    return %c0_i32, %c0_i32_0 : i32, i32
  }
  func.func @transform_10(%arg0: i32) -> (i32, i32) {
    %c0_i32 = arith.constant 0 : i32
    %c0_i32_0 = arith.constant 0 : i32
    %c0_i32_1 = arith.constant 0 : i32
    return %c0_i32, %c0_i32_0 : i32, i32
  }
  func.func @transform_11(%arg0: i32) -> (i32, i32) {
    %c0_i32 = arith.constant 0 : i32
    %c0_i32_0 = arith.constant 0 : i32
    %c0_i32_1 = arith.constant 0 : i32
    return %c0_i32, %c0_i32_0 : i32, i32
  }
  func.func @transform_12(%arg0: i32) -> (i32, i32) {
    %c0_i32 = arith.constant 0 : i32
    %c0_i32_0 = arith.constant 0 : i32
    %c0_i32_1 = arith.constant 0 : i32
    return %c0_i32, %c0_i32_0 : i32, i32
  }
  func.func @transform_13(%arg0: i32) -> (i32, i32) {
    %c0_i32 = arith.constant 0 : i32
    %c0_i32_0 = arith.constant 0 : i32
    %c0_i32_1 = arith.constant 0 : i32
    return %c0_i32, %c0_i32_0 : i32, i32
  }
  func.func @transform_14(%arg0: i32) -> (i32, i32) {
    %c0_i32 = arith.constant 0 : i32
    %c0_i32_0 = arith.constant 0 : i32
    %c0_i32_1 = arith.constant 0 : i32
    return %c0_i32, %c0_i32_0 : i32, i32
  }
  func.func @transform_15(%arg0: i32) -> (i32, i32) {
    %c0_i32 = arith.constant 0 : i32
    %c0_i32_0 = arith.constant 0 : i32
    return %arg0, %c0_i32 : i32, i32
  }
}

</mosaic_0001>

<llo_original>
// kernel: protein3d_forward.2
$region0: #{protein3d_forward.2}
  #allocation0 [shape = 'u32[]', space=smem, size = 0x4, offset = 0x4, fixed_abs, tag = 'smem constant byte address 0x4 - core index']
  #allocation1 [shape = 'u32[144,128]{1,0:T(1,128)}', space=vmem, size = 0x12000, scoped, tag = 'internal scratch']
  #allocation2 [shape = 'f32[1,1]{1,0:T(1,128)S(1)}', space=vmem, size = 0x200, scoped, tag = 'scoped memory for protein3d_forward.2']
  %s0 = inlined_call_operand.vmem [shape: f32[128,128], index: 0, kind: input, shape index: {}]
  %s1 = inlined_call_operand.vmem [shape: bf16[128,16,128], index: 1, kind: input, shape index: {}]
  %s2 = inlined_call_operand.vmem [shape: f32[128,16,2], index: 2, kind: input, shape index: {}]
  %s3 = inlined_call_operand.vmem [shape: bf16[128,128], index: 3, kind: input, shape index: {}]
  %s4 = inlined_call_operand.vmem [shape: f32[1,128], index: 4, kind: input, shape index: {}]
  %s5 = inlined_call_operand.vmem [shape: bf16[128,128], index: 5, kind: input, shape index: {}]
  %s6 = inlined_call_operand.vmem [shape: f32[1,128], index: 6, kind: input, shape index: {}]
  %s7 = inlined_call_operand.vmem [shape: f32[1,128], index: 7, kind: input, shape index: {}]
  %s8 = inlined_call_operand.<no memory space> [shape: f32[1,1], index: 8, kind: input, shape index: {}]
  %s9 = inlined_call_operand.vmem [shape: bf16[256,128], index: 9, kind: input, shape index: {}]
  %s10 = inlined_call_operand.vmem [shape: f32[1,128], index: 10, kind: input, shape index: {}]
  %s11 = inlined_call_operand.vmem [shape: bf16[128,128], index: 11, kind: input, shape index: {}]
  %s12 = inlined_call_operand.vmem [shape: f32[1,128], index: 12, kind: input, shape index: {}]
  %s13 = inlined_call_operand.vmem [shape: f32[1,128], index: 13, kind: input, shape index: {}]
  %s14 = inlined_call_operand.vmem [shape: f32[1,128], index: 14, kind: input, shape index: {}]
  %s15 = inlined_call_operand.vmem [shape: f32[128,128], index: 15, kind: output, shape index: {}]
  %s16 = sld [smem:[#allocation0]]
  $region93: #{protein3d_forward.2} parent=0
    _
  %s18 = ssub.s32 1, %s16
  %s19 = scalar_select 0, %s18, %s16
  %v20 = vstv %s8
  %21 = vst [vmem:[#allocation2] sm:$0x1] %v20
  loop: start=0, step=1, limit=4
  $region2: #{protein3d_forward.2} parent=0 // loop_pre_header
    _
  $region3: #{protein3d_forward.2} parent=0 // loop_header
    %s23 = sphi 0, %s27
    %p24 = scmp.ge.s32.totalorder %s23, 4
    %s33 = sphi 0, %s35
    %s36 = sphi 0, %s33
    %s37 = sphi 0, %s36
    %s53 = sphi 0, %s37
    %s59 = sphi 0, %s61
    %s62 = sphi 0, %s59
    %s63 = sphi 0, %s62
    %s79 = sphi 0, %s63
    %s85 = sphi 0, %s87
    %s88 = sphi 0, %s85
    %s89 = sphi 0, %s88
    %s105 = sphi 0, %s89
    %s109 = sphi 0, %s109
    %s111 = sphi 0, %s109
    %s112 = sphi 0, %s111
    %s126 = sphi 0, %s112
    %s130 = sphi 0, %s130
    %s132 = sphi 0, %s130
    %s133 = sphi 0, %s132
    %s147 = sphi 0, %s133
    %s151 = sphi 0, %s151
    %s153 = sphi 0, %s151
    %s154 = sphi 0, %s153
    %s168 = sphi 0, %s154
    %s172 = sphi 0, %s172
    %s174 = sphi 0, %s172
    %s175 = sphi 0, %s174
    %s189 = sphi 0, %s175
    %s193 = sphi 0, %s193
    %s195 = sphi 0, %s193
    %s196 = sphi 0, %s195
    %s210 = sphi 0, %s196
    %s214 = sphi 0, %s214
    %s216 = sphi 0, %s214
    %s217 = sphi 0, %s216
    %s231 = sphi 0, %s217
    %s235 = sphi 0, %s235
    %s237 = sphi 0, %s235
    %s238 = sphi 0, %s237
    %s252 = sphi 0, %s238
    %s256 = sphi 0, %s256
    %s258 = sphi 0, %s256
    %s259 = sphi 0, %s258
    %s273 = sphi 0, %s259
    %s277 = sphi 0, %s277
    %s279 = sphi 0, %s277
    %s280 = sphi 0, %s279
    %s294 = sphi 0, %s280
    %s298 = sphi 0, %s298
    %s300 = sphi 0, %s298
    %s301 = sphi 0, %s300
    %s315 = sphi 0, %s301
    %s319 = sphi 0, %s319
    %s321 = sphi 0, %s319
    %s322 = sphi 0, %s321
    %s336 = sphi 0, %s322
    %s340 = sphi 0, %s340
    %s342 = sphi 0, %s340
    %s343 = sphi 0, %s342
    %s357 = sphi 0, %s343
    %s363 = sphi 0, %s365
    %s366 = sphi 0, %s363
    %s367 = sphi 0, %s366
    %s383 = sphi 0, %s367
  $region4: #{protein3d_forward.2} parent=0 // loop_header_branch
    %26 = sbr.rel (%p24) target = $region8
  $region5: #{protein3d_forward.2} parent=0 // loop_body
    %s28 = ssub.s32 %s23, 1
    %s29 = ssub.s32 %s23, 2
    %s30 = sadd.s32 %s23, 1
    %s31 = ssub.s32 %s23, %s30
    %p32 = scmp.eq.s32.totalorder %s31, 0
    %s34 = sadd.s32 %s33, 1
    %s35 = scalar_select %p32, %s33, %s34
    %p38 = pneg %p32
    %p39 = scmp.eq.s32.totalorder %s23, 1
    %p40 = por %p38, %p39
    %p41 = scmp.ne.s32.totalorder %s33, %s36
    %p42 = scmp.eq.s32.totalorder %s23, 0
    %p43 = por %p41, %p42
    %p44 = scmp.ne.s32.totalorder %s33, %s36
    %p45 = scmp.eq.s32.totalorder %s28, 1
    %p46 = por %p44, %p45
    %p47 = scmp.ne.s32.totalorder %s36, %s37
    %p48 = scmp.eq.s32.totalorder %s28, 0
    %p49 = por %p47, %p48
    %p50 = scmp.ne.s32.totalorder %s36, %s37
    %p51 = scmp.eq.s32.totalorder %s29, 1
    %p52 = por %p50, %p51
    %p54 = scmp.ne.s32.totalorder %s37, %s53
    %p55 = scmp.eq.s32.totalorder %s29, 0
    %p56 = por %p54, %p55
    %s57 = ssub.s32 %s23, %s30
    %p58 = scmp.eq.s32.totalorder %s57, 0
    %s60 = sadd.s32 %s59, 1
    %s61 = scalar_select %p58, %s59, %s60
    %p64 = pneg %p58
    %p65 = scmp.eq.s32.totalorder %s23, 1
    %p66 = por %p64, %p65
    %p67 = scmp.ne.s32.totalorder %s59, %s62
    %p68 = scmp.eq.s32.totalorder %s23, 0
    %p69 = por %p67, %p68
    %p70 = scmp.ne.s32.totalorder %s59, %s62
    %p71 = scmp.eq.s32.totalorder %s28, 1
    %p72 = por %p70, %p71
    %p73 = scmp.ne.s32.totalorder %s62, %s63
    %p74 = scmp.eq.s32.totalorder %s28, 0
    %p75 = por %p73, %p74
    %p76 = scmp.ne.s32.totalorder %s62, %s63
    %p77 = scmp.eq.s32.totalorder %s29, 1
    %p78 = por %p76, %p77
    %p80 = scmp.ne.s32.totalorder %s63, %s79
    %p81 = scmp.eq.s32.totalorder %s29, 0
    %p82 = por %p80, %p81
    %s83 = ssub.s32 %s23, %s30
    %p84 = scmp.eq.s32.totalorder %s83, 0
    %s86 = sadd.s32 %s85, 1
    %s87 = scalar_select %p84, %s85, %s86
    %p90 = pneg %p84
    %p91 = scmp.eq.s32.totalorder %s23, 1
    %p92 = por %p90, %p91
    %p93 = scmp.ne.s32.totalorder %s85, %s88
    %p94 = scmp.eq.s32.totalorder %s23, 0
    %p95 = por %p93, %p94
    %p96 = scmp.ne.s32.totalorder %s85, %s88
    %p97 = scmp.eq.s32.totalorder %s28, 1
    %p98 = por %p96, %p97
    %p99 = scmp.ne.s32.totalorder %s88, %s89
    %p100 = scmp.eq.s32.totalorder %s28, 0
    %p101 = por %p99, %p100
    %p102 = scmp.ne.s32.totalorder %s88, %s89
    %p103 = scmp.eq.s32.totalorder %s29, 1
    %p104 = por %p102, %p103
    %p106 = scmp.ne.s32.totalorder %s89, %s105
    %p107 = scmp.eq.s32.totalorder %s29, 0
    %p108 = por %p106, %p107
    %s110 = sadd.s32 %s109, 1
    %p113 = scmp.eq.s32.totalorder %s23, 1
    %p114 = scmp.ne.s32.totalorder %s109, %s111
    %p115 = scmp.eq.s32.totalorder %s23, 0
    %p116 = por %p114, %p115
    %p117 = scmp.ne.s32.totalorder %s109, %s111
    %p118 = scmp.eq.s32.totalorder %s28, 1
    %p119 = por %p117, %p118
    %p120 = scmp.ne.s32.totalorder %s111, %s112
    %p121 = scmp.eq.s32.totalorder %s28, 0
    %p122 = por %p120, %p121
    %p123 = scmp.ne.s32.totalorder %s111, %s112
    %p124 = scmp.eq.s32.totalorder %s29, 1
    %p125 = por %p123, %p124
    %p127 = scmp.ne.s32.totalorder %s112, %s126
    %p128 = scmp.eq.s32.totalorder %s29, 0
    %p129 = por %p127, %p128
    %s131 = sadd.s32 %s130, 1
    %p134 = scmp.eq.s32.totalorder %s23, 1
    %p135 = scmp.ne.s32.totalorder %s130, %s132
    %p136 = scmp.eq.s32.totalorder %s23, 0
    %p137 = por %p135, %p136
    %p138 = scmp.ne.s32.totalorder %s130, %s132
    %p139 = scmp.eq.s32.totalorder %s28, 1
    %p140 = por %p138, %p139
    %p141 = scmp.ne.s32.totalorder %s132, %s133
    %p142 = scmp.eq.s32.totalorder %s28, 0
    %p143 = por %p141, %p142
    %p144 = scmp.ne.s32.totalorder %s132, %s133
    %p145 = scmp.eq.s32.totalorder %s29, 1
    %p146 = por %p144, %p145
    %p148 = scmp.ne.s32.totalorder %s133, %s147
    %p149 = scmp.eq.s32.totalorder %s29, 0
    %p150 = por %p148, %p149
    %s152 = sadd.s32 %s151, 1
    %p155 = scmp.eq.s32.totalorder %s23, 1
    %p156 = scmp.ne.s32.totalorder %s151, %s153
    %p157 = scmp.eq.s32.totalorder %s23, 0
    %p158 = por %p156, %p157
    %p159 = scmp.ne.s32.totalorder %s151, %s153
    %p160 = scmp.eq.s32.totalorder %s28, 1
    %p161 = por %p159, %p160
    %p162 = scmp.ne.s32.totalorder %s153, %s154
    %p163 = scmp.eq.s32.totalorder %s28, 0
    %p164 = por %p162, %p163
    %p165 = scmp.ne.s32.totalorder %s153, %s154
    %p166 = scmp.eq.s32.totalorder %s29, 1
    %p167 = por %p165, %p166
    %p169 = scmp.ne.s32.totalorder %s154, %s168
    %p170 = scmp.eq.s32.totalorder %s29, 0
    %p171 = por %p169, %p170
    %s173 = sadd.s32 %s172, 1
    %p176 = scmp.eq.s32.totalorder %s23, 1
    %p177 = scmp.ne.s32.totalorder %s172, %s174
    %p178 = scmp.eq.s32.totalorder %s23, 0
    %p179 = por %p177, %p178
    %p180 = scmp.ne.s32.totalorder %s172, %s174
    %p181 = scmp.eq.s32.totalorder %s28, 1
    %p182 = por %p180, %p181
    %p183 = scmp.ne.s32.totalorder %s174, %s175
    %p184 = scmp.eq.s32.totalorder %s28, 0
    %p185 = por %p183, %p184
    %p186 = scmp.ne.s32.totalorder %s174, %s175
    %p187 = scmp.eq.s32.totalorder %s29, 1
    %p188 = por %p186, %p187
    %p190 = scmp.ne.s32.totalorder %s175, %s189
    %p191 = scmp.eq.s32.totalorder %s29, 0
    %p192 = por %p190, %p191
    %s194 = sadd.s32 %s193, 1
    %p197 = scmp.eq.s32.totalorder %s23, 1
    %p198 = scmp.ne.s32.totalorder %s193, %s195
    %p199 = scmp.eq.s32.totalorder %s23, 0
    %p200 = por %p198, %p199
    %p201 = scmp.ne.s32.totalorder %s193, %s195
    %p202 = scmp.eq.s32.totalorder %s28, 1
    %p203 = por %p201, %p202
    %p204 = scmp.ne.s32.totalorder %s195, %s196
    %p205 = scmp.eq.s32.totalorder %s28, 0
    %p206 = por %p204, %p205
    %p207 = scmp.ne.s32.totalorder %s195, %s196
    %p208 = scmp.eq.s32.totalorder %s29, 1
    %p209 = por %p207, %p208
    %p211 = scmp.ne.s32.totalorder %s196, %s210
    %p212 = scmp.eq.s32.totalorder %s29, 0
    %p213 = por %p211, %p212
    %s215 = sadd.s32 %s214, 1
    %p218 = scmp.eq.s32.totalorder %s23, 1
    %p219 = scmp.ne.s32.totalorder %s214, %s216
    %p220 = scmp.eq.s32.totalorder %s23, 0
    %p221 = por %p219, %p220
    %p222 = scmp.ne.s32.totalorder %s214, %s216
    %p223 = scmp.eq.s32.totalorder %s28, 1
    %p224 = por %p222, %p223
    %p225 = scmp.ne.s32.totalorder %s216, %s217
    %p226 = scmp.eq.s32.totalorder %s28, 0
    %p227 = por %p225, %p226
    %p228 = scmp.ne.s32.totalorder %s216, %s217
    %p229 = scmp.eq.s32.totalorder %s29, 1
    %p230 = por %p228, %p229
    %p232 = scmp.ne.s32.totalorder %s217, %s231
    %p233 = scmp.eq.s32.totalorder %s29, 0
    %p234 = por %p232, %p233
    %s236 = sadd.s32 %s235, 1
    %p239 = scmp.eq.s32.totalorder %s23, 1
    %p240 = scmp.ne.s32.totalorder %s235, %s237
    %p241 = scmp.eq.s32.totalorder %s23, 0
    %p242 = por %p240, %p241
    %p243 = scmp.ne.s32.totalorder %s235, %s237
    %p244 = scmp.eq.s32.totalorder %s28, 1
    %p245 = por %p243, %p244
    %p246 = scmp.ne.s32.totalorder %s237, %s238
    %p247 = scmp.eq.s32.totalorder %s28, 0
    %p248 = por %p246, %p247
    %p249 = scmp.ne.s32.totalorder %s237, %s238
    %p250 = scmp.eq.s32.totalorder %s29, 1
    %p251 = por %p249, %p250
    %p253 = scmp.ne.s32.totalorder %s238, %s252
    %p254 = scmp.eq.s32.totalorder %s29, 0
    %p255 = por %p253, %p254
    %s257 = sadd.s32 %s256, 1
    %p260 = scmp.eq.s32.totalorder %s23, 1
    %p261 = scmp.ne.s32.totalorder %s256, %s258
    %p262 = scmp.eq.s32.totalorder %s23, 0
    %p263 = por %p261, %p262
    %p264 = scmp.ne.s32.totalorder %s256, %s258
    %p265 = scmp.eq.s32.totalorder %s28, 1
    %p266 = por %p264, %p265
    %p267 = scmp.ne.s32.totalorder %s258, %s259
    %p268 = scmp.eq.s32.totalorder %s28, 0
    %p269 = por %p267, %p268
    %p270 = scmp.ne.s32.totalorder %s258, %s259
    %p271 = scmp.eq.s32.totalorder %s29, 1
    %p272 = por %p270, %p271
    %p274 = scmp.ne.s32.totalorder %s259, %s273
    %p275 = scmp.eq.s32.totalorder %s29, 0
    %p276 = por %p274, %p275
    %s278 = sadd.s32 %s277, 1
    %p281 = scmp.eq.s32.totalorder %s23, 1
    %p282 = scmp.ne.s32.totalorder %s277, %s279
    %p283 = scmp.eq.s32.totalorder %s23, 0
    %p284 = por %p282, %p283
    %p285 = scmp.ne.s32.totalorder %s277, %s279
    %p286 = scmp.eq.s32.totalorder %s28, 1
    %p287 = por %p285, %p286
    %p288 = scmp.ne.s32.totalorder %s279, %s280
    %p289 = scmp.eq.s32.totalorder %s28, 0
    %p290 = por %p288, %p289
    %p291 = scmp.ne.s32.totalorder %s279, %s280
    %p292 = scmp.eq.s32.totalorder %s29, 1
    %p293 = por %p291, %p292
    %p295 = scmp.ne.s32.totalorder %s280, %s294
    %p296 = scmp.eq.s32.totalorder %s29, 0
    %p297 = por %p295, %p296
    %s299 = sadd.s32 %s298, 1
    %p302 = scmp.eq.s32.totalorder %s23, 1
    %p303 = scmp.ne.s32.totalorder %s298, %s300
    %p304 = scmp.eq.s32.totalorder %s23, 0
    %p305 = por %p303, %p304
    %p306 = scmp.ne.s32.totalorder %s298, %s300
    %p307 = scmp.eq.s32.totalorder %s28, 1
    %p308 = por %p306, %p307
    %p309 = scmp.ne.s32.totalorder %s300, %s301
    %p310 = scmp.eq.s32.totalorder %s28, 0
    %p311 = por %p309, %p310
    %p312 = scmp.ne.s32.totalorder %s300, %s301
    %p313 = scmp.eq.s32.totalorder %s29, 1
    %p314 = por %p312, %p313
    %p316 = scmp.ne.s32.totalorder %s301, %s315
    %p317 = scmp.eq.s32.totalorder %s29, 0
    %p318 = por %p316, %p317
    %s320 = sadd.s32 %s319, 1
    %p323 = scmp.eq.s32.totalorder %s23, 1
    %p324 = scmp.ne.s32.totalorder %s319, %s321
    %p325 = scmp.eq.s32.totalorder %s23, 0
    %p326 = por %p324, %p325
    %p327 = scmp.ne.s32.totalorder %s319, %s321
    %p328 = scmp.eq.s32.totalorder %s28, 1
    %p329 = por %p327, %p328
    %p330 = scmp.ne.s32.totalorder %s321, %s322
    %p331 = scmp.eq.s32.totalorder %s28, 0
    %p332 = por %p330, %p331
    %p333 = scmp.ne.s32.totalorder %s321, %s322
    %p334 = scmp.eq.s32.totalorder %s29, 1
    %p335 = por %p333, %p334
    %p337 = scmp.ne.s32.totalorder %s322, %s336
    %p338 = scmp.eq.s32.totalorder %s29, 0
    %p339 = por %p337, %p338
    %s341 = sadd.s32 %s340, 1
    %p344 = scmp.eq.s32.totalorder %s23, 1
    %p345 = scmp.ne.s32.totalorder %s340, %s342
    %p346 = scmp.eq.s32.totalorder %s23, 0
    %p347 = por %p345, %p346
    %p348 = scmp.ne.s32.totalorder %s340, %s342
    %p349 = scmp.eq.s32.totalorder %s28, 1
    %p350 = por %p348, %p349
    %p351 = scmp.ne.s32.totalorder %s342, %s343
    %p352 = scmp.eq.s32.totalorder %s28, 0
    %p353 = por %p351, %p352
    %p354 = scmp.ne.s32.totalorder %s342, %s343
    %p355 = scmp.eq.s32.totalorder %s29, 1
    %p356 = por %p354, %p355
    %p358 = scmp.ne.s32.totalorder %s343, %s357
    %p359 = scmp.eq.s32.totalorder %s29, 0
    %p360 = por %p358, %p359
    %s361 = ssub.s32 %s23, %s30
    %p362 = scmp.eq.s32.totalorder %s361, 0
    %s364 = sadd.s32 %s363, 1
    %s365 = scalar_select %p362, %s363, %s364
    %p368 = pneg %p362
    %p369 = scmp.eq.s32.totalorder %s23, 1
    %p370 = por %p368, %p369
    %p371 = scmp.ne.s32.totalorder %s363, %s366
    %p372 = scmp.eq.s32.totalorder %s23, 0
    %p373 = por %p371, %p372
    %p374 = scmp.ne.s32.totalorder %s363, %s366
    %p375 = scmp.eq.s32.totalorder %s28, 1
    %p376 = por %p374, %p375
    %p377 = scmp.ne.s32.totalorder %s366, %s367
    %p378 = scmp.eq.s32.totalorder %s28, 0
    %p379 = por %p377, %p378
    %p380 = scmp.ne.s32.totalorder %s366, %s367
    %p381 = scmp.eq.s32.totalorder %s29, 1
    %p382 = por %p380, %p381
    %p384 = scmp.ne.s32.totalorder %s367, %s383
    %p385 = scmp.eq.s32.totalorder %s29, 0
    %p386 = por %p384, %p385
    %p387 = scmp.le.s32.totalorder 1, %s23
    %p388 = scmp.lt.s32.totalorder %s23, 3
    %p389 = pnand %p387, %p388
    %p390 = pneg %p389
    // Predicated region
    $region9: #{protein3d_forward.2} parent=5 // pred_check
      _
    $region10: #{protein3d_forward.2} parent=5 // pred_check_branch
      %392 = sbr.rel (%p389) target = $region12
    $region11: #{protein3d_forward.2} parent=5 // pred_region
      %s393 = ssub.s32 %s23, 1
      // Predicated region
      $region13: #{protein3d_forward.2} parent=11 // pred_check
        %p394 = pneg %p122
      $region14: #{protein3d_forward.2} parent=11 // pred_check_branch
        %396 = sbr.rel (%p394) target = $region16
      $region15: #{protein3d_forward.2} parent=11 // pred_region
        _
      $region16: #{protein3d_forward.2} parent=11 // pred_fallthru
        _
      // Predicated region
      $region17: #{protein3d_forward.2} parent=11 // pred_check
        %p397 = pneg %p143
      $region18: #{protein3d_forward.2} parent=11 // pred_check_branch
        %399 = sbr.rel (%p397) target = $region20
      $region19: #{protein3d_forward.2} parent=11 // pred_region
        _
      $region20: #{protein3d_forward.2} parent=11 // pred_fallthru
        _
      // Predicated region
      $region21: #{protein3d_forward.2} parent=11 // pred_check
        %p400 = pneg %p164
      $region22: #{protein3d_forward.2} parent=11 // pred_check_branch
        %402 = sbr.rel (%p400) target = $region24
      $region23: #{protein3d_forward.2} parent=11 // pred_region
        _
      $region24: #{protein3d_forward.2} parent=11 // pred_fallthru
        _
      // Predicated region
      $region25: #{protein3d_forward.2} parent=11 // pred_check
        %p403 = pneg %p185
      $region26: #{protein3d_forward.2} parent=11 // pred_check_branch
        %405 = sbr.rel (%p403) target = $region28
      $region27: #{protein3d_forward.2} parent=11 // pred_region
        _
      $region28: #{protein3d_forward.2} parent=11 // pred_fallthru
        _
      // Predicated region
      $region29: #{protein3d_forward.2} parent=11 // pred_check
        %p406 = pneg %p206
      $region30: #{protein3d_forward.2} parent=11 // pred_check_branch
        %408 = sbr.rel (%p406) target = $region32
      $region31: #{protein3d_forward.2} parent=11 // pred_region
        _
      $region32: #{protein3d_forward.2} parent=11 // pred_fallthru
        _
      // Predicated region
      $region33: #{protein3d_forward.2} parent=11 // pred_check
        %p409 = pneg %p227
      $region34: #{protein3d_forward.2} parent=11 // pred_check_branch
        %411 = sbr.rel (%p409) target = $region36
      $region35: #{protein3d_forward.2} parent=11 // pred_region
        _
      $region36: #{protein3d_forward.2} parent=11 // pred_fallthru
        _
      // Predicated region
      $region37: #{protein3d_forward.2} parent=11 // pred_check
        %p412 = pneg %p248
      $region38: #{protein3d_forward.2} parent=11 // pred_check_branch
        %414 = sbr.rel (%p412) target = $region40
      $region39: #{protein3d_forward.2} parent=11 // pred_region
        _
      $region40: #{protein3d_forward.2} parent=11 // pred_fallthru
        _
      // Predicated region
      $region41: #{protein3d_forward.2} parent=11 // pred_check
        %p415 = pneg %p269
      $region42: #{protein3d_forward.2} parent=11 // pred_check_branch
        %417 = sbr.rel (%p415) target = $region44
      $region43: #{protein3d_forward.2} parent=11 // pred_region
        _
      $region44: #{protein3d_forward.2} parent=11 // pred_fallthru
        _
      // Predicated region
      $region45: #{protein3d_forward.2} parent=11 // pred_check
        %p418 = pneg %p290
      $region46: #{protein3d_forward.2} parent=11 // pred_check_branch
        %420 = sbr.rel (%p418) target = $region48
      $region47: #{protein3d_forward.2} parent=11 // pred_region
        _
      $region48: #{protein3d_forward.2} parent=11 // pred_fallthru
        _
      // Predicated region
      $region49: #{protein3d_forward.2} parent=11 // pred_check
        %p421 = pneg %p311
      $region50: #{protein3d_forward.2} parent=11 // pred_check_branch
        %423 = sbr.rel (%p421) target = $region52
      $region51: #{protein3d_forward.2} parent=11 // pred_region
        _
      $region52: #{protein3d_forward.2} parent=11 // pred_fallthru
        _
      // Predicated region
      $region53: #{protein3d_forward.2} parent=11 // pred_check
        %p424 = pneg %p332
      $region54: #{protein3d_forward.2} parent=11 // pred_check_branch
        %426 = sbr.rel (%p424) target = $region56
      $region55: #{protein3d_forward.2} parent=11 // pred_region
        _
      $region56: #{protein3d_forward.2} parent=11 // pred_fallthru
        _
      // Predicated region
      $region57: #{protein3d_forward.2} parent=11 // pred_check
        %p427 = pneg %p353
      $region58: #{protein3d_forward.2} parent=11 // pred_check_branch
        %429 = sbr.rel (%p427) target = $region60
      $region59: #{protein3d_forward.2} parent=11 // pred_region
        _
      $region60: #{protein3d_forward.2} parent=11 // pred_fallthru
        _
    $region12: #{protein3d_forward.2} parent=5 // pred_fallthru
      _
    %p430 = scmp.lt.s32.totalorder %s23, 2
    // Predicated region
    $region61: #{protein3d_forward.2} parent=5 // pred_check
      %p431 = pneg %p430
    $region62: #{protein3d_forward.2} parent=5 // pred_check_branch
      %433 = sbr.rel (%p431) target = $region64
    $region63: #{protein3d_forward.2} parent=5 // pred_region
      // Predicated region
      $region65: #{protein3d_forward.2} parent=63 // pred_check
        %p434 = pneg %p43
      $region66: #{protein3d_forward.2} parent=63 // pred_check_branch
        %436 = sbr.rel (%p434) target = $region68
      $region67: #{protein3d_forward.2} parent=63 // pred_region
        %s437 = smul.u32 8, %s23
        %p438 = scmp.lt.s32.totalorder %s437, 15
        %s439 = scalar_select %p438, %s437, 15
        %s440 = smul.addr %s439, 8
        %s441 = scalar_lea.vmem %s0, %s440
        %s442 = smul.u32 8, %s23
      $region68: #{protein3d_forward.2} parent=63 // pred_fallthru
        _
      // Predicated region
      $region69: #{protein3d_forward.2} parent=63 // pred_check
        %p443 = pneg %p69
      $region70: #{protein3d_forward.2} parent=63 // pred_check_branch
        %445 = sbr.rel (%p443) target = $region72
      $region71: #{protein3d_forward.2} parent=63 // pred_region
        %s446 = smul.u32 64, %s23
        %p447 = scmp.lt.s32.totalorder %s446, 127
        %s448 = scalar_select %p447, %s446, 127
        %s449 = smul.addr %s448, 2
        %s450 = smul.addr %s449, 4
        %s451 = scalar_lea.vmem %s1, %s450
        %s452 = smul.u32 64, %s23
      $region72: #{protein3d_forward.2} parent=63 // pred_fallthru
        _
      // Predicated region
      $region73: #{protein3d_forward.2} parent=63 // pred_check
        %p453 = pneg %p95
      $region74: #{protein3d_forward.2} parent=63 // pred_check_branch
        %455 = sbr.rel (%p453) target = $region76
      $region75: #{protein3d_forward.2} parent=63 // pred_region
        %s456 = smul.u32 64, %s23
        %p457 = scmp.lt.s32.totalorder %s456, 127
        %s458 = scalar_select %p457, %s456, 127
        %s459 = smul.addr %s458, 2
        %s460 = smul.addr %s459, 8
        %s461 = scalar_lea.vmem %s2, %s460
        %s462 = smul.u32 64, %s23
      $region76: #{protein3d_forward.2} parent=63 // pred_fallthru
        _
    $region64: #{protein3d_forward.2} parent=5 // pred_fallthru
      _
    %p463 = scmp.le.s32.totalorder 1, %s23
    %p464 = scmp.lt.s32.totalorder %s23, 3
    %p465 = pnand %p463, %p464
    %p466 = pneg %p465
    // Predicated region
    $region77: #{protein3d_forward.2} parent=5 // pred_check
      _
    $region78: #{protein3d_forward.2} parent=5 // pred_check_branch
      %468 = sbr.rel (%p465) target = $region80
    $region79: #{protein3d_forward.2} parent=5 // pred_region
      %s469 = ssub.s32 %s23, 1
      %s470 = smul.u32 8, %s28
      %p471 = scmp.lt.s32.totalorder %s470, 15
      %s472 = scalar_select %p471, %s470, 15
      %s473 = smul.addr %s472, 8
      %s474 = scalar_lea.vmem %s0, %s473
      %p475 = pneg %p49
      %p476 = pneg %p46
      %s477 = smul.u32 64, %s28
      %p478 = scmp.lt.s32.totalorder %s477, 127
      %s479 = scalar_select %p478, %s477, 127
      %s480 = smul.addr %s479, 2
      %s481 = smul.addr %s480, 4
      %s482 = scalar_lea.vmem %s1, %s481
      %p483 = pneg %p75
      %p484 = pneg %p72
      %s485 = smul.u32 64, %s28
      %p486 = scmp.lt.s32.totalorder %s485, 127
      %s487 = scalar_select %p486, %s485, 127
      %s488 = smul.addr %s487, 2
      %s489 = smul.addr %s488, 8
      %s490 = scalar_lea.vmem %s2, %s489
      %p491 = pneg %p101
      %p492 = pneg %p98
      %p493 = pneg %p122
      %p494 = pneg %p119
      %p495 = pneg %p143
      %p496 = pneg %p140
      %p497 = pneg %p164
      %p498 = pneg %p161
      %p499 = pneg %p185
      %p500 = pneg %p182
      %p501 = pneg %p206
      %p502 = pneg %p203
      %p503 = pneg %p227
      %p504 = pneg %p224
      %p505 = pneg %p248
      %p506 = pneg %p245
      %p507 = pneg %p269
      %p508 = pneg %p266
      %p509 = pneg %p290
      %p510 = pneg %p287
      %p511 = pneg %p311
      %p512 = pneg %p308
      %p513 = pneg %p332
      %p514 = pneg %p329
      %p515 = pneg %p353
      %p516 = pneg %p350
      %p517 = pneg %p379
      %p518 = pneg %p376
      %s519 = smul.u32 8, %s28
      %p520 = scmp.lt.s32.totalorder %s519, 15
      %s521 = scalar_select %p520, %s519, 15
      %s522 = smul.addr %s521, 8
      %s523 = scalar_lea.vmem %s15, %s522
      %s524 = smul.u32 8, %s28
      %p525 = scmp.lt.s32.totalorder %s524, 15
      %s526 = scalar_select %p525, %s524, 15
      %s527 = smul.addr %s526, 8
      %s528 = scalar_lea.vmem %s0, %s527
      %s529 = smul.u32 8, %s28
      %s530 = smul.u32 64, %s28
      %p531 = scmp.lt.s32.totalorder %s530, 127
      %s532 = scalar_select %p531, %s530, 127
      %s533 = smul.addr %s532, 2
      %s534 = smul.addr %s533, 4
      %s535 = scalar_lea.vmem %s1, %s534
      %s536 = smul.u32 64, %s28
      %s537 = smul.u32 64, %s28
      %p538 = scmp.lt.s32.totalorder %s537, 127
      %s539 = scalar_select %p538, %s537, 127
      %s540 = smul.addr %s539, 2
      %s541 = smul.addr %s540, 8
      %s542 = scalar_lea.vmem %s2, %s541
      %s543 = smul.u32 64, %s28
      %s544 = smul.u32 8, %s28
      %p545 = scmp.lt.s32.totalorder %s544, 15
      %s546 = scalar_select %p545, %s544, 15
      %s547 = smul.addr %s546, 8
      %s548 = scalar_lea.vmem %s15, %s547
      %s549 = smul.u32 8, %s28
      %v551 = vld [vmem:[%s528] sm:$0xff]
      %v552 = vld [vmem:[%s528 + $0x8] sm:$0xff]
      %v553 = vld [vmem:[%s528 + $0x10] sm:$0xff]
      %v554 = vld [vmem:[%s528 + $0x18] sm:$0xff]
      %v555 = vld [vmem:[%s528 + $0x20] sm:$0xff]
      %v556 = vld [vmem:[%s528 + $0x28] sm:$0xff]
      %v557 = vld [vmem:[%s528 + $0x30] sm:$0xff]
      %v558 = vld [vmem:[%s528 + $0x38] sm:$0xff]
      %v559 = vpack.c.bf16 %v552, %v551
      %v560 = vpack.c.bf16 %v554, %v553
      %v561 = vpack.c.bf16 %v556, %v555
      %v562 = vpack.c.bf16 %v558, %v557
      %v563 = vld [vmem:[%s3] sm:$0xf]
      %v564 = vld [vmem:[%s3 + $0x4] sm:$0xf]
      %v565 = vld [vmem:[%s3 + $0x8] sm:$0xf]
      %v566 = vld [vmem:[%s3 + $0xc] sm:$0xf]
      %v567 = vld [vmem:[%s3 + $0x10] sm:$0xf]
      %v568 = vld [vmem:[%s3 + $0x14] sm:$0xf]
      %v569 = vld [vmem:[%s3 + $0x18] sm:$0xf]
      %v570 = vld [vmem:[%s3 + $0x1c] sm:$0xf]
      %v571 = vld [vmem:[%s3 + $0x20] sm:$0xf]
      %v572 = vld [vmem:[%s3 + $0x24] sm:$0xf]
      %v573 = vld [vmem:[%s3 + $0x28] sm:$0xf]
      %v574 = vld [vmem:[%s3 + $0x2c] sm:$0xf]
      %v575 = vld [vmem:[%s3 + $0x30] sm:$0xf]
      %v576 = vld [vmem:[%s3 + $0x34] sm:$0xf]
      %v577 = vld [vmem:[%s3 + $0x38] sm:$0xf]
      %v578 = vld [vmem:[%s3 + $0x3c] sm:$0xf]
      %v595 = vunpack.c.l.b16 %v563
      %v596 = vunpack.c.l.b16 %v564
      %v597 = vunpack.c.l.b16 %v565
      %v598 = vunpack.c.l.b16 %v566
      %v599 = vunpack.c.l.b16 %v567
      %v600 = vunpack.c.l.b16 %v568
      %v601 = vunpack.c.l.b16 %v569
      %v602 = vunpack.c.l.b16 %v570
      %v603 = vunpack.c.l.b16 %v571
      %v604 = vunpack.c.l.b16 %v572
      %v605 = vunpack.c.l.b16 %v573
      %v606 = vunpack.c.l.b16 %v574
      %v607 = vunpack.c.l.b16 %v575
      %v608 = vunpack.c.l.b16 %v576
      %v609 = vunpack.c.l.b16 %v577
      %v610 = vunpack.c.l.b16 %v578
      %v611 = vpack.c.b16 %v596, %v595
      %v612 = vpack.c.b16 %v598, %v597
      %v613 = vpack.c.b16 %v600, %v599
      %v614 = vpack.c.b16 %v602, %v601
      %v615 = vpack.c.b16 %v604, %v603
      %v616 = vpack.c.b16 %v606, %v605
      %v617 = vpack.c.b16 %v608, %v607
      %v618 = vpack.c.b16 %v610, %v609
      %627 = vmatprep.subr.bf16.mxu0 0
      %628 = vmatpush1.bf16.msra.mxu0 %v611
      %629 = vmatprep.subr.bf16.mxu0 0
      %630 = vmatpush1.bf16.msra.mxu0 %v612
      %631 = vmatprep.subr.bf16.mxu0 0
      %632 = vmatpush1.bf16.msra.mxu0 %v613
      %633 = vmatprep.subr.bf16.mxu0 0
      %634 = vmatpush1.bf16.msra.mxu0 %v614
      %635 = vmatprep.subr.bf16.mxu0 0
      %636 = vmatpush1.bf16.msra.mxu0 %v615
      %637 = vmatprep.subr.bf16.mxu0 0
      %638 = vmatpush1.bf16.msra.mxu0 %v616
      %639 = vmatprep.subr.bf16.mxu0 0
      %640 = vmatpush1.bf16.msra.mxu0 %v617
      %641 = vmatprep.subr.bf16.mxu0 0
      %642 = vmatpush1.bf16.msra.mxu0 %v618
      %643 = vmatprep.subr.bf16.mxu0 0
      %644 = vmatpush1.bf16.msra.mxu0 0
      %645 = vmatprep.subr.bf16.mxu0 0
      %646 = vmatpush1.bf16.msra.mxu0 0
      %647 = vmatprep.subr.bf16.mxu0 0
      %648 = vmatpush1.bf16.msra.mxu0 0
      %649 = vmatprep.subr.bf16.mxu0 0
      %650 = vmatpush1.bf16.msra.mxu0 0
      %651 = vmatprep.subr.bf16.mxu0 0
      %652 = vmatpush1.bf16.msra.mxu0 0
      %653 = vmatprep.subr.bf16.mxu0 0
      %654 = vmatpush1.bf16.msra.mxu0 0
      %655 = vmatprep.subr.bf16.mxu0 0
      %656 = vmatpush1.bf16.msra.mxu0 0
      %657 = vmatprep.subr.bf16.mxu0 0
      %658 = vmatpush1.bf16.msra.mxu0 0
      %659 = vmatprep.mubr.bf16.mxu0 0
      %660 = vmatmul.mubr.bf16.gmra.mrb[0].mxu0 %v559
      %v661 = vpop.f32.mrb[0].mxu0
      %v662 = vadd.f32 0.0, %v661
      %v663 = vpop.f32.mrb[0].mxu0
      %v664 = vpop.f32.mrb[0].mxu0
      %v665 = vadd.f32 0.0, %v664
      %v666 = vpop.f32.mrb[0].mxu0
      %667 = vmatprep.mubr.bf16.mxu0 0
      %668 = vmatmul.mubr.bf16.gmra.mrb[0].mxu0 %v560
      %v669 = vpop.f32.mrb[0].mxu0
      %v670 = vadd.f32 0.0, %v669
      %v671 = vpop.f32.mrb[0].mxu0
      %v672 = vpop.f32.mrb[0].mxu0
      %v673 = vadd.f32 0.0, %v672
      %v674 = vpop.f32.mrb[0].mxu0
      %675 = vmatprep.mubr.bf16.mxu0 0
      %676 = vmatmul.mubr.bf16.gmra.mrb[0].mxu0 %v561
      %v677 = vpop.f32.mrb[0].mxu0
      %v678 = vadd.f32 0.0, %v677
      %v679 = vpop.f32.mrb[0].mxu0
      %v680 = vpop.f32.mrb[0].mxu0
      %v681 = vadd.f32 0.0, %v680
      %v682 = vpop.f32.mrb[0].mxu0
      %683 = vmatprep.mubr.bf16.mxu0 0
      %684 = vmatmul.mubr.bf16.gmra.mrb[0].mxu0 %v562
      %v685 = vpop.f32.mrb[0].mxu0
      %v686 = vadd.f32 0.0, %v685
      %v687 = vpop.f32.mrb[0].mxu0
      %v688 = vpop.f32.mrb[0].mxu0
      %v689 = vadd.f32 0.0, %v688
      %v690 = vpop.f32.mrb[0].mxu0
      %691 = vdwg.mxu0
      %v700 = vcombine.high %v662, %v662
      %v702 = vunpack.c.l.s4 1966171168
      %v703 = vunpack.c.0.s8 %v702
      %v704 = vlaneseq
      %v705 = vshrl.u32 %v704, 7
      %v706 = vsub.s32 %v703, %v705
      %v707 = vrot.slane %v662, %v706
      %v709 = vunpack.c.l.s4 1966171168
      %v710 = vunpack.c.0.s8 %v709
      %v711 = vlaneseq
      %v712 = vshrl.u32 %v711, 7
      %v713 = vsub.s32 %v710, %v712
      %v714 = vrot.slane %v700, %v713
      %v715 = vcombine.high %v707, %v707
      %v716 = vcombine.high %v714, %v714
      %v718 = vunpack.c.l.s4 1966171168
      %v719 = vunpack.c.0.s8 %v718
      %v720 = vlaneseq
      %v721 = vshrl.u32 %v720, 7
      %v722 = vsub.s32 %v719, %v721
      %v723 = vrot.slane %v707, %v722
      %v725 = vunpack.c.l.s4 1966171168
      %v726 = vunpack.c.0.s8 %v725
      %v727 = vlaneseq
      %v728 = vshrl.u32 %v727, 7
      %v729 = vsub.s32 %v726, %v728
      %v730 = vrot.slane %v714, %v729
      %v732 = vunpack.c.l.s4 1966171168
      %v733 = vunpack.c.0.s8 %v732
      %v734 = vlaneseq
      %v735 = vshrl.u32 %v734, 7
      %v736 = vsub.s32 %v733, %v735
      %v737 = vrot.slane %v715, %v736
      %v739 = vunpack.c.l.s4 1966171168
      %v740 = vunpack.c.0.s8 %v739
      %v741 = vlaneseq
      %v742 = vshrl.u32 %v741, 7
      %v743 = vsub.s32 %v740, %v742
      %v744 = vrot.slane %v716, %v743
      %v745 = vcombine.high %v723, %v723
      %v746 = vcombine.high %v730, %v730
      %v747 = vcombine.high %v737, %v737
      %v748 = vcombine.high %v744, %v744
      %v749 = vcombine.high %v665, %v665
      %v751 = vunpack.c.l.s4 1966171168
      %v752 = vunpack.c.0.s8 %v751
      %v753 = vlaneseq
      %v754 = vshrl.u32 %v753, 7
      %v755 = vsub.s32 %v752, %v754
      %v756 = vrot.slane %v665, %v755
      %v758 = vunpack.c.l.s4 1966171168
      %v759 = vunpack.c.0.s8 %v758
      %v760 = vlaneseq
      %v761 = vshrl.u32 %v760, 7
      %v762 = vsub.s32 %v759, %v761
      %v763 = vrot.slane %v749, %v762
      %v764 = vcombine.high %v756, %v756
      %v765 = vcombine.high %v763, %v763
      %v767 = vunpack.c.l.s4 1966171168
      %v768 = vunpack.c.0.s8 %v767
      %v769 = vlaneseq
      %v770 = vshrl.u32 %v769, 7
      %v771 = vsub.s32 %v768, %v770
      %v772 = vrot.slane %v756, %v771
      %v774 = vunpack.c.l.s4 1966171168
      %v775 = vunpack.c.0.s8 %v774
      %v776 = vlaneseq
      %v777 = vshrl.u32 %v776, 7
      %v778 = vsub.s32 %v775, %v777
      %v779 = vrot.slane %v763, %v778
      %v781 = vunpack.c.l.s4 1966171168
      %v782 = vunpack.c.0.s8 %v781
      %v783 = vlaneseq
      %v784 = vshrl.u32 %v783, 7
      %v785 = vsub.s32 %v782, %v784
      %v786 = vrot.slane %v764, %v785
      %v788 = vunpack.c.l.s4 1966171168
      %v789 = vunpack.c.0.s8 %v788
      %v790 = vlaneseq
      %v791 = vshrl.u32 %v790, 7
      %v792 = vsub.s32 %v789, %v791
      %v793 = vrot.slane %v765, %v792
      %v794 = vcombine.high %v772, %v772
      %v795 = vcombine.high %v779, %v779
      %v796 = vcombine.high %v786, %v786
      %v797 = vcombine.high %v793, %v793
      %v798 = vcombine.high %v670, %v670
      %v800 = vunpack.c.l.s4 1966171168
      %v801 = vunpack.c.0.s8 %v800
      %v802 = vlaneseq
      %v803 = vshrl.u32 %v802, 7
      %v804 = vsub.s32 %v801, %v803
      %v805 = vrot.slane %v670, %v804
      %v807 = vunpack.c.l.s4 1966171168
      %v808 = vunpack.c.0.s8 %v807
      %v809 = vlaneseq
      %v810 = vshrl.u32 %v809, 7
      %v811 = vsub.s32 %v808, %v810
      %v812 = vrot.slane %v798, %v811
      %v813 = vcombine.high %v805, %v805
      %v814 = vcombine.high %v812, %v812
      %v816 = vunpack.c.l.s4 1966171168
      %v817 = vunpack.c.0.s8 %v816
      %v818 = vlaneseq
      %v819 = vshrl.u32 %v818, 7
      %v820 = vsub.s32 %v817, %v819
      %v821 = vrot.slane %v805, %v820
      %v823 = vunpack.c.l.s4 1966171168
      %v824 = vunpack.c.0.s8 %v823
      %v825 = vlaneseq
      %v826 = vshrl.u32 %v825, 7
      %v827 = vsub.s32 %v824, %v826
      %v828 = vrot.slane %v812, %v827
      %v830 = vunpack.c.l.s4 1966171168
      %v831 = vunpack.c.0.s8 %v830
      %v832 = vlaneseq
      %v833 = vshrl.u32 %v832, 7
      %v834 = vsub.s32 %v831, %v833
      %v835 = vrot.slane %v813, %v834
      %v837 = vunpack.c.l.s4 1966171168
      %v838 = vunpack.c.0.s8 %v837
      %v839 = vlaneseq
      %v840 = vshrl.u32 %v839, 7
      %v841 = vsub.s32 %v838, %v840
      %v842 = vrot.slane %v814, %v841
      %v843 = vcombine.high %v821, %v821
      %v844 = vcombine.high %v828, %v828
      %v845 = vcombine.high %v835, %v835
      %v846 = vcombine.high %v842, %v842
      %v847 = vcombine.high %v673, %v673
      %v849 = vunpack.c.l.s4 1966171168
      %v850 = vunpack.c.0.s8 %v849
      %v851 = vlaneseq
      %v852 = vshrl.u32 %v851, 7
      %v853 = vsub.s32 %v850, %v852
      %v854 = vrot.slane %v673, %v853
      %v856 = vunpack.c.l.s4 1966171168
      %v857 = vunpack.c.0.s8 %v856
      %v858 = vlaneseq
      %v859 = vshrl.u32 %v858, 7
      %v860 = vsub.s32 %v857, %v859
      %v861 = vrot.slane %v847, %v860
      %v862 = vcombine.high %v854, %v854
      %v863 = vcombine.high %v861, %v861
      %v865 = vunpack.c.l.s4 1966171168
      %v866 = vunpack.c.0.s8 %v865
      %v867 = vlaneseq
      %v868 = vshrl.u32 %v867, 7
      %v869 = vsub.s32 %v866, %v868
      %v870 = vrot.slane %v854, %v869
      %v872 = vunpack.c.l.s4 1966171168
      %v873 = vunpack.c.0.s8 %v872
      %v874 = vlaneseq
      %v875 = vshrl.u32 %v874, 7
      %v876 = vsub.s32 %v873, %v875
      %v877 = vrot.slane %v861, %v876
      %v879 = vunpack.c.l.s4 1966171168
      %v880 = vunpack.c.0.s8 %v879
      %v881 = vlaneseq
      %v882 = vshrl.u32 %v881, 7
      %v883 = vsub.s32 %v880, %v882
      %v884 = vrot.slane %v862, %v883
      %v886 = vunpack.c.l.s4 1966171168
      %v887 = vunpack.c.0.s8 %v886
      %v888 = vlaneseq
      %v889 = vshrl.u32 %v888, 7
      %v890 = vsub.s32 %v887, %v889
      %v891 = vrot.slane %v863, %v890
      %v892 = vcombine.high %v870, %v870
      %v893 = vcombine.high %v877, %v877
      %v894 = vcombine.high %v884, %v884
      %v895 = vcombine.high %v891, %v891
      %v896 = vcombine.high %v678, %v678
      %v898 = vunpack.c.l.s4 1966171168
      %v899 = vunpack.c.0.s8 %v898
      %v900 = vlaneseq
      %v901 = vshrl.u32 %v900, 7
      %v902 = vsub.s32 %v899, %v901
      %v903 = vrot.slane %v678, %v902
      %v905 = vunpack.c.l.s4 1966171168
      %v906 = vunpack.c.0.s8 %v905
      %v907 = vlaneseq
      %v908 = vshrl.u32 %v907, 7
      %v909 = vsub.s32 %v906, %v908
      %v910 = vrot.slane %v896, %v909
      %v911 = vcombine.high %v903, %v903
      %v912 = vcombine.high %v910, %v910
      %v914 = vunpack.c.l.s4 1966171168
      %v915 = vunpack.c.0.s8 %v914
      %v916 = vlaneseq
      %v917 = vshrl.u32 %v916, 7
      %v918 = vsub.s32 %v915, %v917
      %v919 = vrot.slane %v903, %v918
      %v921 = vunpack.c.l.s4 1966171168
      %v922 = vunpack.c.0.s8 %v921
      %v923 = vlaneseq
      %v924 = vshrl.u32 %v923, 7
      %v925 = vsub.s32 %v922, %v924
      %v926 = vrot.slane %v910, %v925
      %v928 = vunpack.c.l.s4 1966171168
      %v929 = vunpack.c.0.s8 %v928
      %v930 = vlaneseq
      %v931 = vshrl.u32 %v930, 7
      %v932 = vsub.s32 %v929, %v931
      %v933 = vrot.slane %v911, %v932
      %v935 = vunpack.c.l.s4 1966171168
      %v936 = vunpack.c.0.s8 %v935
      %v937 = vlaneseq
      %v938 = vshrl.u32 %v937, 7
      %v939 = vsub.s32 %v936, %v938
      %v940 = vrot.slane %v912, %v939
      %v941 = vcombine.high %v919, %v919
      %v942 = vcombine.high %v926, %v926
      %v943 = vcombine.high %v933, %v933
      %v944 = vcombine.high %v940, %v940
      %v945 = vcombine.high %v681, %v681
      %v947 = vunpack.c.l.s4 1966171168
      %v948 = vunpack.c.0.s8 %v947
      %v949 = vlaneseq
      %v950 = vshrl.u32 %v949, 7
      %v951 = vsub.s32 %v948, %v950
      %v952 = vrot.slane %v681, %v951
      %v954 = vunpack.c.l.s4 1966171168
      %v955 = vunpack.c.0.s8 %v954
      %v956 = vlaneseq
      %v957 = vshrl.u32 %v956, 7
      %v958 = vsub.s32 %v955, %v957
      %v959 = vrot.slane %v945, %v958
      %v960 = vcombine.high %v952, %v952
      %v961 = vcombine.high %v959, %v959
      %v963 = vunpack.c.l.s4 1966171168
      %v964 = vunpack.c.0.s8 %v963
      %v965 = vlaneseq
      %v966 = vshrl.u32 %v965, 7
      %v967 = vsub.s32 %v964, %v966
      %v968 = vrot.slane %v952, %v967
      %v970 = vunpack.c.l.s4 1966171168
      %v971 = vunpack.c.0.s8 %v970
      %v972 = vlaneseq
      %v973 = vshrl.u32 %v972, 7
      %v974 = vsub.s32 %v971, %v973
      %v975 = vrot.slane %v959, %v974
      %v977 = vunpack.c.l.s4 1966171168
      %v978 = vunpack.c.0.s8 %v977
      %v979 = vlaneseq
      %v980 = vshrl.u32 %v979, 7
      %v981 = vsub.s32 %v978, %v980
      %v982 = vrot.slane %v960, %v981
      %v984 = vunpack.c.l.s4 1966171168
      %v985 = vunpack.c.0.s8 %v984
      %v986 = vlaneseq
      %v987 = vshrl.u32 %v986, 7
      %v988 = vsub.s32 %v985, %v987
      %v989 = vrot.slane %v961, %v988
      %v990 = vcombine.high %v968, %v968
      %v991 = vcombine.high %v975, %v975
      %v992 = vcombine.high %v982, %v982
      %v993 = vcombine.high %v989, %v989
      %v994 = vcombine.high %v686, %v686
      %v996 = vunpack.c.l.s4 1966171168
      %v997 = vunpack.c.0.s8 %v996
      %v998 = vlaneseq
      %v999 = vshrl.u32 %v998, 7
      %v1000 = vsub.s32 %v997, %v999
      %v1001 = vrot.slane %v686, %v1000
      %v1003 = vunpack.c.l.s4 1966171168
      %v1004 = vunpack.c.0.s8 %v1003
      %v1005 = vlaneseq
      %v1006 = vshrl.u32 %v1005, 7
      %v1007 = vsub.s32 %v1004, %v1006
      %v1008 = vrot.slane %v994, %v1007
      %v1009 = vcombine.high %v1001, %v1001
      %v1010 = vcombine.high %v1008, %v1008
      %v1012 = vunpack.c.l.s4 1966171168
      %v1013 = vunpack.c.0.s8 %v1012
      %v1014 = vlaneseq
      %v1015 = vshrl.u32 %v1014, 7
      %v1016 = vsub.s32 %v1013, %v1015
      %v1017 = vrot.slane %v1001, %v1016
      %v1019 = vunpack.c.l.s4 1966171168
      %v1020 = vunpack.c.0.s8 %v1019
      %v1021 = vlaneseq
      %v1022 = vshrl.u32 %v1021, 7
      %v1023 = vsub.s32 %v1020, %v1022
      %v1024 = vrot.slane %v1008, %v1023
      %v1026 = vunpack.c.l.s4 1966171168
      %v1027 = vunpack.c.0.s8 %v1026
      %v1028 = vlaneseq
      %v1029 = vshrl.u32 %v1028, 7
      %v1030 = vsub.s32 %v1027, %v1029
      %v1031 = vrot.slane %v1009, %v1030
      %v1033 = vunpack.c.l.s4 1966171168
      %v1034 = vunpack.c.0.s8 %v1033
      %v1035 = vlaneseq
      %v1036 = vshrl.u32 %v1035, 7
      %v1037 = vsub.s32 %v1034, %v1036
      %v1038 = vrot.slane %v1010, %v1037
      %v1039 = vcombine.high %v1017, %v1017
      %v1040 = vcombine.high %v1024, %v1024
      %v1041 = vcombine.high %v1031, %v1031
      %v1042 = vcombine.high %v1038, %v1038
      %v1043 = vcombine.high %v689, %v689
      %v1045 = vunpack.c.l.s4 1966171168
      %v1046 = vunpack.c.0.s8 %v1045
      %v1047 = vlaneseq
      %v1048 = vshrl.u32 %v1047, 7
      %v1049 = vsub.s32 %v1046, %v1048
      %v1050 = vrot.slane %v689, %v1049
      %v1052 = vunpack.c.l.s4 1966171168
      %v1053 = vunpack.c.0.s8 %v1052
      %v1054 = vlaneseq
      %v1055 = vshrl.u32 %v1054, 7
      %v1056 = vsub.s32 %v1053, %v1055
      %v1057 = vrot.slane %v1043, %v1056
      %v1058 = vcombine.high %v1050, %v1050
      %v1059 = vcombine.high %v1057, %v1057
      %v1061 = vunpack.c.l.s4 1966171168
      %v1062 = vunpack.c.0.s8 %v1061
      %v1063 = vlaneseq
      %v1064 = vshrl.u32 %v1063, 7
      %v1065 = vsub.s32 %v1062, %v1064
      %v1066 = vrot.slane %v1050, %v1065
      %v1068 = vunpack.c.l.s4 1966171168
      %v1069 = vunpack.c.0.s8 %v1068
      %v1070 = vlaneseq
      %v1071 = vshrl.u32 %v1070, 7
      %v1072 = vsub.s32 %v1069, %v1071
      %v1073 = vrot.slane %v1057, %v1072
      %v1075 = vunpack.c.l.s4 1966171168
      %v1076 = vunpack.c.0.s8 %v1075
      %v1077 = vlaneseq
      %v1078 = vshrl.u32 %v1077, 7
      %v1079 = vsub.s32 %v1076, %v1078
      %v1080 = vrot.slane %v1058, %v1079
      %v1082 = vunpack.c.l.s4 1966171168
      %v1083 = vunpack.c.0.s8 %v1082
      %v1084 = vlaneseq
      %v1085 = vshrl.u32 %v1084, 7
      %v1086 = vsub.s32 %v1083, %v1085
      %v1087 = vrot.slane %v1059, %v1086
      %v1088 = vcombine.high %v1066, %v1066
      %v1089 = vcombine.high %v1073, %v1073
      %v1090 = vcombine.high %v1080, %v1080
      %v1091 = vcombine.high %v1087, %v1087
      %v1092 = vld [vmem:[%s535] sm:$0xf]
      %v1093 = vld [vmem:[%s535 + $0x4] sm:$0xf]
      %v1094 = vld [vmem:[%s535 + $0x8] sm:$0xf]
      %v1095 = vld [vmem:[%s535 + $0xc] sm:$0xf]
      %v1096 = vld [vmem:[%s535 + $0x10] sm:$0xf]
      %v1097 = vld [vmem:[%s535 + $0x14] sm:$0xf]
      %v1098 = vld [vmem:[%s535 + $0x18] sm:$0xf]
      %v1099 = vld [vmem:[%s535 + $0x1c] sm:$0xf]
      %v1100 = vld [vmem:[%s535 + $0x20] sm:$0xf]
      %v1101 = vld [vmem:[%s535 + $0x24] sm:$0xf]
      %v1102 = vld [vmem:[%s535 + $0x28] sm:$0xf]
      %v1103 = vld [vmem:[%s535 + $0x2c] sm:$0xf]
      %v1104 = vld [vmem:[%s535 + $0x30] sm:$0xf]
      %v1105 = vld [vmem:[%s535 + $0x34] sm:$0xf]
      %v1106 = vld [vmem:[%s535 + $0x38] sm:$0xf]
      %v1107 = vld [vmem:[%s535 + $0x3c] sm:$0xf]
      %v1108 = vld [vmem:[%s535 + $0x40] sm:$0xf]
      %v1109 = vld [vmem:[%s535 + $0x44] sm:$0xf]
      %v1110 = vld [vmem:[%s535 + $0x48] sm:$0xf]
      %v1111 = vld [vmem:[%s535 + $0x4c] sm:$0xf]
      %v1112 = vld [vmem:[%s535 + $0x50] sm:$0xf]
      %v1113 = vld [vmem:[%s535 + $0x54] sm:$0xf]
      %v1114 = vld [vmem:[%s535 + $0x58] sm:$0xf]
      %v1115 = vld [vmem:[%s535 + $0x5c] sm:$0xf]
      %v1116 = vld [vmem:[%s535 + $0x60] sm:$0xf]
      %v1117 = vld [vmem:[%s535 + $0x64] sm:$0xf]
      %v1118 = vld [vmem:[%s535 + $0x68] sm:$0xf]
      %v1119 = vld [vmem:[%s535 + $0x6c] sm:$0xf]
      %v1120 = vld [vmem:[%s535 + $0x70] sm:$0xf]
      %v1121 = vld [vmem:[%s535 + $0x74] sm:$0xf]
      %v1122 = vld [vmem:[%s535 + $0x78] sm:$0xf]
      %v1123 = vld [vmem:[%s535 + $0x7c] sm:$0xf]
      %v1124 = vld [vmem:[%s535 + $0x80] sm:$0xf]
      %v1125 = vld [vmem:[%s535 + $0x84] sm:$0xf]
      %v1126 = vld [vmem:[%s535 + $0x88] sm:$0xf]
      %v1127 = vld [vmem:[%s535 + $0x8c] sm:$0xf]
      %v1128 = vld [vmem:[%s535 + $0x90] sm:$0xf]
      %v1129 = vld [vmem:[%s535 + $0x94] sm:$0xf]
      %v1130 = vld [vmem:[%s535 + $0x98] sm:$0xf]
      %v1131 = vld [vmem:[%s535 + $0x9c] sm:$0xf]
      %v1132 = vld [vmem:[%s535 + $0xa0] sm:$0xf]
      %v1133 = vld [vmem:[%s535 + $0xa4] sm:$0xf]
      %v1134 = vld [vmem:[%s535 + $0xa8] sm:$0xf]
      %v1135 = vld [vmem:[%s535 + $0xac] sm:$0xf]
      %v1136 = vld [vmem:[%s535 + $0xb0] sm:$0xf]
      %v1137 = vld [vmem:[%s535 + $0xb4] sm:$0xf]
      %v1138 = vld [vmem:[%s535 + $0xb8] sm:$0xf]
      %v1139 = vld [vmem:[%s535 + $0xbc] sm:$0xf]
      %v1140 = vld [vmem:[%s535 + $0xc0] sm:$0xf]
      %v1141 = vld [vmem:[%s535 + $0xc4] sm:$0xf]
      %v1142 = vld [vmem:[%s535 + $0xc8] sm:$0xf]
      %v1143 = vld [vmem:[%s535 + $0xcc] sm:$0xf]
      %v1144 = vld [vmem:[%s535 + $0xd0] sm:$0xf]
      %v1145 = vld [vmem:[%s535 + $0xd4] sm:$0xf]
      %v1146 = vld [vmem:[%s535 + $0xd8] sm:$0xf]
      %v1147 = vld [vmem:[%s535 + $0xdc] sm:$0xf]
      %v1148 = vld [vmem:[%s535 + $0xe0] sm:$0xf]
      %v1149 = vld [vmem:[%s535 + $0xe4] sm:$0xf]
      %v1150 = vld [vmem:[%s535 + $0xe8] sm:$0xf]
      %v1151 = vld [vmem:[%s535 + $0xec] sm:$0xf]
      %v1152 = vld [vmem:[%s535 + $0xf0] sm:$0xf]
      %v1153 = vld [vmem:[%s535 + $0xf4] sm:$0xf]
      %v1154 = vld [vmem:[%s535 + $0xf8] sm:$0xf]
      %v1155 = vld [vmem:[%s535 + $0xfc] sm:$0xf]
      %v1156 = vld [vmem:[%s535 + $0x100] sm:$0xf]
      %v1157 = vld [vmem:[%s535 + $0x104] sm:$0xf]
      %v1158 = vld [vmem:[%s535 + $0x108] sm:$0xf]
      %v1159 = vld [vmem:[%s535 + $0x10c] sm:$0xf]
      %v1160 = vld [vmem:[%s535 + $0x110] sm:$0xf]
      %v1161 = vld [vmem:[%s535 + $0x114] sm:$0xf]
      %v1162 = vld [vmem:[%s535 + $0x118] sm:$0xf]
      %v1163 = vld [vmem:[%s535 + $0x11c] sm:$0xf]
      %v1164 = vld [vmem:[%s535 + $0x120] sm:$0xf]
      %v1165 = vld [vmem:[%s535 + $0x124] sm:$0xf]
      %v1166 = vld [vmem:[%s535 + $0x128] sm:$0xf]
      %v1167 = vld [vmem:[%s535 + $0x12c] sm:$0xf]
      %v1168 = vld [vmem:[%s535 + $0x130] sm:$0xf]
      %v1169 = vld [vmem:[%s535 + $0x134] sm:$0xf]
      %v1170 = vld [vmem:[%s535 + $0x138] sm:$0xf]
      %v1171 = vld [vmem:[%s535 + $0x13c] sm:$0xf]
      %v1172 = vld [vmem:[%s535 + $0x140] sm:$0xf]
      %v1173 = vld [vmem:[%s535 + $0x144] sm:$0xf]
      %v1174 = vld [vmem:[%s535 + $0x148] sm:$0xf]
      %v1175 = vld [vmem:[%s535 + $0x14c] sm:$0xf]
      %v1176 = vld [vmem:[%s535 + $0x150] sm:$0xf]
      %v1177 = vld [vmem:[%s535 + $0x154] sm:$0xf]
      %v1178 = vld [vmem:[%s535 + $0x158] sm:$0xf]
      %v1179 = vld [vmem:[%s535 + $0x15c] sm:$0xf]
      %v1180 = vld [vmem:[%s535 + $0x160] sm:$0xf]
      %v1181 = vld [vmem:[%s535 + $0x164] sm:$0xf]
      %v1182 = vld [vmem:[%s535 + $0x168] sm:$0xf]
      %v1183 = vld [vmem:[%s535 + $0x16c] sm:$0xf]
      %v1184 = vld [vmem:[%s535 + $0x170] sm:$0xf]
      %v1185 = vld [vmem:[%s535 + $0x174] sm:$0xf]
      %v1186 = vld [vmem:[%s535 + $0x178] sm:$0xf]
      %v1187 = vld [vmem:[%s535 + $0x17c] sm:$0xf]
      %v1188 = vld [vmem:[%s535 + $0x180] sm:$0xf]
      %v1189 = vld [vmem:[%s535 + $0x184] sm:$0xf]
      %v1190 = vld [vmem:[%s535 + $0x188] sm:$0xf]
      %v1191 = vld [vmem:[%s535 + $0x18c] sm:$0xf]
      %v1192 = vld [vmem:[%s535 + $0x190] sm:$0xf]
      %v1193 = vld [vmem:[%s535 + $0x194] sm:$0xf]
      %v1194 = vld [vmem:[%s535 + $0x198] sm:$0xf]
      %v1195 = vld [vmem:[%s535 + $0x19c] sm:$0xf]
      %v1196 = vld [vmem:[%s535 + $0x1a0] sm:$0xf]
      %v1197 = vld [vmem:[%s535 + $0x1a4] sm:$0xf]
      %v1198 = vld [vmem:[%s535 + $0x1a8] sm:$0xf]
      %v1199 = vld [vmem:[%s535 + $0x1ac] sm:$0xf]
      %v1200 = vld [vmem:[%s535 + $0x1b0] sm:$0xf]
      %v1201 = vld [vmem:[%s535 + $0x1b4] sm:$0xf]
      %v1202 = vld [vmem:[%s535 + $0x1b8] sm:$0xf]
      %v1203 = vld [vmem:[%s535 + $0x1bc] sm:$0xf]
      %v1204 = vld [vmem:[%s535 + $0x1c0] sm:$0xf]
      %v1205 = vld [vmem:[%s535 + $0x1c4] sm:$0xf]
      %v1206 = vld [vmem:[%s535 + $0x1c8] sm:$0xf]
      %v1207 = vld [vmem:[%s535 + $0x1cc] sm:$0xf]
      %v1208 = vld [vmem:[%s535 + $0x1d0] sm:$0xf]
      %v1209 = vld [vmem:[%s535 + $0x1d4] sm:$0xf]
      %v1210 = vld [vmem:[%s535 + $0x1d8] sm:$0xf]
      %v1211 = vld [vmem:[%s535 + $0x1dc] sm:$0xf]
      %v1212 = vld [vmem:[%s535 + $0x1e0] sm:$0xf]
      %v1213 = vld [vmem:[%s535 + $0x1e4] sm:$0xf]
      %v1214 = vld [vmem:[%s535 + $0x1e8] sm:$0xf]
      %v1215 = vld [vmem:[%s535 + $0x1ec] sm:$0xf]
      %v1216 = vld [vmem:[%s535 + $0x1f0] sm:$0xf]
      %v1217 = vld [vmem:[%s535 + $0x1f4] sm:$0xf]
      %v1218 = vld [vmem:[%s535 + $0x1f8] sm:$0xf]
      %v1219 = vld [vmem:[%s535 + $0x1fc] sm:$0xf]
      %v1220 = vunpack.c.l.bf16 %v1092
      %v1221 = vunpack.c.l.bf16 %v1093
      %v1222 = vunpack.c.l.bf16 %v1094
      %v1223 = vunpack.c.l.bf16 %v1095
      %v1224 = vunpack.c.l.bf16 %v1096
      %v1225 = vunpack.c.l.bf16 %v1097
      %v1226 = vunpack.c.l.bf16 %v1098
      %v1227 = vunpack.c.l.bf16 %v1099
      %v1228 = vunpack.c.l.bf16 %v1100
      %v1229 = vunpack.c.l.bf16 %v1101
      %v1230 = vunpack.c.l.bf16 %v1102
      %v1231 = vunpack.c.l.bf16 %v1103
      %v1232 = vunpack.c.l.bf16 %v1104
      %v1233 = vunpack.c.l.bf16 %v1105
      %v1234 = vunpack.c.l.bf16 %v1106
      %v1235 = vunpack.c.l.bf16 %v1107
      %v1236 = vunpack.c.l.bf16 %v1108
      %v1237 = vunpack.c.l.bf16 %v1109
      %v1238 = vunpack.c.l.bf16 %v1110
      %v1239 = vunpack.c.l.bf16 %v1111
      %v1240 = vunpack.c.l.bf16 %v1112
      %v1241 = vunpack.c.l.bf16 %v1113
      %v1242 = vunpack.c.l.bf16 %v1114
      %v1243 = vunpack.c.l.bf16 %v1115
      %v1244 = vunpack.c.l.bf16 %v1116
      %v1245 = vunpack.c.l.bf16 %v1117
      %v1246 = vunpack.c.l.bf16 %v1118
      %v1247 = vunpack.c.l.bf16 %v1119
      %v1248 = vunpack.c.l.bf16 %v1120
      %v1249 = vunpack.c.l.bf16 %v1121
      %v1250 = vunpack.c.l.bf16 %v1122
      %v1251 = vunpack.c.l.bf16 %v1123
      %v1252 = vunpack.c.l.bf16 %v1124
      %v1253 = vunpack.c.l.bf16 %v1125
      %v1254 = vunpack.c.l.bf16 %v1126
      %v1255 = vunpack.c.l.bf16 %v1127
      %v1256 = vunpack.c.l.bf16 %v1128
      %v1257 = vunpack.c.l.bf16 %v1129
      %v1258 = vunpack.c.l.bf16 %v1130
      %v1259 = vunpack.c.l.bf16 %v1131
      %v1260 = vunpack.c.l.bf16 %v1132
      %v1261 = vunpack.c.l.bf16 %v1133
      %v1262 = vunpack.c.l.bf16 %v1134
      %v1263 = vunpack.c.l.bf16 %v1135
      %v1264 = vunpack.c.l.bf16 %v1136
      %v1265 = vunpack.c.l.bf16 %v1137
      %v1266 = vunpack.c.l.bf16 %v1138
      %v1267 = vunpack.c.l.bf16 %v1139
      %v1268 = vunpack.c.l.bf16 %v1140
      %v1269 = vunpack.c.l.bf16 %v1141
      %v1270 = vunpack.c.l.bf16 %v1142
      %v1271 = vunpack.c.l.bf16 %v1143
      %v1272 = vunpack.c.l.bf16 %v1144
      %v1273 = vunpack.c.l.bf16 %v1145
      %v1274 = vunpack.c.l.bf16 %v1146
      %v1275 = vunpack.c.l.bf16 %v1147
      %v1276 = vunpack.c.l.bf16 %v1148
      %v1277 = vunpack.c.l.bf16 %v1149
      %v1278 = vunpack.c.l.bf16 %v1150
      %v1279 = vunpack.c.l.bf16 %v1151
      %v1280 = vunpack.c.l.bf16 %v1152
      %v1281 = vunpack.c.l.bf16 %v1153
      %v1282 = vunpack.c.l.bf16 %v1154
      %v1283 = vunpack.c.l.bf16 %v1155
      %v1284 = vunpack.c.l.bf16 %v1156
      %v1285 = vunpack.c.l.bf16 %v1157
      %v1286 = vunpack.c.l.bf16 %v1158
      %v1287 = vunpack.c.l.bf16 %v1159
      %v1288 = vunpack.c.l.bf16 %v1160
      %v1289 = vunpack.c.l.bf16 %v1161
      %v1290 = vunpack.c.l.bf16 %v1162
      %v1291 = vunpack.c.l.bf16 %v1163
      %v1292 = vunpack.c.l.bf16 %v1164
      %v1293 = vunpack.c.l.bf16 %v1165
      %v1294 = vunpack.c.l.bf16 %v1166
      %v1295 = vunpack.c.l.bf16 %v1167
      %v1296 = vunpack.c.l.bf16 %v1168
      %v1297 = vunpack.c.l.bf16 %v1169
      %v1298 = vunpack.c.l.bf16 %v1170
      %v1299 = vunpack.c.l.bf16 %v1171
      %v1300 = vunpack.c.l.bf16 %v1172
      %v1301 = vunpack.c.l.bf16 %v1173
      %v1302 = vunpack.c.l.bf16 %v1174
      %v1303 = vunpack.c.l.bf16 %v1175
      %v1304 = vunpack.c.l.bf16 %v1176
      %v1305 = vunpack.c.l.bf16 %v1177
      %v1306 = vunpack.c.l.bf16 %v1178
      %v1307 = vunpack.c.l.bf16 %v1179
      %v1308 = vunpack.c.l.bf16 %v1180
      %v1309 = vunpack.c.l.bf16 %v1181
      %v1310 = vunpack.c.l.bf16 %v1182
      %v1311 = vunpack.c.l.bf16 %v1183
      %v1312 = vunpack.c.l.bf16 %v1184
      %v1313 = vunpack.c.l.bf16 %v1185
      %v1314 = vunpack.c.l.bf16 %v1186
      %v1315 = vunpack.c.l.bf16 %v1187
      %v1316 = vunpack.c.l.bf16 %v1188
      %v1317 = vunpack.c.l.bf16 %v1189
      %v1318 = vunpack.c.l.bf16 %v1190
      %v1319 = vunpack.c.l.bf16 %v1191
      %v1320 = vunpack.c.l.bf16 %v1192
      %v1321 = vunpack.c.l.bf16 %v1193
      %v1322 = vunpack.c.l.bf16 %v1194
      %v1323 = vunpack.c.l.bf16 %v1195
      %v1324 = vunpack.c.l.bf16 %v1196
      %v1325 = vunpack.c.l.bf16 %v1197
      %v1326 = vunpack.c.l.bf16 %v1198
      %v1327 = vunpack.c.l.bf16 %v1199
      %v1328 = vunpack.c.l.bf16 %v1200
      %v1329 = vunpack.c.l.bf16 %v1201
      %v1330 = vunpack.c.l.bf16 %v1202
      %v1331 = vunpack.c.l.bf16 %v1203
      %v1332 = vunpack.c.l.bf16 %v1204
      %v1333 = vunpack.c.l.bf16 %v1205
      %v1334 = vunpack.c.l.bf16 %v1206
      %v1335 = vunpack.c.l.bf16 %v1207
      %v1336 = vunpack.c.l.bf16 %v1208
      %v1337 = vunpack.c.l.bf16 %v1209
      %v1338 = vunpack.c.l.bf16 %v1210
      %v1339 = vunpack.c.l.bf16 %v1211
      %v1340 = vunpack.c.l.bf16 %v1212
      %v1341 = vunpack.c.l.bf16 %v1213
      %v1342 = vunpack.c.l.bf16 %v1214
      %v1343 = vunpack.c.l.bf16 %v1215
      %v1344 = vunpack.c.l.bf16 %v1216
      %v1345 = vunpack.c.l.bf16 %v1217
      %v1346 = vunpack.c.l.bf16 %v1218
      %v1347 = vunpack.c.l.bf16 %v1219
      %v1348 = vlaneseq
      %v1349 = vshrl.u32 %v1348, 7
      %v1350 = vsub.s32 0, %v1349
      %v1351 = vrot.slane %v723, %v1350
      %v1352 = vlaneseq
      %v1353 = vshrl.u32 %v1352, 7
      %v1354 = vsub.s32 0, %v1353
      %v1355 = vrot.slane %v737, %v1354
      %v1356 = vlaneseq
      %v1357 = vshrl.u32 %v1356, 7
      %v1358 = vsub.s32 0, %v1357
      %v1359 = vrot.slane %v745, %v1358
      %v1360 = vlaneseq
      %v1361 = vshrl.u32 %v1360, 7
      %v1362 = vsub.s32 0, %v1361
      %v1363 = vrot.slane %v747, %v1362
      %v1364 = vlaneseq
      %v1365 = vshrl.u32 %v1364, 7
      %v1366 = vsub.s32 0, %v1365
      %v1367 = vrot.slane %v730, %v1366
      %v1368 = vlaneseq
      %v1369 = vshrl.u32 %v1368, 7
      %v1370 = vsub.s32 0, %v1369
      %v1371 = vrot.slane %v744, %v1370
      %v1372 = vlaneseq
      %v1373 = vshrl.u32 %v1372, 7
      %v1374 = vsub.s32 0, %v1373
      %v1375 = vrot.slane %v746, %v1374
      %v1376 = vlaneseq
      %v1377 = vshrl.u32 %v1376, 7
      %v1378 = vsub.s32 0, %v1377
      %v1379 = vrot.slane %v748, %v1378
      %v1380 = vlaneseq
      %v1381 = vshrl.u32 %v1380, 7
      %v1382 = vsub.s32 0, %v1381
      %v1383 = vrot.slane %v772, %v1382
      %v1384 = vlaneseq
      %v1385 = vshrl.u32 %v1384, 7
      %v1386 = vsub.s32 0, %v1385
      %v1387 = vrot.slane %v786, %v1386
      %v1388 = vlaneseq
      %v1389 = vshrl.u32 %v1388, 7
      %v1390 = vsub.s32 0, %v1389
      %v1391 = vrot.slane %v794, %v1390
      %v1392 = vlaneseq
      %v1393 = vshrl.u32 %v1392, 7
      %v1394 = vsub.s32 0, %v1393
      %v1395 = vrot.slane %v796, %v1394
      %v1396 = vlaneseq
      %v1397 = vshrl.u32 %v1396, 7
      %v1398 = vsub.s32 0, %v1397
      %v1399 = vrot.slane %v779, %v1398
      %v1400 = vlaneseq
      %v1401 = vshrl.u32 %v1400, 7
      %v1402 = vsub.s32 0, %v1401
      %v1403 = vrot.slane %v793, %v1402
      %v1404 = vlaneseq
      %v1405 = vshrl.u32 %v1404, 7
      %v1406 = vsub.s32 0, %v1405
      %v1407 = vrot.slane %v795, %v1406
      %v1408 = vlaneseq
      %v1409 = vshrl.u32 %v1408, 7
      %v1410 = vsub.s32 0, %v1409
      %v1411 = vrot.slane %v797, %v1410
      %v1412 = vlaneseq
      %v1413 = vshrl.u32 %v1412, 7
      %v1414 = vsub.s32 0, %v1413
      %v1415 = vrot.slane %v821, %v1414
      %v1416 = vlaneseq
      %v1417 = vshrl.u32 %v1416, 7
      %v1418 = vsub.s32 0, %v1417
      %v1419 = vrot.slane %v835, %v1418
      %v1420 = vlaneseq
      %v1421 = vshrl.u32 %v1420, 7
      %v1422 = vsub.s32 0, %v1421
      %v1423 = vrot.slane %v843, %v1422
      %v1424 = vlaneseq
      %v1425 = vshrl.u32 %v1424, 7
      %v1426 = vsub.s32 0, %v1425
      %v1427 = vrot.slane %v845, %v1426
      %v1428 = vlaneseq
      %v1429 = vshrl.u32 %v1428, 7
      %v1430 = vsub.s32 0, %v1429
      %v1431 = vrot.slane %v828, %v1430
      %v1432 = vlaneseq
      %v1433 = vshrl.u32 %v1432, 7
      %v1434 = vsub.s32 0, %v1433
      %v1435 = vrot.slane %v842, %v1434
      %v1436 = vlaneseq
      %v1437 = vshrl.u32 %v1436, 7
      %v1438 = vsub.s32 0, %v1437
      %v1439 = vrot.slane %v844, %v1438
      %v1440 = vlaneseq
      %v1441 = vshrl.u32 %v1440, 7
      %v1442 = vsub.s32 0, %v1441
      %v1443 = vrot.slane %v846, %v1442
      %v1444 = vlaneseq
      %v1445 = vshrl.u32 %v1444, 7
      %v1446 = vsub.s32 0, %v1445
      %v1447 = vrot.slane %v870, %v1446
      %v1448 = vlaneseq
      %v1449 = vshrl.u32 %v1448, 7
      %v1450 = vsub.s32 0, %v1449
      %v1451 = vrot.slane %v884, %v1450
      %v1452 = vlaneseq
      %v1453 = vshrl.u32 %v1452, 7
      %v1454 = vsub.s32 0, %v1453
      %v1455 = vrot.slane %v892, %v1454
      %v1456 = vlaneseq
      %v1457 = vshrl.u32 %v1456, 7
      %v1458 = vsub.s32 0, %v1457
      %v1459 = vrot.slane %v894, %v1458
      %v1460 = vlaneseq
      %v1461 = vshrl.u32 %v1460, 7
      %v1462 = vsub.s32 0, %v1461
      %v1463 = vrot.slane %v877, %v1462
      %v1464 = vlaneseq
      %v1465 = vshrl.u32 %v1464, 7
      %v1466 = vsub.s32 0, %v1465
      %v1467 = vrot.slane %v891, %v1466
      %v1468 = vlaneseq
      %v1469 = vshrl.u32 %v1468, 7
      %v1470 = vsub.s32 0, %v1469
      %v1471 = vrot.slane %v893, %v1470
      %v1472 = vlaneseq
      %v1473 = vshrl.u32 %v1472, 7
      %v1474 = vsub.s32 0, %v1473
      %v1475 = vrot.slane %v895, %v1474
      %v1476 = vlaneseq
      %v1477 = vshrl.u32 %v1476, 7
      %v1478 = vsub.s32 0, %v1477
      %v1479 = vrot.slane %v919, %v1478
      %v1480 = vlaneseq
      %v1481 = vshrl.u32 %v1480, 7
      %v1482 = vsub.s32 0, %v1481
      %v1483 = vrot.slane %v933, %v1482
      %v1484 = vlaneseq
      %v1485 = vshrl.u32 %v1484, 7
      %v1486 = vsub.s32 0, %v1485
      %v1487 = vrot.slane %v941, %v1486
      %v1488 = vlaneseq
      %v1489 = vshrl.u32 %v1488, 7
      %v1490 = vsub.s32 0, %v1489
      %v1491 = vrot.slane %v943, %v1490
      %v1492 = vlaneseq
      %v1493 = vshrl.u32 %v1492, 7
      %v1494 = vsub.s32 0, %v1493
      %v1495 = vrot.slane %v926, %v1494
      %v1496 = vlaneseq
      %v1497 = vshrl.u32 %v1496, 7
      %v1498 = vsub.s32 0, %v1497
      %v1499 = vrot.slane %v940, %v1498
      %v1500 = vlaneseq
      %v1501 = vshrl.u32 %v1500, 7
      %v1502 = vsub.s32 0, %v1501
      %v1503 = vrot.slane %v942, %v1502
      %v1504 = vlaneseq
      %v1505 = vshrl.u32 %v1504, 7
      %v1506 = vsub.s32 0, %v1505
      %v1507 = vrot.slane %v944, %v1506
      %v1508 = vlaneseq
      %v1509 = vshrl.u32 %v1508, 7
      %v1510 = vsub.s32 0, %v1509
      %v1511 = vrot.slane %v968, %v1510
      %v1512 = vlaneseq
      %v1513 = vshrl.u32 %v1512, 7
      %v1514 = vsub.s32 0, %v1513
      %v1515 = vrot.slane %v982, %v1514
      %v1516 = vlaneseq
      %v1517 = vshrl.u32 %v1516, 7
      %v1518 = vsub.s32 0, %v1517
      %v1519 = vrot.slane %v990, %v1518
      %v1520 = vlaneseq
      %v1521 = vshrl.u32 %v1520, 7
      %v1522 = vsub.s32 0, %v1521
      %v1523 = vrot.slane %v992, %v1522
      %v1524 = vlaneseq
      %v1525 = vshrl.u32 %v1524, 7
      %v1526 = vsub.s32 0, %v1525
      %v1527 = vrot.slane %v975, %v1526
      %v1528 = vlaneseq
      %v1529 = vshrl.u32 %v1528, 7
      %v1530 = vsub.s32 0, %v1529
      %v1531 = vrot.slane %v989, %v1530
      %v1532 = vlaneseq
      %v1533 = vshrl.u32 %v1532, 7
      %v1534 = vsub.s32 0, %v1533
      %v1535 = vrot.slane %v991, %v1534
      %v1536 = vlaneseq
      %v1537 = vshrl.u32 %v1536, 7
      %v1538 = vsub.s32 0, %v1537
      %v1539 = vrot.slane %v993, %v1538
      %v1540 = vlaneseq
      %v1541 = vshrl.u32 %v1540, 7
      %v1542 = vsub.s32 0, %v1541
      %v1543 = vrot.slane %v1017, %v1542
      %v1544 = vlaneseq
      %v1545 = vshrl.u32 %v1544, 7
      %v1546 = vsub.s32 0, %v1545
      %v1547 = vrot.slane %v1031, %v1546
      %v1548 = vlaneseq
      %v1549 = vshrl.u32 %v1548, 7
      %v1550 = vsub.s32 0, %v1549
      %v1551 = vrot.slane %v1039, %v1550
      %v1552 = vlaneseq
      %v1553 = vshrl.u32 %v1552, 7
      %v1554 = vsub.s32 0, %v1553
      %v1555 = vrot.slane %v1041, %v1554
      %v1556 = vlaneseq
      %v1557 = vshrl.u32 %v1556, 7
      %v1558 = vsub.s32 0, %v1557
      %v1559 = vrot.slane %v1024, %v1558
      %v1560 = vlaneseq
      %v1561 = vshrl.u32 %v1560, 7
      %v1562 = vsub.s32 0, %v1561
      %v1563 = vrot.slane %v1038, %v1562
      %v1564 = vlaneseq
      %v1565 = vshrl.u32 %v1564, 7
      %v1566 = vsub.s32 0, %v1565
      %v1567 = vrot.slane %v1040, %v1566
      %v1568 = vlaneseq
      %v1569 = vshrl.u32 %v1568, 7
      %v1570 = vsub.s32 0, %v1569
      %v1571 = vrot.slane %v1042, %v1570
      %v1572 = vlaneseq
      %v1573 = vshrl.u32 %v1572, 7
      %v1574 = vsub.s32 0, %v1573
      %v1575 = vrot.slane %v1066, %v1574
      %v1576 = vlaneseq
      %v1577 = vshrl.u32 %v1576, 7
      %v1578 = vsub.s32 0, %v1577
      %v1579 = vrot.slane %v1080, %v1578
      %v1580 = vlaneseq
      %v1581 = vshrl.u32 %v1580, 7
      %v1582 = vsub.s32 0, %v1581
      %v1583 = vrot.slane %v1088, %v1582
      %v1584 = vlaneseq
      %v1585 = vshrl.u32 %v1584, 7
      %v1586 = vsub.s32 0, %v1585
      %v1587 = vrot.slane %v1090, %v1586
      %v1588 = vlaneseq
      %v1589 = vshrl.u32 %v1588, 7
      %v1590 = vsub.s32 0, %v1589
      %v1591 = vrot.slane %v1073, %v1590
      %v1592 = vlaneseq
      %v1593 = vshrl.u32 %v1592, 7
      %v1594 = vsub.s32 0, %v1593
      %v1595 = vrot.slane %v1087, %v1594
      %v1596 = vlaneseq
      %v1597 = vshrl.u32 %v1596, 7
      %v1598 = vsub.s32 0, %v1597
      %v1599 = vrot.slane %v1089, %v1598
      %v1600 = vlaneseq
      %v1601 = vshrl.u32 %v1600, 7
      %v1602 = vsub.s32 0, %v1601
      %v1603 = vrot.slane %v1091, %v1602
      %v1668 = vadd.f32 %v1351, %v1220
      %v1669 = vadd.f32 %v1351, %v1221
      %v1670 = vadd.f32 %v1355, %v1222
      %v1671 = vadd.f32 %v1355, %v1223
      %v1672 = vadd.f32 %v1359, %v1224
      %v1673 = vadd.f32 %v1359, %v1225
      %v1674 = vadd.f32 %v1363, %v1226
      %v1675 = vadd.f32 %v1363, %v1227
      %v1676 = vadd.f32 %v1367, %v1228
      %v1677 = vadd.f32 %v1367, %v1229
      %v1678 = vadd.f32 %v1371, %v1230
      %v1679 = vadd.f32 %v1371, %v1231
      %v1680 = vadd.f32 %v1375, %v1232
      %v1681 = vadd.f32 %v1375, %v1233
      %v1682 = vadd.f32 %v1379, %v1234
      %v1683 = vadd.f32 %v1379, %v1235
      %v1684 = vadd.f32 %v1383, %v1236
      %v1685 = vadd.f32 %v1383, %v1237
      %v1686 = vadd.f32 %v1387, %v1238
      %v1687 = vadd.f32 %v1387, %v1239
      %v1688 = vadd.f32 %v1391, %v1240
      %v1689 = vadd.f32 %v1391, %v1241
      %v1690 = vadd.f32 %v1395, %v1242
      %v1691 = vadd.f32 %v1395, %v1243
      %v1692 = vadd.f32 %v1399, %v1244
      %v1693 = vadd.f32 %v1399, %v1245
      %v1694 = vadd.f32 %v1403, %v1246
      %v1695 = vadd.f32 %v1403, %v1247
      %v1696 = vadd.f32 %v1407, %v1248
      %v1697 = vadd.f32 %v1407, %v1249
      %v1698 = vadd.f32 %v1411, %v1250
      %v1699 = vadd.f32 %v1411, %v1251
      %v1700 = vadd.f32 %v1415, %v1252
      %v1701 = vadd.f32 %v1415, %v1253
      %v1702 = vadd.f32 %v1419, %v1254
      %v1703 = vadd.f32 %v1419, %v1255
      %v1704 = vadd.f32 %v1423, %v1256
      %v1705 = vadd.f32 %v1423, %v1257
      %v1706 = vadd.f32 %v1427, %v1258
      %v1707 = vadd.f32 %v1427, %v1259
      %v1708 = vadd.f32 %v1431, %v1260
      %v1709 = vadd.f32 %v1431, %v1261
      %v1710 = vadd.f32 %v1435, %v1262
      %v1711 = vadd.f32 %v1435, %v1263
      %v1712 = vadd.f32 %v1439, %v1264
      %v1713 = vadd.f32 %v1439, %v1265
      %v1714 = vadd.f32 %v1443, %v1266
      %v1715 = vadd.f32 %v1443, %v1267
      %v1716 = vadd.f32 %v1447, %v1268
      %v1717 = vadd.f32 %v1447, %v1269
      %v1718 = vadd.f32 %v1451, %v1270
      %v1719 = vadd.f32 %v1451, %v1271
      %v1720 = vadd.f32 %v1455, %v1272
      %v1721 = vadd.f32 %v1455, %v1273
      %v1722 = vadd.f32 %v1459, %v1274
      %v1723 = vadd.f32 %v1459, %v1275
      %v1724 = vadd.f32 %v1463, %v1276
      %v1725 = vadd.f32 %v1463, %v1277
      %v1726 = vadd.f32 %v1467, %v1278
      %v1727 = vadd.f32 %v1467, %v1279
      %v1728 = vadd.f32 %v1471, %v1280
      %v1729 = vadd.f32 %v1471, %v1281
      %v1730 = vadd.f32 %v1475, %v1282
      %v1731 = vadd.f32 %v1475, %v1283
      %v1732 = vadd.f32 %v1479, %v1284
      %v1733 = vadd.f32 %v1479, %v1285
      %v1734 = vadd.f32 %v1483, %v1286
      %v1735 = vadd.f32 %v1483, %v1287
      %v1736 = vadd.f32 %v1487, %v1288
      %v1737 = vadd.f32 %v1487, %v1289
      %v1738 = vadd.f32 %v1491, %v1290
      %v1739 = vadd.f32 %v1491, %v1291
      %v1740 = vadd.f32 %v1495, %v1292
      %v1741 = vadd.f32 %v1495, %v1293
      %v1742 = vadd.f32 %v1499, %v1294
      %v1743 = vadd.f32 %v1499, %v1295
      %v1744 = vadd.f32 %v1503, %v1296
      %v1745 = vadd.f32 %v1503, %v1297
      %v1746 = vadd.f32 %v1507, %v1298
      %v1747 = vadd.f32 %v1507, %v1299
      %v1748 = vadd.f32 %v1511, %v1300
      %v1749 = vadd.f32 %v1511, %v1301
      %v1750 = vadd.f32 %v1515, %v1302
      %v1751 = vadd.f32 %v1515, %v1303
      %v1752 = vadd.f32 %v1519, %v1304
      %v1753 = vadd.f32 %v1519, %v1305
      %v1754 = vadd.f32 %v1523, %v1306
      %v1755 = vadd.f32 %v1523, %v1307
      %v1756 = vadd.f32 %v1527, %v1308
      %v1757 = vadd.f32 %v1527, %v1309
      %v1758 = vadd.f32 %v1531, %v1310
      %v1759 = vadd.f32 %v1531, %v1311
      %v1760 = vadd.f32 %v1535, %v1312
      %v1761 = vadd.f32 %v1535, %v1313
      %v1762 = vadd.f32 %v1539, %v1314
      %v1763 = vadd.f32 %v1539, %v1315
      %v1764 = vadd.f32 %v1543, %v1316
      %v1765 = vadd.f32 %v1543, %v1317
      %v1766 = vadd.f32 %v1547, %v1318
      %v1767 = vadd.f32 %v1547, %v1319
      %v1768 = vadd.f32 %v1551, %v1320
      %v1769 = vadd.f32 %v1551, %v1321
      %v1770 = vadd.f32 %v1555, %v1322
      %v1771 = vadd.f32 %v1555, %v1323
      %v1772 = vadd.f32 %v1559, %v1324
      %v1773 = vadd.f32 %v1559, %v1325
      %v1774 = vadd.f32 %v1563, %v1326
      %v1775 = vadd.f32 %v1563, %v1327
      %v1776 = vadd.f32 %v1567, %v1328
      %v1777 = vadd.f32 %v1567, %v1329
      %v1778 = vadd.f32 %v1571, %v1330
      %v1779 = vadd.f32 %v1571, %v1331
      %v1780 = vadd.f32 %v1575, %v1332
      %v1781 = vadd.f32 %v1575, %v1333
      %v1782 = vadd.f32 %v1579, %v1334
      %v1783 = vadd.f32 %v1579, %v1335
      %v1784 = vadd.f32 %v1583, %v1336
      %v1785 = vadd.f32 %v1583, %v1337
      %v1786 = vadd.f32 %v1587, %v1338
      %v1787 = vadd.f32 %v1587, %v1339
      %v1788 = vadd.f32 %v1591, %v1340
      %v1789 = vadd.f32 %v1591, %v1341
      %v1790 = vadd.f32 %v1595, %v1342
      %v1791 = vadd.f32 %v1595, %v1343
      %v1792 = vadd.f32 %v1599, %v1344
      %v1793 = vadd.f32 %v1599, %v1345
      %v1794 = vadd.f32 %v1603, %v1346
      %v1795 = vadd.f32 %v1603, %v1347
      %v1796 = vld [vmem:[%s4] sm:$0x1]
      %v1798 = vlaneseq
      %v1799 = vshrl.u32 %v1798, 7
      %v1800 = vsub.s32 0, %v1799
      %v1801 = vrot.slane %v1796, %v1800
      %v1803 = vadd.f32 %v1668, %v1801
      %v1804 = vadd.f32 %v1669, %v1801
      %v1805 = vadd.f32 %v1670, %v1801
      %v1806 = vadd.f32 %v1671, %v1801
      %v1807 = vadd.f32 %v1672, %v1801
      %v1808 = vadd.f32 %v1673, %v1801
      %v1809 = vadd.f32 %v1674, %v1801
      %v1810 = vadd.f32 %v1675, %v1801
      %v1811 = vadd.f32 %v1676, %v1801
      %v1812 = vadd.f32 %v1677, %v1801
      %v1813 = vadd.f32 %v1678, %v1801
      %v1814 = vadd.f32 %v1679, %v1801
      %v1815 = vadd.f32 %v1680, %v1801
      %v1816 = vadd.f32 %v1681, %v1801
      %v1817 = vadd.f32 %v1682, %v1801
      %v1818 = vadd.f32 %v1683, %v1801
      %v1819 = vadd.f32 %v1684, %v1801
      %v1820 = vadd.f32 %v1685, %v1801
      %v1821 = vadd.f32 %v1686, %v1801
      %v1822 = vadd.f32 %v1687, %v1801
      %v1823 = vadd.f32 %v1688, %v1801
      %v1824 = vadd.f32 %v1689, %v1801
      %v1825 = vadd.f32 %v1690, %v1801
      %v1826 = vadd.f32 %v1691, %v1801
      %v1827 = vadd.f32 %v1692, %v1801
      %v1828 = vadd.f32 %v1693, %v1801
      %v1829 = vadd.f32 %v1694, %v1801
      %v1830 = vadd.f32 %v1695, %v1801
      %v1831 = vadd.f32 %v1696, %v1801
      %v1832 = vadd.f32 %v1697, %v1801
      %v1833 = vadd.f32 %v1698, %v1801
      %v1834 = vadd.f32 %v1699, %v1801
      %v1835 = vadd.f32 %v1700, %v1801
      %v1836 = vadd.f32 %v1701, %v1801
      %v1837 = vadd.f32 %v1702, %v1801
      %v1838 = vadd.f32 %v1703, %v1801
      %v1839 = vadd.f32 %v1704, %v1801
      %v1840 = vadd.f32 %v1705, %v1801
      %v1841 = vadd.f32 %v1706, %v1801
      %v1842 = vadd.f32 %v1707, %v1801
      %v1843 = vadd.f32 %v1708, %v1801
      %v1844 = vadd.f32 %v1709, %v1801
      %v1845 = vadd.f32 %v1710, %v1801
      %v1846 = vadd.f32 %v1711, %v1801
      %v1847 = vadd.f32 %v1712, %v1801
      %v1848 = vadd.f32 %v1713, %v1801
      %v1849 = vadd.f32 %v1714, %v1801
      %v1850 = vadd.f32 %v1715, %v1801
      %v1851 = vadd.f32 %v1716, %v1801
      %v1852 = vadd.f32 %v1717, %v1801
      %v1853 = vadd.f32 %v1718, %v1801
      %v1854 = vadd.f32 %v1719, %v1801
      %v1855 = vadd.f32 %v1720, %v1801
      %v1856 = vadd.f32 %v1721, %v1801
      %v1857 = vadd.f32 %v1722, %v1801
      %v1858 = vadd.f32 %v1723, %v1801
      %v1859 = vadd.f32 %v1724, %v1801
      %v1860 = vadd.f32 %v1725, %v1801
      %v1861 = vadd.f32 %v1726, %v1801
      %v1862 = vadd.f32 %v1727, %v1801
      %v1863 = vadd.f32 %v1728, %v1801
      %v1864 = vadd.f32 %v1729, %v1801
      %v1865 = vadd.f32 %v1730, %v1801
      %v1866 = vadd.f32 %v1731, %v1801
      %v1867 = vadd.f32 %v1732, %v1801
      %v1868 = vadd.f32 %v1733, %v1801
      %v1869 = vadd.f32 %v1734, %v1801
      %v1870 = vadd.f32 %v1735, %v1801
      %v1871 = vadd.f32 %v1736, %v1801
      %v1872 = vadd.f32 %v1737, %v1801
      %v1873 = vadd.f32 %v1738, %v1801
      %v1874 = vadd.f32 %v1739, %v1801
      %v1875 = vadd.f32 %v1740, %v1801
      %v1876 = vadd.f32 %v1741, %v1801
      %v1877 = vadd.f32 %v1742, %v1801
      %v1878 = vadd.f32 %v1743, %v1801
      %v1879 = vadd.f32 %v1744, %v1801
      %v1880 = vadd.f32 %v1745, %v1801
      %v1881 = vadd.f32 %v1746, %v1801
      %v1882 = vadd.f32 %v1747, %v1801
      %v1883 = vadd.f32 %v1748, %v1801
      %v1884 = vadd.f32 %v1749, %v1801
      %v1885 = vadd.f32 %v1750, %v1801
      %v1886 = vadd.f32 %v1751, %v1801
      %v1887 = vadd.f32 %v1752, %v1801
      %v1888 = vadd.f32 %v1753, %v1801
      %v1889 = vadd.f32 %v1754, %v1801
      %v1890 = vadd.f32 %v1755, %v1801
      %v1891 = vadd.f32 %v1756, %v1801
      %v1892 = vadd.f32 %v1757, %v1801
      %v1893 = vadd.f32 %v1758, %v1801
      %v1894 = vadd.f32 %v1759, %v1801
      %v1895 = vadd.f32 %v1760, %v1801
      %v1896 = vadd.f32 %v1761, %v1801
      %v1897 = vadd.f32 %v1762, %v1801
      %v1898 = vadd.f32 %v1763, %v1801
      %v1899 = vadd.f32 %v1764, %v1801
      %v1900 = vadd.f32 %v1765, %v1801
      %v1901 = vadd.f32 %v1766, %v1801
      %v1902 = vadd.f32 %v1767, %v1801
      %v1903 = vadd.f32 %v1768, %v1801
      %v1904 = vadd.f32 %v1769, %v1801
      %v1905 = vadd.f32 %v1770, %v1801
      %v1906 = vadd.f32 %v1771, %v1801
      %v1907 = vadd.f32 %v1772, %v1801
      %v1908 = vadd.f32 %v1773, %v1801
      %v1909 = vadd.f32 %v1774, %v1801
      %v1910 = vadd.f32 %v1775, %v1801
      %v1911 = vadd.f32 %v1776, %v1801
      %v1912 = vadd.f32 %v1777, %v1801
      %v1913 = vadd.f32 %v1778, %v1801
      %v1914 = vadd.f32 %v1779, %v1801
      %v1915 = vadd.f32 %v1780, %v1801
      %v1916 = vadd.f32 %v1781, %v1801
      %v1917 = vadd.f32 %v1782, %v1801
      %v1918 = vadd.f32 %v1783, %v1801
      %v1919 = vadd.f32 %v1784, %v1801
      %v1920 = vadd.f32 %v1785, %v1801
      %v1921 = vadd.f32 %v1786, %v1801
      %v1922 = vadd.f32 %v1787, %v1801
      %v1923 = vadd.f32 %v1788, %v1801
      %v1924 = vadd.f32 %v1789, %v1801
      %v1925 = vadd.f32 %v1790, %v1801
      %v1926 = vadd.f32 %v1791, %v1801
      %v1927 = vadd.f32 %v1792, %v1801
      %v1928 = vadd.f32 %v1793, %v1801
      %v1929 = vadd.f32 %v1794, %v1801
      %v1930 = vadd.f32 %v1795, %v1801
      %v1931 = vmax.f32 %v1803, 0.0
      %v1932 = vmax.f32 %v1804, 0.0
      %v1933 = vmax.f32 %v1805, 0.0
      %v1934 = vmax.f32 %v1806, 0.0
      %v1935 = vmax.f32 %v1807, 0.0
      %v1936 = vmax.f32 %v1808, 0.0
      %v1937 = vmax.f32 %v1809, 0.0
      %v1938 = vmax.f32 %v1810, 0.0
      %v1939 = vmax.f32 %v1811, 0.0
      %v1940 = vmax.f32 %v1812, 0.0
      %v1941 = vmax.f32 %v1813, 0.0
      %v1942 = vmax.f32 %v1814, 0.0
      %v1943 = vmax.f32 %v1815, 0.0
      %v1944 = vmax.f32 %v1816, 0.0
      %v1945 = vmax.f32 %v1817, 0.0
      %v1946 = vmax.f32 %v1818, 0.0
      %v1947 = vmax.f32 %v1819, 0.0
      %v1948 = vmax.f32 %v1820, 0.0
      %v1949 = vmax.f32 %v1821, 0.0
      %v1950 = vmax.f32 %v1822, 0.0
      %v1951 = vmax.f32 %v1823, 0.0
      %v1952 = vmax.f32 %v1824, 0.0
      %v1953 = vmax.f32 %v1825, 0.0
      %v1954 = vmax.f32 %v1826, 0.0
      %v1955 = vmax.f32 %v1827, 0.0
      %v1956 = vmax.f32 %v1828, 0.0
      %v1957 = vmax.f32 %v1829, 0.0
      %v1958 = vmax.f32 %v1830, 0.0
      %v1959 = vmax.f32 %v1831, 0.0
      %v1960 = vmax.f32 %v1832, 0.0
      %v1961 = vmax.f32 %v1833, 0.0
      %v1962 = vmax.f32 %v1834, 0.0
      %v1963 = vmax.f32 %v1835, 0.0
      %v1964 = vmax.f32 %v1836, 0.0
      %v1965 = vmax.f32 %v1837, 0.0
      %v1966 = vmax.f32 %v1838, 0.0
      %v1967 = vmax.f32 %v1839, 0.0
      %v1968 = vmax.f32 %v1840, 0.0
      %v1969 = vmax.f32 %v1841, 0.0
      %v1970 = vmax.f32 %v1842, 0.0
      %v1971 = vmax.f32 %v1843, 0.0
      %v1972 = vmax.f32 %v1844, 0.0
      %v1973 = vmax.f32 %v1845, 0.0
      %v1974 = vmax.f32 %v1846, 0.0
      %v1975 = vmax.f32 %v1847, 0.0
      %v1976 = vmax.f32 %v1848, 0.0
      %v1977 = vmax.f32 %v1849, 0.0
      %v1978 = vmax.f32 %v1850, 0.0
      %v1979 = vmax.f32 %v1851, 0.0
      %v1980 = vmax.f32 %v1852, 0.0
      %v1981 = vmax.f32 %v1853, 0.0
      %v1982 = vmax.f32 %v1854, 0.0
      %v1983 = vmax.f32 %v1855, 0.0
      %v1984 = vmax.f32 %v1856, 0.0
      %v1985 = vmax.f32 %v1857, 0.0
      %v1986 = vmax.f32 %v1858, 0.0
      %v1987 = vmax.f32 %v1859, 0.0
      %v1988 = vmax.f32 %v1860, 0.0
      %v1989 = vmax.f32 %v1861, 0.0
      %v1990 = vmax.f32 %v1862, 0.0
      %v1991 = vmax.f32 %v1863, 0.0
      %v1992 = vmax.f32 %v1864, 0.0
      %v1993 = vmax.f32 %v1865, 0.0
      %v1994 = vmax.f32 %v1866, 0.0
      %v1995 = vmax.f32 %v1867, 0.0
      %v1996 = vmax.f32 %v1868, 0.0
      %v1997 = vmax.f32 %v1869, 0.0
      %v1998 = vmax.f32 %v1870, 0.0
      %v1999 = vmax.f32 %v1871, 0.0
      %v2000 = vmax.f32 %v1872, 0.0
      %v2001 = vmax.f32 %v1873, 0.0
      %v2002 = vmax.f32 %v1874, 0.0
      %v2003 = vmax.f32 %v1875, 0.0
      %v2004 = vmax.f32 %v1876, 0.0
      %v2005 = vmax.f32 %v1877, 0.0
      %v2006 = vmax.f32 %v1878, 0.0
      %v2007 = vmax.f32 %v1879, 0.0
      %v2008 = vmax.f32 %v1880, 0.0
      %v2009 = vmax.f32 %v1881, 0.0
      %v2010 = vmax.f32 %v1882, 0.0
      %v2011 = vmax.f32 %v1883, 0.0
      %v2012 = vmax.f32 %v1884, 0.0
      %v2013 = vmax.f32 %v1885, 0.0
      %v2014 = vmax.f32 %v1886, 0.0
      %v2015 = vmax.f32 %v1887, 0.0
      %v2016 = vmax.f32 %v1888, 0.0
      %v2017 = vmax.f32 %v1889, 0.0
      %v2018 = vmax.f32 %v1890, 0.0
      %v2019 = vmax.f32 %v1891, 0.0
      %v2020 = vmax.f32 %v1892, 0.0
      %v2021 = vmax.f32 %v1893, 0.0
      %v2022 = vmax.f32 %v1894, 0.0
      %v2023 = vmax.f32 %v1895, 0.0
      %v2024 = vmax.f32 %v1896, 0.0
      %v2025 = vmax.f32 %v1897, 0.0
      %v2026 = vmax.f32 %v1898, 0.0
      %v2027 = vmax.f32 %v1899, 0.0
      %v2028 = vmax.f32 %v1900, 0.0
      %v2029 = vmax.f32 %v1901, 0.0
      %v2030 = vmax.f32 %v1902, 0.0
      %v2031 = vmax.f32 %v1903, 0.0
      %v2032 = vmax.f32 %v1904, 0.0
      %v2033 = vmax.f32 %v1905, 0.0
      %v2034 = vmax.f32 %v1906, 0.0
      %v2035 = vmax.f32 %v1907, 0.0
      %v2036 = vmax.f32 %v1908, 0.0
      %v2037 = vmax.f32 %v1909, 0.0
      %v2038 = vmax.f32 %v1910, 0.0
      %v2039 = vmax.f32 %v1911, 0.0
      %v2040 = vmax.f32 %v1912, 0.0
      %v2041 = vmax.f32 %v1913, 0.0
      %v2042 = vmax.f32 %v1914, 0.0
      %v2043 = vmax.f32 %v1915, 0.0
      %v2044 = vmax.f32 %v1916, 0.0
      %v2045 = vmax.f32 %v1917, 0.0
      %v2046 = vmax.f32 %v1918, 0.0
      %v2047 = vmax.f32 %v1919, 0.0
      %v2048 = vmax.f32 %v1920, 0.0
      %v2049 = vmax.f32 %v1921, 0.0
      %v2050 = vmax.f32 %v1922, 0.0
      %v2051 = vmax.f32 %v1923, 0.0
      %v2052 = vmax.f32 %v1924, 0.0
      %v2053 = vmax.f32 %v1925, 0.0
      %v2054 = vmax.f32 %v1926, 0.0
      %v2055 = vmax.f32 %v1927, 0.0
      %v2056 = vmax.f32 %v1928, 0.0
      %v2057 = vmax.f32 %v1929, 0.0
      %v2058 = vmax.f32 %v1930, 0.0
      %v2059 = vpack.c.bf16 %v1932, %v1931
      %v2060 = vpack.c.bf16 %v1934, %v1933
      %v2061 = vpack.c.bf16 %v1936, %v1935
      %v2062 = vpack.c.bf16 %v1938, %v1937
      %v2063 = vpack.c.bf16 %v1940, %v1939
      %v2064 = vpack.c.bf16 %v1942, %v1941
      %v2065 = vpack.c.bf16 %v1944, %v1943
      %v2066 = vpack.c.bf16 %v1946, %v1945
      %v2067 = vpack.c.bf16 %v1948, %v1947
      %v2068 = vpack.c.bf16 %v1950, %v1949
      %v2069 = vpack.c.bf16 %v1952, %v1951
      %v2070 = vpack.c.bf16 %v1954, %v1953
      %v2071 = vpack.c.bf16 %v1956, %v1955
      %v2072 = vpack.c.bf16 %v1958, %v1957
      %v2073 = vpack.c.bf16 %v1960, %v1959
      %v2074 = vpack.c.bf16 %v1962, %v1961
      %v2075 = vpack.c.bf16 %v1964, %v1963
      %v2076 = vpack.c.bf16 %v1966, %v1965
      %v2077 = vpack.c.bf16 %v1968, %v1967
      %v2078 = vpack.c.bf16 %v1970, %v1969
      %v2079 = vpack.c.bf16 %v1972, %v1971
      %v2080 = vpack.c.bf16 %v1974, %v1973
      %v2081 = vpack.c.bf16 %v1976, %v1975
      %v2082 = vpack.c.bf16 %v1978, %v1977
      %v2083 = vpack.c.bf16 %v1980, %v1979
      %v2084 = vpack.c.bf16 %v1982, %v1981
      %v2085 = vpack.c.bf16 %v1984, %v1983
      %v2086 = vpack.c.bf16 %v1986, %v1985
      %v2087 = vpack.c.bf16 %v1988, %v1987
      %v2088 = vpack.c.bf16 %v1990, %v1989
      %v2089 = vpack.c.bf16 %v1992, %v1991
      %v2090 = vpack.c.bf16 %v1994, %v1993
      %v2091 = vpack.c.bf16 %v1996, %v1995
      %v2092 = vpack.c.bf16 %v1998, %v1997
      %v2093 = vpack.c.bf16 %v2000, %v1999
      %v2094 = vpack.c.bf16 %v2002, %v2001
      %v2095 = vpack.c.bf16 %v2004, %v2003
      %v2096 = vpack.c.bf16 %v2006, %v2005
      %v2097 = vpack.c.bf16 %v2008, %v2007
      %v2098 = vpack.c.bf16 %v2010, %v2009
      %v2099 = vpack.c.bf16 %v2012, %v2011
      %v2100 = vpack.c.bf16 %v2014, %v2013
      %v2101 = vpack.c.bf16 %v2016, %v2015
      %v2102 = vpack.c.bf16 %v2018, %v2017
      %v2103 = vpack.c.bf16 %v2020, %v2019
      %v2104 = vpack.c.bf16 %v2022, %v2021
      %v2105 = vpack.c.bf16 %v2024, %v2023
      %v2106 = vpack.c.bf16 %v2026, %v2025
      %v2107 = vpack.c.bf16 %v2028, %v2027
      %v2108 = vpack.c.bf16 %v2030, %v2029
      %v2109 = vpack.c.bf16 %v2032, %v2031
      %v2110 = vpack.c.bf16 %v2034, %v2033
      %v2111 = vpack.c.bf16 %v2036, %v2035
      %v2112 = vpack.c.bf16 %v2038, %v2037
      %v2113 = vpack.c.bf16 %v2040, %v2039
      %v2114 = vpack.c.bf16 %v2042, %v2041
      %v2115 = vpack.c.bf16 %v2044, %v2043
      %v2116 = vpack.c.bf16 %v2046, %v2045
      %v2117 = vpack.c.bf16 %v2048, %v2047
      %v2118 = vpack.c.bf16 %v2050, %v2049
      %v2119 = vpack.c.bf16 %v2052, %v2051
      %v2120 = vpack.c.bf16 %v2054, %v2053
      %v2121 = vpack.c.bf16 %v2056, %v2055
      %v2122 = vpack.c.bf16 %v2058, %v2057
      %v2123 = vld [vmem:[%s5] sm:$0xf]
      %v2124 = vld [vmem:[%s5 + $0x4] sm:$0xf]
      %v2125 = vld [vmem:[%s5 + $0x8] sm:$0xf]
      %v2126 = vld [vmem:[%s5 + $0xc] sm:$0xf]
      %v2127 = vld [vmem:[%s5 + $0x10] sm:$0xf]
      %v2128 = vld [vmem:[%s5 + $0x14] sm:$0xf]
      %v2129 = vld [vmem:[%s5 + $0x18] sm:$0xf]
      %v2130 = vld [vmem:[%s5 + $0x1c] sm:$0xf]
      %v2131 = vld [vmem:[%s5 + $0x20] sm:$0xf]
      %v2132 = vld [vmem:[%s5 + $0x24] sm:$0xf]
      %v2133 = vld [vmem:[%s5 + $0x28] sm:$0xf]
      %v2134 = vld [vmem:[%s5 + $0x2c] sm:$0xf]
      %v2135 = vld [vmem:[%s5 + $0x30] sm:$0xf]
      %v2136 = vld [vmem:[%s5 + $0x34] sm:$0xf]
      %v2137 = vld [vmem:[%s5 + $0x38] sm:$0xf]
      %v2138 = vld [vmem:[%s5 + $0x3c] sm:$0xf]
      %v2139 = vld [vmem:[%s6] sm:$0x1]
      %v2141 = vlaneseq
      %v2142 = vshrl.u32 %v2141, 7
      %v2143 = vsub.s32 0, %v2142
      %v2144 = vrot.slane %v2139, %v2143
      %v2162 = vunpack.c.l.b16 %v2123
      %v2163 = vunpack.c.l.b16 %v2124
      %v2164 = vunpack.c.l.b16 %v2125
      %v2165 = vunpack.c.l.b16 %v2126
      %v2166 = vunpack.c.l.b16 %v2127
      %v2167 = vunpack.c.l.b16 %v2128
      %v2168 = vunpack.c.l.b16 %v2129
      %v2169 = vunpack.c.l.b16 %v2130
      %v2170 = vunpack.c.l.b16 %v2131
      %v2171 = vunpack.c.l.b16 %v2132
      %v2172 = vunpack.c.l.b16 %v2133
      %v2173 = vunpack.c.l.b16 %v2134
      %v2174 = vunpack.c.l.b16 %v2135
      %v2175 = vunpack.c.l.b16 %v2136
      %v2176 = vunpack.c.l.b16 %v2137
      %v2177 = vunpack.c.l.b16 %v2138
      %v2178 = vpack.c.b16 %v2163, %v2162
      %v2179 = vpack.c.b16 %v2165, %v2164
      %v2180 = vpack.c.b16 %v2167, %v2166
      %v2181 = vpack.c.b16 %v2169, %v2168
      %v2182 = vpack.c.b16 %v2171, %v2170
      %v2183 = vpack.c.b16 %v2173, %v2172
      %v2184 = vpack.c.b16 %v2175, %v2174
      %v2185 = vpack.c.b16 %v2177, %v2176
      %2194 = vmatprep.subr.bf16.mxu0 0
      %2195 = vmatpush1.bf16.msra.mxu0 %v2178
      %2196 = vmatprep.subr.bf16.mxu0 0
      %2197 = vmatpush1.bf16.msra.mxu0 %v2179
      %2198 = vmatprep.subr.bf16.mxu0 0
      %2199 = vmatpush1.bf16.msra.mxu0 %v2180
      %2200 = vmatprep.subr.bf16.mxu0 0
      %2201 = vmatpush1.bf16.msra.mxu0 %v2181
      %2202 = vmatprep.subr.bf16.mxu0 0
      %2203 = vmatpush1.bf16.msra.mxu0 %v2182
      %2204 = vmatprep.subr.bf16.mxu0 0
      %2205 = vmatpush1.bf16.msra.mxu0 %v2183
      %2206 = vmatprep.subr.bf16.mxu0 0
      %2207 = vmatpush1.bf16.msra.mxu0 %v2184
      %2208 = vmatprep.subr.bf16.mxu0 0
      %2209 = vmatpush1.bf16.msra.mxu0 %v2185
      %2210 = vmatprep.subr.bf16.mxu0 0
      %2211 = vmatpush1.bf16.msra.mxu0 0
      %2212 = vmatprep.subr.bf16.mxu0 0
      %2213 = vmatpush1.bf16.msra.mxu0 0
      %2214 = vmatprep.subr.bf16.mxu0 0
      %2215 = vmatpush1.bf16.msra.mxu0 0
      %2216 = vmatprep.subr.bf16.mxu0 0
      %2217 = vmatpush1.bf16.msra.mxu0 0
      %2218 = vmatprep.subr.bf16.mxu0 0
      %2219 = vmatpush1.bf16.msra.mxu0 0
      %2220 = vmatprep.subr.bf16.mxu0 0
      %2221 = vmatpush1.bf16.msra.mxu0 0
      %2222 = vmatprep.subr.bf16.mxu0 0
      %2223 = vmatpush1.bf16.msra.mxu0 0
      %2224 = vmatprep.subr.bf16.mxu0 0
      %2225 = vmatpush1.bf16.msra.mxu0 0
      %2226 = vmatprep.mubr.bf16.mxu0 0
      %2227 = vmatmul.mubr.bf16.gmra.mrb[0].mxu0 %v2059
      %v2228 = vpop.f32.mrb[0].mxu0
      %v2229 = vadd.f32 %v2144, %v2228
      %v2230 = vpop.f32.mrb[0].mxu0
      %v2231 = vpop.f32.mrb[0].mxu0
      %v2232 = vadd.f32 %v2144, %v2231
      %v2233 = vpop.f32.mrb[0].mxu0
      %2234 = vmatprep.mubr.bf16.mxu0 0
      %2235 = vmatmul.mubr.bf16.gmra.mrb[0].mxu0 %v2060
      %v2236 = vpop.f32.mrb[0].mxu0
      %v2237 = vadd.f32 %v2144, %v2236
      %v2238 = vpop.f32.mrb[0].mxu0
      %v2239 = vpop.f32.mrb[0].mxu0
      %v2240 = vadd.f32 %v2144, %v2239
      %v2241 = vpop.f32.mrb[0].mxu0
      %2242 = vmatprep.mubr.bf16.mxu0 0
      %2243 = vmatmul.mubr.bf16.gmra.mrb[0].mxu0 %v2061
      %v2244 = vpop.f32.mrb[0].mxu0
      %v2245 = vadd.f32 %v2144, %v2244
      %v2246 = vpop.f32.mrb[0].mxu0
      %v2247 = vpop.f32.mrb[0].mxu0
      %v2248 = vadd.f32 %v2144, %v2247
      %v2249 = vpop.f32.mrb[0].mxu0
      %2250 = vmatprep.mubr.bf16.mxu0 0
      %2251 = vmatmul.mubr.bf16.gmra.mrb[0].mxu0 %v2062
      %v2252 = vpop.f32.mrb[0].mxu0
      %v2253 = vadd.f32 %v2144, %v2252
      %v2254 = vpop.f32.mrb[0].mxu0
      %v2255 = vpop.f32.mrb[0].mxu0
      %v2256 = vadd.f32 %v2144, %v2255
      %v2257 = vpop.f32.mrb[0].mxu0
      %2258 = vmatprep.mubr.bf16.mxu0 0
      %2259 = vmatmul.mubr.bf16.gmra.mrb[0].mxu0 %v2063
      %v2260 = vpop.f32.mrb[0].mxu0
      %v2261 = vadd.f32 %v2144, %v2260
      %v2262 = vpop.f32.mrb[0].mxu0
      %v2263 = vpop.f32.mrb[0].mxu0
      %v2264 = vadd.f32 %v2144, %v2263
      %v2265 = vpop.f32.mrb[0].mxu0
      %2266 = vmatprep.mubr.bf16.mxu0 0
      %2267 = vmatmul.mubr.bf16.gmra.mrb[0].mxu0 %v2064
      %v2268 = vpop.f32.mrb[0].mxu0
      %v2269 = vadd.f32 %v2144, %v2268
      %v2270 = vpop.f32.mrb[0].mxu0
      %v2271 = vpop.f32.mrb[0].mxu0
      %v2272 = vadd.f32 %v2144, %v2271
      %v2273 = vpop.f32.mrb[0].mxu0
      %2274 = vmatprep.mubr.bf16.mxu0 0
      %2275 = vmatmul.mubr.bf16.gmra.mrb[0].mxu0 %v2065
      %v2276 = vpop.f32.mrb[0].mxu0
      %v2277 = vadd.f32 %v2144, %v2276
      %v2278 = vpop.f32.mrb[0].mxu0
      %v2279 = vpop.f32.mrb[0].mxu0
      %v2280 = vadd.f32 %v2144, %v2279
      %v2281 = vpop.f32.mrb[0].mxu0
      %2282 = vmatprep.mubr.bf16.mxu0 0
      %2283 = vmatmul.mubr.bf16.gmra.mrb[0].mxu0 %v2066
      %v2284 = vpop.f32.mrb[0].mxu0
      %v2285 = vadd.f32 %v2144, %v2284
      %v2286 = vpop.f32.mrb[0].mxu0
      %v2287 = vpop.f32.mrb[0].mxu0
      %v2288 = vadd.f32 %v2144, %v2287
      %v2289 = vpop.f32.mrb[0].mxu0
      %2290 = vmatprep.mubr.bf16.mxu0 0
      %2291 = vmatmul.mubr.bf16.gmra.mrb[0].mxu0 %v2067
      %v2292 = vpop.f32.mrb[0].mxu0
      %v2293 = vadd.f32 %v2144, %v2292
      %v2294 = vpop.f32.mrb[0].mxu0
      %v2295 = vpop.f32.mrb[0].mxu0
      %v2296 = vadd.f32 %v2144, %v2295
      %v2297 = vpop.f32.mrb[0].mxu0
      %2298 = vmatprep.mubr.bf16.mxu0 0
      %2299 = vmatmul.mubr.bf16.gmra.mrb[0].mxu0 %v2068
      %v2300 = vpop.f32.mrb[0].mxu0
      %v2301 = vadd.f32 %v2144, %v2300
      %v2302 = vpop.f32.mrb[0].mxu0
      %v2303 = vpop.f32.mrb[0].mxu0
      %v2304 = vadd.f32 %v2144, %v2303
      %v2305 = vpop.f32.mrb[0].mxu0
      %2306 = vmatprep.mubr.bf16.mxu0 0
      %2307 = vmatmul.mubr.bf16.gmra.mrb[0].mxu0 %v2069
      %v2308 = vpop.f32.mrb[0].mxu0
      %v2309 = vadd.f32 %v2144, %v2308
      %v2310 = vpop.f32.mrb[0].mxu0
      %v2311 = vpop.f32.mrb[0].mxu0
      %v2312 = vadd.f32 %v2144, %v2311
      %v2313 = vpop.f32.mrb[0].mxu0
      %2314 = vmatprep.mubr.bf16.mxu0 0
      %2315 = vmatmul.mubr.bf16.gmra.mrb[0].mxu0 %v2070
      %v2316 = vpop.f32.mrb[0].mxu0
      %v2317 = vadd.f32 %v2144, %v2316
      %v2318 = vpop.f32.mrb[0].mxu0
      %v2319 = vpop.f32.mrb[0].mxu0
      %v2320 = vadd.f32 %v2144, %v2319
      %v2321 = vpop.f32.mrb[0].mxu0
      %2322 = vmatprep.mubr.bf16.mxu0 0
      %2323 = vmatmul.mubr.bf16.gmra.mrb[0].mxu0 %v2071
      %v2324 = vpop.f32.mrb[0].mxu0
      %v2325 = vadd.f32 %v2144, %v2324
      %v2326 = vpop.f32.mrb[0].mxu0
      %v2327 = vpop.f32.mrb[0].mxu0
      %v2328 = vadd.f32 %v2144, %v2327
      %v2329 = vpop.f32.mrb[0].mxu0
      %2330 = vmatprep.mubr.bf16.mxu0 0
      %2331 = vmatmul.mubr.bf16.gmra.mrb[0].mxu0 %v2072
      %v2332 = vpop.f32.mrb[0].mxu0
      %v2333 = vadd.f32 %v2144, %v2332
      %v2334 = vpop.f32.mrb[0].mxu0
      %v2335 = vpop.f32.mrb[0].mxu0
      %v2336 = vadd.f32 %v2144, %v2335
      %v2337 = vpop.f32.mrb[0].mxu0
      %2338 = vmatprep.mubr.bf16.mxu0 0
      %2339 = vmatmul.mubr.bf16.gmra.mrb[0].mxu0 %v2073
      %v2340 = vpop.f32.mrb[0].mxu0
      %v2341 = vadd.f32 %v2144, %v2340
      %v2342 = vpop.f32.mrb[0].mxu0
      %v2343 = vpop.f32.mrb[0].mxu0
      %v2344 = vadd.f32 %v2144, %v2343
      %v2345 = vpop.f32.mrb[0].mxu0
      %2346 = vmatprep.mubr.bf16.mxu0 0
      %2347 = vmatmul.mubr.bf16.gmra.mrb[0].mxu0 %v2074
      %v2348 = vpop.f32.mrb[0].mxu0
      %v2349 = vadd.f32 %v2144, %v2348
      %v2350 = vpop.f32.mrb[0].mxu0
      %v2351 = vpop.f32.mrb[0].mxu0
      %v2352 = vadd.f32 %v2144, %v2351
      %v2353 = vpop.f32.mrb[0].mxu0
      %2354 = vmatprep.mubr.bf16.mxu0 0
      %2355 = vmatmul.mubr.bf16.gmra.mrb[0].mxu0 %v2075
      %v2356 = vpop.f32.mrb[0].mxu0
      %v2357 = vadd.f32 %v2144, %v2356
      %v2358 = vpop.f32.mrb[0].mxu0
      %v2359 = vpop.f32.mrb[0].mxu0
      %v2360 = vadd.f32 %v2144, %v2359
      %v2361 = vpop.f32.mrb[0].mxu0
      %2362 = vmatprep.mubr.bf16.mxu0 0
      %2363 = vmatmul.mubr.bf16.gmra.mrb[0].mxu0 %v2076
      %v2364 = vpop.f32.mrb[0].mxu0
      %v2365 = vadd.f32 %v2144, %v2364
      %v2366 = vpop.f32.mrb[0].mxu0
      %v2367 = vpop.f32.mrb[0].mxu0
      %v2368 = vadd.f32 %v2144, %v2367
      %v2369 = vpop.f32.mrb[0].mxu0
      %2370 = vmatprep.mubr.bf16.mxu0 0
      %2371 = vmatmul.mubr.bf16.gmra.mrb[0].mxu0 %v2077
      %v2372 = vpop.f32.mrb[0].mxu0
      %v2373 = vadd.f32 %v2144, %v2372
      %v2374 = vpop.f32.mrb[0].mxu0
      %v2375 = vpop.f32.mrb[0].mxu0
      %v2376 = vadd.f32 %v2144, %v2375
      %v2377 = vpop.f32.mrb[0].mxu0
      %2378 = vmatprep.mubr.bf16.mxu0 0
      %2379 = vmatmul.mubr.bf16.gmra.mrb[0].mxu0 %v2078
      %v2380 = vpop.f32.mrb[0].mxu0
      %v2381 = vadd.f32 %v2144, %v2380
      %v2382 = vpop.f32.mrb[0].mxu0
      %v2383 = vpop.f32.mrb[0].mxu0
      %v2384 = vadd.f32 %v2144, %v2383
      %v2385 = vpop.f32.mrb[0].mxu0
      %2386 = vmatprep.mubr.bf16.mxu0 0
      %2387 = vmatmul.mubr.bf16.gmra.mrb[0].mxu0 %v2079
      %v2388 = vpop.f32.mrb[0].mxu0
      %v2389 = vadd.f32 %v2144, %v2388
      %v2390 = vpop.f32.mrb[0].mxu0
      %v2391 = vpop.f32.mrb[0].mxu0
      %v2392 = vadd.f32 %v2144, %v2391
      %v2393 = vpop.f32.mrb[0].mxu0
      %2394 = vmatprep.mubr.bf16.mxu0 0
      %2395 = vmatmul.mubr.bf16.gmra.mrb[0].mxu0 %v2080
      %v2396 = vpop.f32.mrb[0].mxu0
      %v2397 = vadd.f32 %v2144, %v2396
      %v2398 = vpop.f32.mrb[0].mxu0
      %v2399 = vpop.f32.mrb[0].mxu0
      %v2400 = vadd.f32 %v2144, %v2399
      %v2401 = vpop.f32.mrb[0].mxu0
      %2402 = vmatprep.mubr.bf16.mxu0 0
      %2403 = vmatmul.mubr.bf16.gmra.mrb[0].mxu0 %v2081
      %v2404 = vpop.f32.mrb[0].mxu0
      %v2405 = vadd.f32 %v2144, %v2404
      %v2406 = vpop.f32.mrb[0].mxu0
      %v2407 = vpop.f32.mrb[0].mxu0
      %v2408 = vadd.f32 %v2144, %v2407
      %v2409 = vpop.f32.mrb[0].mxu0
      %2410 = vmatprep.mubr.bf16.mxu0 0
      %2411 = vmatmul.mubr.bf16.gmra.mrb[0].mxu0 %v2082
      %v2412 = vpop.f32.mrb[0].mxu0
      %v2413 = vadd.f32 %v2144, %v2412
      %v2414 = vpop.f32.mrb[0].mxu0
      %v2415 = vpop.f32.mrb[0].mxu0
      %v2416 = vadd.f32 %v2144, %v2415
      %v2417 = vpop.f32.mrb[0].mxu0
      %2418 = vmatprep.mubr.bf16.mxu0 0
      %2419 = vmatmul.mubr.bf16.gmra.mrb[0].mxu0 %v2083
      %v2420 = vpop.f32.mrb[0].mxu0
      %v2421 = vadd.f32 %v2144, %v2420
      %v2422 = vpop.f32.mrb[0].mxu0
      %v2423 = vpop.f32.mrb[0].mxu0
      %v2424 = vadd.f32 %v2144, %v2423
      %v2425 = vpop.f32.mrb[0].mxu0
      %2426 = vmatprep.mubr.bf16.mxu0 0
      %2427 = vmatmul.mubr.bf16.gmra.mrb[0].mxu0 %v2084
      %v2428 = vpop.f32.mrb[0].mxu0
      %v2429 = vadd.f32 %v2144, %v2428
      %v2430 = vpop.f32.mrb[0].mxu0
      %v2431 = vpop.f32.mrb[0].mxu0
      %v2432 = vadd.f32 %v2144, %v2431
      %v2433 = vpop.f32.mrb[0].mxu0
      %2434 = vmatprep.mubr.bf16.mxu0 0
      %2435 = vmatmul.mubr.bf16.gmra.mrb[0].mxu0 %v2085
      %v2436 = vpop.f32.mrb[0].mxu0
      %v2437 = vadd.f32 %v2144, %v2436
      %v2438 = vpop.f32.mrb[0].mxu0
      %v2439 = vpop.f32.mrb[0].mxu0
      %v2440 = vadd.f32 %v2144, %v2439
      %v2441 = vpop.f32.mrb[0].mxu0
      %2442 = vmatprep.mubr.bf16.mxu0 0
      %2443 = vmatmul.mubr.bf16.gmra.mrb[0].mxu0 %v2086
      %v2444 = vpop.f32.mrb[0].mxu0
      %v2445 = vadd.f32 %v2144, %v2444
      %v2446 = vpop.f32.mrb[0].mxu0
      %v2447 = vpop.f32.mrb[0].mxu0
      %v2448 = vadd.f32 %v2144, %v2447
      %v2449 = vpop.f32.mrb[0].mxu0
      %2450 = vmatprep.mubr.bf16.mxu0 0
      %2451 = vmatmul.mubr.bf16.gmra.mrb[0].mxu0 %v2087
      %v2452 = vpop.f32.mrb[0].mxu0
      %v2453 = vadd.f32 %v2144, %v2452
      %v2454 = vpop.f32.mrb[0].mxu0
      %v2455 = vpop.f32.mrb[0].mxu0
      %v2456 = vadd.f32 %v2144, %v2455
      %v2457 = vpop.f32.mrb[0].mxu0
      %2458 = vmatprep.mubr.bf16.mxu0 0
      %2459 = vmatmul.mubr.bf16.gmra.mrb[0].mxu0 %v2088
      %v2460 = vpop.f32.mrb[0].mxu0
      %v2461 = vadd.f32 %v2144, %v2460
      %v2462 = vpop.f32.mrb[0].mxu0
      %v2463 = vpop.f32.mrb[0].mxu0
      %v2464 = vadd.f32 %v2144, %v2463
      %v2465 = vpop.f32.mrb[0].mxu0
      %2466 = vmatprep.mubr.bf16.mxu0 0
      %2467 = vmatmul.mubr.bf16.gmra.mrb[0].mxu0 %v2089
      %v2468 = vpop.f32.mrb[0].mxu0
      %v2469 = vadd.f32 %v2144, %v2468
      %v2470 = vpop.f32.mrb[0].mxu0
      %v2471 = vpop.f32.mrb[0].mxu0
      %v2472 = vadd.f32 %v2144, %v2471
      %v2473 = vpop.f32.mrb[0].mxu0
      %2474 = vmatprep.mubr.bf16.mxu0 0
      %2475 = vmatmul.mubr.bf16.gmra.mrb[0].mxu0 %v2090
      %v2476 = vpop.f32.mrb[0].mxu0
      %v2477 = vadd.f32 %v2144, %v2476
      %v2478 = vpop.f32.mrb[0].mxu0
      %v2479 = vpop.f32.mrb[0].mxu0
      %v2480 = vadd.f32 %v2144, %v2479
      %v2481 = vpop.f32.mrb[0].mxu0
      %2482 = vmatprep.mubr.bf16.mxu0 0
      %2483 = vmatmul.mubr.bf16.gmra.mrb[0].mxu0 %v2091
      %v2484 = vpop.f32.mrb[0].mxu0
      %v2485 = vadd.f32 %v2144, %v2484
      %v2486 = vpop.f32.mrb[0].mxu0
      %v2487 = vpop.f32.mrb[0].mxu0
      %v2488 = vadd.f32 %v2144, %v2487
      %v2489 = vpop.f32.mrb[0].mxu0
      %2490 = vmatprep.mubr.bf16.mxu0 0
      %2491 = vmatmul.mubr.bf16.gmra.mrb[0].mxu0 %v2092
      %v2492 = vpop.f32.mrb[0].mxu0
      %v2493 = vadd.f32 %v2144, %v2492
      %v2494 = vpop.f32.mrb[0].mxu0
      %v2495 = vpop.f32.mrb[0].mxu0
      %v2496 = vadd.f32 %v2144, %v2495
      %v2497 = vpop.f32.mrb[0].mxu0
      %2498 = vmatprep.mubr.bf16.mxu0 0
      %2499 = vmatmul.mubr.bf16.gmra.mrb[0].mxu0 %v2093
      %v2500 = vpop.f32.mrb[0].mxu0
      %v2501 = vadd.f32 %v2144, %v2500
      %v2502 = vpop.f32.mrb[0].mxu0
      %v2503 = vpop.f32.mrb[0].mxu0
      %v2504 = vadd.f32 %v2144, %v2503
      %v2505 = vpop.f32.mrb[0].mxu0
      %2506 = vmatprep.mubr.bf16.mxu0 0
      %2507 = vmatmul.mubr.bf16.gmra.mrb[0].mxu0 %v2094
      %v2508 = vpop.f32.mrb[0].mxu0
      %v2509 = vadd.f32 %v2144, %v2508
      %v2510 = vpop.f32.mrb[0].mxu0
      %v2511 = vpop.f32.mrb[0].mxu0
      %v2512 = vadd.f32 %v2144, %v2511
      %v2513 = vpop.f32.mrb[0].mxu0
      %2514 = vmatprep.mubr.bf16.mxu0 0
      %2515 = vmatmul.mubr.bf16.gmra.mrb[0].mxu0 %v2095
      %v2516 = vpop.f32.mrb[0].mxu0
      %v2517 = vadd.f32 %v2144, %v2516
      %v2518 = vpop.f32.mrb[0].mxu0
      %v2519 = vpop.f32.mrb[0].mxu0
      %v2520 = vadd.f32 %v2144, %v2519
      %v2521 = vpop.f32.mrb[0].mxu0
      %2522 = vmatprep.mubr.bf16.mxu0 0
      %2523 = vmatmul.mubr.bf16.gmra.mrb[0].mxu0 %v2096
      %v2524 = vpop.f32.mrb[0].mxu0
      %v2525 = vadd.f32 %v2144, %v2524
      %v2526 = vpop.f32.mrb[0].mxu0
      %v2527 = vpop.f32.mrb[0].mxu0
      %v2528 = vadd.f32 %v2144, %v2527
      %v2529 = vpop.f32.mrb[0].mxu0
      %2530 = vmatprep.mubr.bf16.mxu0 0
      %2531 = vmatmul.mubr.bf16.gmra.mrb[0].mxu0 %v2097
      %v2532 = vpop.f32.mrb[0].mxu0
      %v2533 = vadd.f32 %v2144, %v2532
      %v2534 = vpop.f32.mrb[0].mxu0
      %v2535 = vpop.f32.mrb[0].mxu0
      %v2536 = vadd.f32 %v2144, %v2535
      %v2537 = vpop.f32.mrb[0].mxu0
      %2538 = vmatprep.mubr.bf16.mxu0 0
      %2539 = vmatmul.mubr.bf16.gmra.mrb[0].mxu0 %v2098
      %v2540 = vpop.f32.mrb[0].mxu0
      %v2541 = vadd.f32 %v2144, %v2540
      %v2542 = vpop.f32.mrb[0].mxu0
      %v2543 = vpop.f32.mrb[0].mxu0
      %v2544 = vadd.f32 %v2144, %v2543
      %v2545 = vpop.f32.mrb[0].mxu0
      %2546 = vmatprep.mubr.bf16.mxu0 0
      %2547 = vmatmul.mubr.bf16.gmra.mrb[0].mxu0 %v2099
      %v2548 = vpop.f32.mrb[0].mxu0
      %v2549 = vadd.f32 %v2144, %v2548
      %v2550 = vpop.f32.mrb[0].mxu0
      %v2551 = vpop.f32.mrb[0].mxu0
      %v2552 = vadd.f32 %v2144, %v2551
      %v2553 = vpop.f32.mrb[0].mxu0
      %2554 = vmatprep.mubr.bf16.mxu0 0
      %2555 = vmatmul.mubr.bf16.gmra.mrb[0].mxu0 %v2100
      %v2556 = vpop.f32.mrb[0].mxu0
      %v2557 = vadd.f32 %v2144, %v2556
      %v2558 = vpop.f32.mrb[0].mxu0
      %v2559 = vpop.f32.mrb[0].mxu0
      %v2560 = vadd.f32 %v2144, %v2559
      %v2561 = vpop.f32.mrb[0].mxu0
      %2562 = vmatprep.mubr.bf16.mxu0 0
      %2563 = vmatmul.mubr.bf16.gmra.mrb[0].mxu0 %v2101
      %v2564 = vpop.f32.mrb[0].mxu0
      %v2565 = vadd.f32 %v2144, %v2564
      %v2566 = vpop.f32.mrb[0].mxu0
      %v2567 = vpop.f32.mrb[0].mxu0
      %v2568 = vadd.f32 %v2144, %v2567
      %v2569 = vpop.f32.mrb[0].mxu0
      %2570 = vmatprep.mubr.bf16.mxu0 0
      %2571 = vmatmul.mubr.bf16.gmra.mrb[0].mxu0 %v2102
      %v2572 = vpop.f32.mrb[0].mxu0
      %v2573 = vadd.f32 %v2144, %v2572
      %v2574 = vpop.f32.mrb[0].mxu0
      %v2575 = vpop.f32.mrb[0].mxu0
      %v2576 = vadd.f32 %v2144, %v2575
      %v2577 = vpop.f32.mrb[0].mxu0
      %2578 = vmatprep.mubr.bf16.mxu0 0
      %2579 = vmatmul.mubr.bf16.gmra.mrb[0].mxu0 %v2103
      %v2580 = vpop.f32.mrb[0].mxu0
      %v2581 = vadd.f32 %v2144, %v2580
      %v2582 = vpop.f32.mrb[0].mxu0
      %v2583 = vpop.f32.mrb[0].mxu0
      %v2584 = vadd.f32 %v2144, %v2583
      %v2585 = vpop.f32.mrb[0].mxu0
      %2586 = vmatprep.mubr.bf16.mxu0 0
      %2587 = vmatmul.mubr.bf16.gmra.mrb[0].mxu0 %v2104
      %v2588 = vpop.f32.mrb[0].mxu0
      %v2589 = vadd.f32 %v2144, %v2588
      %v2590 = vpop.f32.mrb[0].mxu0
      %v2591 = vpop.f32.mrb[0].mxu0
      %v2592 = vadd.f32 %v2144, %v2591
      %v2593 = vpop.f32.mrb[0].mxu0
      %2594 = vmatprep.mubr.bf16.mxu0 0
      %2595 = vmatmul.mubr.bf16.gmra.mrb[0].mxu0 %v2105
      %v2596 = vpop.f32.mrb[0].mxu0
      %v2597 = vadd.f32 %v2144, %v2596
      %v2598 = vpop.f32.mrb[0].mxu0
      %v2599 = vpop.f32.mrb[0].mxu0
      %v2600 = vadd.f32 %v2144, %v2599
      %v2601 = vpop.f32.mrb[0].mxu0
      %2602 = vmatprep.mubr.bf16.mxu0 0
      %2603 = vmatmul.mubr.bf16.gmra.mrb[0].mxu0 %v2106
      %v2604 = vpop.f32.mrb[0].mxu0
      %v2605 = vadd.f32 %v2144, %v2604
      %v2606 = vpop.f32.mrb[0].mxu0
      %v2607 = vpop.f32.mrb[0].mxu0
      %v2608 = vadd.f32 %v2144, %v2607
      %v2609 = vpop.f32.mrb[0].mxu0
      %2610 = vmatprep.mubr.bf16.mxu0 0
      %2611 = vmatmul.mubr.bf16.gmra.mrb[0].mxu0 %v2107
      %v2612 = vpop.f32.mrb[0].mxu0
      %v2613 = vadd.f32 %v2144, %v2612
      %v2614 = vpop.f32.mrb[0].mxu0
      %v2615 = vpop.f32.mrb[0].mxu0
      %v2616 = vadd.f32 %v2144, %v2615
      %v2617 = vpop.f32.mrb[0].mxu0
      %2618 = vmatprep.mubr.bf16.mxu0 0
      %2619 = vmatmul.mubr.bf16.gmra.mrb[0].mxu0 %v2108
      %v2620 = vpop.f32.mrb[0].mxu0
      %v2621 = vadd.f32 %v2144, %v2620
      %v2622 = vpop.f32.mrb[0].mxu0
      %v2623 = vpop.f32.mrb[0].mxu0
      %v2624 = vadd.f32 %v2144, %v2623
      %v2625 = vpop.f32.mrb[0].mxu0
      %2626 = vmatprep.mubr.bf16.mxu0 0
      %2627 = vmatmul.mubr.bf16.gmra.mrb[0].mxu0 %v2109
      %v2628 = vpop.f32.mrb[0].mxu0
      %v2629 = vadd.f32 %v2144, %v2628
      %v2630 = vpop.f32.mrb[0].mxu0
      %v2631 = vpop.f32.mrb[0].mxu0
      %v2632 = vadd.f32 %v2144, %v2631
      %v2633 = vpop.f32.mrb[0].mxu0
      %2634 = vmatprep.mubr.bf16.mxu0 0
      %2635 = vmatmul.mubr.bf16.gmra.mrb[0].mxu0 %v2110
      %v2636 = vpop.f32.mrb[0].mxu0
      %v2637 = vadd.f32 %v2144, %v2636
      %v2638 = vpop.f32.mrb[0].mxu0
      %v2639 = vpop.f32.mrb[0].mxu0
      %v2640 = vadd.f32 %v2144, %v2639
      %v2641 = vpop.f32.mrb[0].mxu0
      %2642 = vmatprep.mubr.bf16.mxu0 0
      %2643 = vmatmul.mubr.bf16.gmra.mrb[0].mxu0 %v2111
      %v2644 = vpop.f32.mrb[0].mxu0
      %v2645 = vadd.f32 %v2144, %v2644
      %v2646 = vpop.f32.mrb[0].mxu0
      %v2647 = vpop.f32.mrb[0].mxu0
      %v2648 = vadd.f32 %v2144, %v2647
      %v2649 = vpop.f32.mrb[0].mxu0
      %2650 = vmatprep.mubr.bf16.mxu0 0
      %2651 = vmatmul.mubr.bf16.gmra.mrb[0].mxu0 %v2112
      %v2652 = vpop.f32.mrb[0].mxu0
      %v2653 = vadd.f32 %v2144, %v2652
      %v2654 = vpop.f32.mrb[0].mxu0
      %v2655 = vpop.f32.mrb[0].mxu0
      %v2656 = vadd.f32 %v2144, %v2655
      %v2657 = vpop.f32.mrb[0].mxu0
      %2658 = vmatprep.mubr.bf16.mxu0 0
      %2659 = vmatmul.mubr.bf16.gmra.mrb[0].mxu0 %v2113
      %v2660 = vpop.f32.mrb[0].mxu0
      %v2661 = vadd.f32 %v2144, %v2660
      %v2662 = vpop.f32.mrb[0].mxu0
      %v2663 = vpop.f32.mrb[0].mxu0
      %v2664 = vadd.f32 %v2144, %v2663
      %v2665 = vpop.f32.mrb[0].mxu0
      %2666 = vmatprep.mubr.bf16.mxu0 0
      %2667 = vmatmul.mubr.bf16.gmra.mrb[0].mxu0 %v2114
      %v2668 = vpop.f32.mrb[0].mxu0
      %v2669 = vadd.f32 %v2144, %v2668
      %v2670 = vpop.f32.mrb[0].mxu0
      %v2671 = vpop.f32.mrb[0].mxu0
      %v2672 = vadd.f32 %v2144, %v2671
      %v2673 = vpop.f32.mrb[0].mxu0
      %2674 = vmatprep.mubr.bf16.mxu0 0
      %2675 = vmatmul.mubr.bf16.gmra.mrb[0].mxu0 %v2115
      %v2676 = vpop.f32.mrb[0].mxu0
      %v2677 = vadd.f32 %v2144, %v2676
      %v2678 = vpop.f32.mrb[0].mxu0
      %v2679 = vpop.f32.mrb[0].mxu0
      %v2680 = vadd.f32 %v2144, %v2679
      %v2681 = vpop.f32.mrb[0].mxu0
      %2682 = vmatprep.mubr.bf16.mxu0 0
      %2683 = vmatmul.mubr.bf16.gmra.mrb[0].mxu0 %v2116
      %v2684 = vpop.f32.mrb[0].mxu0
      %v2685 = vadd.f32 %v2144, %v2684
      %v2686 = vpop.f32.mrb[0].mxu0
      %v2687 = vpop.f32.mrb[0].mxu0
      %v2688 = vadd.f32 %v2144, %v2687
      %v2689 = vpop.f32.mrb[0].mxu0
      %2690 = vmatprep.mubr.bf16.mxu0 0
      %2691 = vmatmul.mubr.bf16.gmra.mrb[0].mxu0 %v2117
      %v2692 = vpop.f32.mrb[0].mxu0
      %v2693 = vadd.f32 %v2144, %v2692
      %v2694 = vpop.f32.mrb[0].mxu0
      %v2695 = vpop.f32.mrb[0].mxu0
      %v2696 = vadd.f32 %v2144, %v2695
      %v2697 = vpop.f32.mrb[0].mxu0
      %2698 = vmatprep.mubr.bf16.mxu0 0
      %2699 = vmatmul.mubr.bf16.gmra.mrb[0].mxu0 %v2118
      %v2700 = vpop.f32.mrb[0].mxu0
      %v2701 = vadd.f32 %v2144, %v2700
      %v2702 = vpop.f32.mrb[0].mxu0
      %v2703 = vpop.f32.mrb[0].mxu0
      %v2704 = vadd.f32 %v2144, %v2703
      %v2705 = vpop.f32.mrb[0].mxu0
      %2706 = vmatprep.mubr.bf16.mxu0 0
      %2707 = vmatmul.mubr.bf16.gmra.mrb[0].mxu0 %v2119
      %v2708 = vpop.f32.mrb[0].mxu0
      %v2709 = vadd.f32 %v2144, %v2708
      %v2710 = vpop.f32.mrb[0].mxu0
      %v2711 = vpop.f32.mrb[0].mxu0
      %v2712 = vadd.f32 %v2144, %v2711
      %v2713 = vpop.f32.mrb[0].mxu0
      %2714 = vmatprep.mubr.bf16.mxu0 0
      %2715 = vmatmul.mubr.bf16.gmra.mrb[0].mxu0 %v2120
      %v2716 = vpop.f32.mrb[0].mxu0
      %v2717 = vadd.f32 %v2144, %v2716
      %v2718 = vpop.f32.mrb[0].mxu0
      %v2719 = vpop.f32.mrb[0].mxu0
      %v2720 = vadd.f32 %v2144, %v2719
      %v2721 = vpop.f32.mrb[0].mxu0
      %2722 = vmatprep.mubr.bf16.mxu0 0
      %2723 = vmatmul.mubr.bf16.gmra.mrb[0].mxu0 %v2121
      %v2724 = vpop.f32.mrb[0].mxu0
      %v2725 = vadd.f32 %v2144, %v2724
      %v2726 = vpop.f32.mrb[0].mxu0
      %v2727 = vpop.f32.mrb[0].mxu0
      %v2728 = vadd.f32 %v2144, %v2727
      %v2729 = vpop.f32.mrb[0].mxu0
      %2730 = vmatprep.mubr.bf16.mxu0 0
      %2731 = vmatmul.mubr.bf16.gmra.mrb[0].mxu0 %v2122
      %v2732 = vpop.f32.mrb[0].mxu0
      %v2733 = vadd.f32 %v2144, %v2732
      %v2734 = vpop.f32.mrb[0].mxu0
      %v2735 = vpop.f32.mrb[0].mxu0
      %v2736 = vadd.f32 %v2144, %v2735
      %v2737 = vpop.f32.mrb[0].mxu0
      %2738 = vdwg.mxu0
      %v2739 = vmax.f32 %v2229, 0.0
      %v2740 = vmax.f32 %v2232, 0.0
      %v2741 = vmax.f32 %v2237, 0.0
      %v2742 = vmax.f32 %v2240, 0.0
      %v2743 = vmax.f32 %v2245, 0.0
      %v2744 = vmax.f32 %v2248, 0.0
      %v2745 = vmax.f32 %v2253, 0.0
      %v2746 = vmax.f32 %v2256, 0.0
      %v2747 = vmax.f32 %v2261, 0.0
      %v2748 = vmax.f32 %v2264, 0.0
      %v2749 = vmax.f32 %v2269, 0.0
      %v2750 = vmax.f32 %v2272, 0.0
      %v2751 = vmax.f32 %v2277, 0.0
      %v2752 = vmax.f32 %v2280, 0.0
      %v2753 = vmax.f32 %v2285, 0.0
      %v2754 = vmax.f32 %v2288, 0.0
      %v2755 = vmax.f32 %v2293, 0.0
      %v2756 = vmax.f32 %v2296, 0.0
      %v2757 = vmax.f32 %v2301, 0.0
      %v2758 = vmax.f32 %v2304, 0.0
      %v2759 = vmax.f32 %v2309, 0.0
      %v2760 = vmax.f32 %v2312, 0.0
      %v2761 = vmax.f32 %v2317, 0.0
      %v2762 = vmax.f32 %v2320, 0.0
      %v2763 = vmax.f32 %v2325, 0.0
      %v2764 = vmax.f32 %v2328, 0.0
      %v2765 = vmax.f32 %v2333, 0.0
      %v2766 = vmax.f32 %v2336, 0.0
      %v2767 = vmax.f32 %v2341, 0.0
      %v2768 = vmax.f32 %v2344, 0.0
      %v2769 = vmax.f32 %v2349, 0.0
      %v2770 = vmax.f32 %v2352, 0.0
      %v2771 = vmax.f32 %v2357, 0.0
      %v2772 = vmax.f32 %v2360, 0.0
      %v2773 = vmax.f32 %v2365, 0.0
      %v2774 = vmax.f32 %v2368, 0.0
      %v2775 = vmax.f32 %v2373, 0.0
      %v2776 = vmax.f32 %v2376, 0.0
      %v2777 = vmax.f32 %v2381, 0.0
      %v2778 = vmax.f32 %v2384, 0.0
      %v2779 = vmax.f32 %v2389, 0.0
      %v2780 = vmax.f32 %v2392, 0.0
      %v2781 = vmax.f32 %v2397, 0.0
      %v2782 = vmax.f32 %v2400, 0.0
      %v2783 = vmax.f32 %v2405, 0.0
      %v2784 = vmax.f32 %v2408, 0.0
      %v2785 = vmax.f32 %v2413, 0.0
      %v2786 = vmax.f32 %v2416, 0.0
      %v2787 = vmax.f32 %v2421, 0.0
      %v2788 = vmax.f32 %v2424, 0.0
      %v2789 = vmax.f32 %v2429, 0.0
      %v2790 = vmax.f32 %v2432, 0.0
      %v2791 = vmax.f32 %v2437, 0.0
      %v2792 = vmax.f32 %v2440, 0.0
      %v2793 = vmax.f32 %v2445, 0.0
      %v2794 = vmax.f32 %v2448, 0.0
      %v2795 = vmax.f32 %v2453, 0.0
      %v2796 = vmax.f32 %v2456, 0.0
      %v2797 = vmax.f32 %v2461, 0.0
      %v2798 = vmax.f32 %v2464, 0.0
      %v2799 = vmax.f32 %v2469, 0.0
      %v2800 = vmax.f32 %v2472, 0.0
      %v2801 = vmax.f32 %v2477, 0.0
      %v2802 = vmax.f32 %v2480, 0.0
      %v2803 = vmax.f32 %v2485, 0.0
      %v2804 = vmax.f32 %v2488, 0.0
      %v2805 = vmax.f32 %v2493, 0.0
      %v2806 = vmax.f32 %v2496, 0.0
      %v2807 = vmax.f32 %v2501, 0.0
      %v2808 = vmax.f32 %v2504, 0.0
      %v2809 = vmax.f32 %v2509, 0.0
      %v2810 = vmax.f32 %v2512, 0.0
      %v2811 = vmax.f32 %v2517, 0.0
      %v2812 = vmax.f32 %v2520, 0.0
      %v2813 = vmax.f32 %v2525, 0.0
      %v2814 = vmax.f32 %v2528, 0.0
      %v2815 = vmax.f32 %v2533, 0.0
      %v2816 = vmax.f32 %v2536, 0.0
      %v2817 = vmax.f32 %v2541, 0.0
      %v2818 = vmax.f32 %v2544, 0.0
      %v2819 = vmax.f32 %v2549, 0.0
      %v2820 = vmax.f32 %v2552, 0.0
      %v2821 = vmax.f32 %v2557, 0.0
      %v2822 = vmax.f32 %v2560, 0.0
      %v2823 = vmax.f32 %v2565, 0.0
      %v2824 = vmax.f32 %v2568, 0.0
      %v2825 = vmax.f32 %v2573, 0.0
      %v2826 = vmax.f32 %v2576, 0.0
      %v2827 = vmax.f32 %v2581, 0.0
      %v2828 = vmax.f32 %v2584, 0.0
      %v2829 = vmax.f32 %v2589, 0.0
      %v2830 = vmax.f32 %v2592, 0.0
      %v2831 = vmax.f32 %v2597, 0.0
      %v2832 = vmax.f32 %v2600, 0.0
      %v2833 = vmax.f32 %v2605, 0.0
      %v2834 = vmax.f32 %v2608, 0.0
      %v2835 = vmax.f32 %v2613, 0.0
      %v2836 = vmax.f32 %v2616, 0.0
      %v2837 = vmax.f32 %v2621, 0.0
      %v2838 = vmax.f32 %v2624, 0.0
      %v2839 = vmax.f32 %v2629, 0.0
      %v2840 = vmax.f32 %v2632, 0.0
      %v2841 = vmax.f32 %v2637, 0.0
      %v2842 = vmax.f32 %v2640, 0.0
      %v2843 = vmax.f32 %v2645, 0.0
      %v2844 = vmax.f32 %v2648, 0.0
      %v2845 = vmax.f32 %v2653, 0.0
      %v2846 = vmax.f32 %v2656, 0.0
      %v2847 = vmax.f32 %v2661, 0.0
      %v2848 = vmax.f32 %v2664, 0.0
      %v2849 = vmax.f32 %v2669, 0.0
      %v2850 = vmax.f32 %v2672, 0.0
      %v2851 = vmax.f32 %v2677, 0.0
      %v2852 = vmax.f32 %v2680, 0.0
      %v2853 = vmax.f32 %v2685, 0.0
      %v2854 = vmax.f32 %v2688, 0.0
      %v2855 = vmax.f32 %v2693, 0.0
      %v2856 = vmax.f32 %v2696, 0.0
      %v2857 = vmax.f32 %v2701, 0.0
      %v2858 = vmax.f32 %v2704, 0.0
      %v2859 = vmax.f32 %v2709, 0.0
      %v2860 = vmax.f32 %v2712, 0.0
      %v2861 = vmax.f32 %v2717, 0.0
      %v2862 = vmax.f32 %v2720, 0.0
      %v2863 = vmax.f32 %v2725, 0.0
      %v2864 = vmax.f32 %v2728, 0.0
      %v2865 = vmax.f32 %v2733, 0.0
      %v2866 = vmax.f32 %v2736, 0.0
      %v2867 = vld [vmem:[%s542] sm:$0xff]
      %v2868 = vld [vmem:[%s542 + $0x8] sm:$0xff]
      %v2869 = vld [vmem:[%s542 + $0x10] sm:$0xff]
      %v2870 = vld [vmem:[%s542 + $0x18] sm:$0xff]
      %v2871 = vld [vmem:[%s542 + $0x20] sm:$0xff]
      %v2872 = vld [vmem:[%s542 + $0x28] sm:$0xff]
      %v2873 = vld [vmem:[%s542 + $0x30] sm:$0xff]
      %v2874 = vld [vmem:[%s542 + $0x38] sm:$0xff]
      %v2875 = vld [vmem:[%s542 + $0x40] sm:$0xff]
      %v2876 = vld [vmem:[%s542 + $0x48] sm:$0xff]
      %v2877 = vld [vmem:[%s542 + $0x50] sm:$0xff]
      %v2878 = vld [vmem:[%s542 + $0x58] sm:$0xff]
      %v2879 = vld [vmem:[%s542 + $0x60] sm:$0xff]
      %v2880 = vld [vmem:[%s542 + $0x68] sm:$0xff]
      %v2881 = vld [vmem:[%s542 + $0x70] sm:$0xff]
      %v2882 = vld [vmem:[%s542 + $0x78] sm:$0xff]
      %v2883 = vld [vmem:[%s542 + $0x80] sm:$0xff]
      %v2884 = vld [vmem:[%s542 + $0x88] sm:$0xff]
      %v2885 = vld [vmem:[%s542 + $0x90] sm:$0xff]
      %v2886 = vld [vmem:[%s542 + $0x98] sm:$0xff]
      %v2887 = vld [vmem:[%s542 + $0xa0] sm:$0xff]
      %v2888 = vld [vmem:[%s542 + $0xa8] sm:$0xff]
      %v2889 = vld [vmem:[%s542 + $0xb0] sm:$0xff]
      %v2890 = vld [vmem:[%s542 + $0xb8] sm:$0xff]
      %v2891 = vld [vmem:[%s542 + $0xc0] sm:$0xff]
      %v2892 = vld [vmem:[%s542 + $0xc8] sm:$0xff]
      %v2893 = vld [vmem:[%s542 + $0xd0] sm:$0xff]
      %v2894 = vld [vmem:[%s542 + $0xd8] sm:$0xff]
      %v2895 = vld [vmem:[%s542 + $0xe0] sm:$0xff]
      %v2896 = vld [vmem:[%s542 + $0xe8] sm:$0xff]
      %v2897 = vld [vmem:[%s542 + $0xf0] sm:$0xff]
      %v2898 = vld [vmem:[%s542 + $0xf8] sm:$0xff]
      %v2899 = vld [vmem:[%s542 + $0x100] sm:$0xff]
      %v2900 = vld [vmem:[%s542 + $0x108] sm:$0xff]
      %v2901 = vld [vmem:[%s542 + $0x110] sm:$0xff]
      %v2902 = vld [vmem:[%s542 + $0x118] sm:$0xff]
      %v2903 = vld [vmem:[%s542 + $0x120] sm:$0xff]
      %v2904 = vld [vmem:[%s542 + $0x128] sm:$0xff]
      %v2905 = vld [vmem:[%s542 + $0x130] sm:$0xff]
      %v2906 = vld [vmem:[%s542 + $0x138] sm:$0xff]
      %v2907 = vld [vmem:[%s542 + $0x140] sm:$0xff]
      %v2908 = vld [vmem:[%s542 + $0x148] sm:$0xff]
      %v2909 = vld [vmem:[%s542 + $0x150] sm:$0xff]
      %v2910 = vld [vmem:[%s542 + $0x158] sm:$0xff]
      %v2911 = vld [vmem:[%s542 + $0x160] sm:$0xff]
      %v2912 = vld [vmem:[%s542 + $0x168] sm:$0xff]
      %v2913 = vld [vmem:[%s542 + $0x170] sm:$0xff]
      %v2914 = vld [vmem:[%s542 + $0x178] sm:$0xff]
      %v2915 = vld [vmem:[%s542 + $0x180] sm:$0xff]
      %v2916 = vld [vmem:[%s542 + $0x188] sm:$0xff]
      %v2917 = vld [vmem:[%s542 + $0x190] sm:$0xff]
      %v2918 = vld [vmem:[%s542 + $0x198] sm:$0xff]
      %v2919 = vld [vmem:[%s542 + $0x1a0] sm:$0xff]
      %v2920 = vld [vmem:[%s542 + $0x1a8] sm:$0xff]
      %v2921 = vld [vmem:[%s542 + $0x1b0] sm:$0xff]
      %v2922 = vld [vmem:[%s542 + $0x1b8] sm:$0xff]
      %v2923 = vld [vmem:[%s542 + $0x1c0] sm:$0xff]
      %v2924 = vld [vmem:[%s542 + $0x1c8] sm:$0xff]
      %v2925 = vld [vmem:[%s542 + $0x1d0] sm:$0xff]
      %v2926 = vld [vmem:[%s542 + $0x1d8] sm:$0xff]
      %v2927 = vld [vmem:[%s542 + $0x1e0] sm:$0xff]
      %v2928 = vld [vmem:[%s542 + $0x1e8] sm:$0xff]
      %v2929 = vld [vmem:[%s542 + $0x1f0] sm:$0xff]
      %v2930 = vld [vmem:[%s542 + $0x1f8] sm:$0xff]
      %v2931 = vld [vmem:[%s542 + $0x200] sm:$0xff]
      %v2932 = vld [vmem:[%s542 + $0x208] sm:$0xff]
      %v2933 = vld [vmem:[%s542 + $0x210] sm:$0xff]
      %v2934 = vld [vmem:[%s542 + $0x218] sm:$0xff]
      %v2935 = vld [vmem:[%s542 + $0x220] sm:$0xff]
      %v2936 = vld [vmem:[%s542 + $0x228] sm:$0xff]
      %v2937 = vld [vmem:[%s542 + $0x230] sm:$0xff]
      %v2938 = vld [vmem:[%s542 + $0x238] sm:$0xff]
      %v2939 = vld [vmem:[%s542 + $0x240] sm:$0xff]
      %v2940 = vld [vmem:[%s542 + $0x248] sm:$0xff]
      %v2941 = vld [vmem:[%s542 + $0x250] sm:$0xff]
      %v2942 = vld [vmem:[%s542 + $0x258] sm:$0xff]
      %v2943 = vld [vmem:[%s542 + $0x260] sm:$0xff]
      %v2944 = vld [vmem:[%s542 + $0x268] sm:$0xff]
      %v2945 = vld [vmem:[%s542 + $0x270] sm:$0xff]
      %v2946 = vld [vmem:[%s542 + $0x278] sm:$0xff]
      %v2947 = vld [vmem:[%s542 + $0x280] sm:$0xff]
      %v2948 = vld [vmem:[%s542 + $0x288] sm:$0xff]
      %v2949 = vld [vmem:[%s542 + $0x290] sm:$0xff]
      %v2950 = vld [vmem:[%s542 + $0x298] sm:$0xff]
      %v2951 = vld [vmem:[%s542 + $0x2a0] sm:$0xff]
      %v2952 = vld [vmem:[%s542 + $0x2a8] sm:$0xff]
      %v2953 = vld [vmem:[%s542 + $0x2b0] sm:$0xff]
      %v2954 = vld [vmem:[%s542 + $0x2b8] sm:$0xff]
      %v2955 = vld [vmem:[%s542 + $0x2c0] sm:$0xff]
      %v2956 = vld [vmem:[%s542 + $0x2c8] sm:$0xff]
      %v2957 = vld [vmem:[%s542 + $0x2d0] sm:$0xff]
      %v2958 = vld [vmem:[%s542 + $0x2d8] sm:$0xff]
      %v2959 = vld [vmem:[%s542 + $0x2e0] sm:$0xff]
      %v2960 = vld [vmem:[%s542 + $0x2e8] sm:$0xff]
      %v2961 = vld [vmem:[%s542 + $0x2f0] sm:$0xff]
      %v2962 = vld [vmem:[%s542 + $0x2f8] sm:$0xff]
      %v2963 = vld [vmem:[%s542 + $0x300] sm:$0xff]
      %v2964 = vld [vmem:[%s542 + $0x308] sm:$0xff]
      %v2965 = vld [vmem:[%s542 + $0x310] sm:$0xff]
      %v2966 = vld [vmem:[%s542 + $0x318] sm:$0xff]
      %v2967 = vld [vmem:[%s542 + $0x320] sm:$0xff]
      %v2968 = vld [vmem:[%s542 + $0x328] sm:$0xff]
      %v2969 = vld [vmem:[%s542 + $0x330] sm:$0xff]
      %v2970 = vld [vmem:[%s542 + $0x338] sm:$0xff]
      %v2971 = vld [vmem:[%s542 + $0x340] sm:$0xff]
      %v2972 = vld [vmem:[%s542 + $0x348] sm:$0xff]
      %v2973 = vld [vmem:[%s542 + $0x350] sm:$0xff]
      %v2974 = vld [vmem:[%s542 + $0x358] sm:$0xff]
      %v2975 = vld [vmem:[%s542 + $0x360] sm:$0xff]
      %v2976 = vld [vmem:[%s542 + $0x368] sm:$0xff]
      %v2977 = vld [vmem:[%s542 + $0x370] sm:$0xff]
      %v2978 = vld [vmem:[%s542 + $0x378] sm:$0xff]
      %v2979 = vld [vmem:[%s542 + $0x380] sm:$0xff]
      %v2980 = vld [vmem:[%s542 + $0x388] sm:$0xff]
      %v2981 = vld [vmem:[%s542 + $0x390] sm:$0xff]
      %v2982 = vld [vmem:[%s542 + $0x398] sm:$0xff]
      %v2983 = vld [vmem:[%s542 + $0x3a0] sm:$0xff]
      %v2984 = vld [vmem:[%s542 + $0x3a8] sm:$0xff]
      %v2985 = vld [vmem:[%s542 + $0x3b0] sm:$0xff]
      %v2986 = vld [vmem:[%s542 + $0x3b8] sm:$0xff]
      %v2987 = vld [vmem:[%s542 + $0x3c0] sm:$0xff]
      %v2988 = vld [vmem:[%s542 + $0x3c8] sm:$0xff]
      %v2989 = vld [vmem:[%s542 + $0x3d0] sm:$0xff]
      %v2990 = vld [vmem:[%s542 + $0x3d8] sm:$0xff]
      %v2991 = vld [vmem:[%s542 + $0x3e0] sm:$0xff]
      %v2992 = vld [vmem:[%s542 + $0x3e8] sm:$0xff]
      %v2993 = vld [vmem:[%s542 + $0x3f0] sm:$0xff]
      %v2994 = vld [vmem:[%s542 + $0x3f8] sm:$0xff]
      %v2995 = vld [vmem:[%s7] sm:$0x1]
      %v2997 = vlaneseq
      %v2998 = vshrl.u32 %v2997, 7
      %v2999 = vsub.s32 0, %v2998
      %v3000 = vrot.slane %v2995, %v2999
      %v3002 = vmul.f32 %v2739, %v3000
      %v3003 = vmul.f32 %v2740, %v3000
      %v3004 = vmul.f32 %v2741, %v3000
      %v3005 = vmul.f32 %v2742, %v3000
      %v3006 = vmul.f32 %v2743, %v3000
      %v3007 = vmul.f32 %v2744, %v3000
      %v3008 = vmul.f32 %v2745, %v3000
      %v3009 = vmul.f32 %v2746, %v3000
      %v3010 = vmul.f32 %v2747, %v3000
      %v3011 = vmul.f32 %v2748, %v3000
      %v3012 = vmul.f32 %v2749, %v3000
      %v3013 = vmul.f32 %v2750, %v3000
      %v3014 = vmul.f32 %v2751, %v3000
      %v3015 = vmul.f32 %v2752, %v3000
      %v3016 = vmul.f32 %v2753, %v3000
      %v3017 = vmul.f32 %v2754, %v3000
      %v3018 = vmul.f32 %v2755, %v3000
      %v3019 = vmul.f32 %v2756, %v3000
      %v3020 = vmul.f32 %v2757, %v3000
      %v3021 = vmul.f32 %v2758, %v3000
      %v3022 = vmul.f32 %v2759, %v3000
      %v3023 = vmul.f32 %v2760, %v3000
      %v3024 = vmul.f32 %v2761, %v3000
      %v3025 = vmul.f32 %v2762, %v3000
      %v3026 = vmul.f32 %v2763, %v3000
      %v3027 = vmul.f32 %v2764, %v3000
      %v3028 = vmul.f32 %v2765, %v3000
      %v3029 = vmul.f32 %v2766, %v3000
      %v3030 = vmul.f32 %v2767, %v3000
      %v3031 = vmul.f32 %v2768, %v3000
      %v3032 = vmul.f32 %v2769, %v3000
      %v3033 = vmul.f32 %v2770, %v3000
      %v3034 = vmul.f32 %v2771, %v3000
      %v3035 = vmul.f32 %v2772, %v3000
      %v3036 = vmul.f32 %v2773, %v3000
      %v3037 = vmul.f32 %v2774, %v3000
      %v3038 = vmul.f32 %v2775, %v3000
      %v3039 = vmul.f32 %v2776, %v3000
      %v3040 = vmul.f32 %v2777, %v3000
      %v3041 = vmul.f32 %v2778, %v3000
      %v3042 = vmul.f32 %v2779, %v3000
      %v3043 = vmul.f32 %v2780, %v3000
      %v3044 = vmul.f32 %v2781, %v3000
      %v3045 = vmul.f32 %v2782, %v3000
      %v3046 = vmul.f32 %v2783, %v3000
      %v3047 = vmul.f32 %v2784, %v3000
      %v3048 = vmul.f32 %v2785, %v3000
      %v3049 = vmul.f32 %v2786, %v3000
      %v3050 = vmul.f32 %v2787, %v3000
      %v3051 = vmul.f32 %v2788, %v3000
      %v3052 = vmul.f32 %v2789, %v3000
      %v3053 = vmul.f32 %v2790, %v3000
      %v3054 = vmul.f32 %v2791, %v3000
      %v3055 = vmul.f32 %v2792, %v3000
      %v3056 = vmul.f32 %v2793, %v3000
      %v3057 = vmul.f32 %v2794, %v3000
      %v3058 = vmul.f32 %v2795, %v3000
      %v3059 = vmul.f32 %v2796, %v3000
      %v3060 = vmul.f32 %v2797, %v3000
      %v3061 = vmul.f32 %v2798, %v3000
      %v3062 = vmul.f32 %v2799, %v3000
      %v3063 = vmul.f32 %v2800, %v3000
      %v3064 = vmul.f32 %v2801, %v3000
      %v3065 = vmul.f32 %v2802, %v3000
      %v3066 = vmul.f32 %v2803, %v3000
      %v3067 = vmul.f32 %v2804, %v3000
      %v3068 = vmul.f32 %v2805, %v3000
      %v3069 = vmul.f32 %v2806, %v3000
      %v3070 = vmul.f32 %v2807, %v3000
      %v3071 = vmul.f32 %v2808, %v3000
      %v3072 = vmul.f32 %v2809, %v3000
      %v3073 = vmul.f32 %v2810, %v3000
      %v3074 = vmul.f32 %v2811, %v3000
      %v3075 = vmul.f32 %v2812, %v3000
      %v3076 = vmul.f32 %v2813, %v3000
      %v3077 = vmul.f32 %v2814, %v3000
      %v3078 = vmul.f32 %v2815, %v3000
      %v3079 = vmul.f32 %v2816, %v3000
      %v3080 = vmul.f32 %v2817, %v3000
      %v3081 = vmul.f32 %v2818, %v3000
      %v3082 = vmul.f32 %v2819, %v3000
      %v3083 = vmul.f32 %v2820, %v3000
      %v3084 = vmul.f32 %v2821, %v3000
      %v3085 = vmul.f32 %v2822, %v3000
      %v3086 = vmul.f32 %v2823, %v3000
      %v3087 = vmul.f32 %v2824, %v3000
      %v3088 = vmul.f32 %v2825, %v3000
      %v3089 = vmul.f32 %v2826, %v3000
      %v3090 = vmul.f32 %v2827, %v3000
      %v3091 = vmul.f32 %v2828, %v3000
      %v3092 = vmul.f32 %v2829, %v3000
      %v3093 = vmul.f32 %v2830, %v3000
      %v3094 = vmul.f32 %v2831, %v3000
      %v3095 = vmul.f32 %v2832, %v3000
      %v3096 = vmul.f32 %v2833, %v3000
      %v3097 = vmul.f32 %v2834, %v3000
      %v3098 = vmul.f32 %v2835, %v3000
      %v3099 = vmul.f32 %v2836, %v3000
      %v3100 = vmul.f32 %v2837, %v3000
      %v3101 = vmul.f32 %v2838, %v3000
      %v3102 = vmul.f32 %v2839, %v3000
      %v3103 = vmul.f32 %v2840, %v3000
      %v3104 = vmul.f32 %v2841, %v3000
      %v3105 = vmul.f32 %v2842, %v3000
      %v3106 = vmul.f32 %v2843, %v3000
      %v3107 = vmul.f32 %v2844, %v3000
      %v3108 = vmul.f32 %v2845, %v3000
      %v3109 = vmul.f32 %v2846, %v3000
      %v3110 = vmul.f32 %v2847, %v3000
      %v3111 = vmul.f32 %v2848, %v3000
      %v3112 = vmul.f32 %v2849, %v3000
      %v3113 = vmul.f32 %v2850, %v3000
      %v3114 = vmul.f32 %v2851, %v3000
      %v3115 = vmul.f32 %v2852, %v3000
      %v3116 = vmul.f32 %v2853, %v3000
      %v3117 = vmul.f32 %v2854, %v3000
      %v3118 = vmul.f32 %v2855, %v3000
      %v3119 = vmul.f32 %v2856, %v3000
      %v3120 = vmul.f32 %v2857, %v3000
      %v3121 = vmul.f32 %v2858, %v3000
      %v3122 = vmul.f32 %v2859, %v3000
      %v3123 = vmul.f32 %v2860, %v3000
      %v3124 = vmul.f32 %v2861, %v3000
      %v3125 = vmul.f32 %v2862, %v3000
      %v3126 = vmul.f32 %v2863, %v3000
      %v3127 = vmul.f32 %v2864, %v3000
      %v3128 = vmul.f32 %v2865, %v3000
      %v3129 = vmul.f32 %v2866, %v3000
      %3130 = vadd.xlane.f32.xlu0 %v3002
      %v3131 = vpop.xlane.xlu0 %3130
      %3132 = vadd.xlane.f32.xlu0 %v3003
      %v3133 = vpop.xlane.xlu0 %3132
      %3134 = vadd.xlane.f32.xlu0 %v3004
      %v3135 = vpop.xlane.xlu0 %3134
      %3136 = vadd.xlane.f32.xlu0 %v3005
      %v3137 = vpop.xlane.xlu0 %3136
      %3138 = vadd.xlane.f32.xlu0 %v3006
      %v3139 = vpop.xlane.xlu0 %3138
      %3140 = vadd.xlane.f32.xlu0 %v3007
      %v3141 = vpop.xlane.xlu0 %3140
      %3142 = vadd.xlane.f32.xlu0 %v3008
      %v3143 = vpop.xlane.xlu0 %3142
      %3144 = vadd.xlane.f32.xlu0 %v3009
      %v3145 = vpop.xlane.xlu0 %3144
      %3146 = vadd.xlane.f32.xlu0 %v3010
      %v3147 = vpop.xlane.xlu0 %3146
      %3148 = vadd.xlane.f32.xlu0 %v3011
      %v3149 = vpop.xlane.xlu0 %3148
      %3150 = vadd.xlane.f32.xlu0 %v3012
      %v3151 = vpop.xlane.xlu0 %3150
      %3152 = vadd.xlane.f32.xlu0 %v3013
      %v3153 = vpop.xlane.xlu0 %3152
      %3154 = vadd.xlane.f32.xlu0 %v3014
      %v3155 = vpop.xlane.xlu0 %3154
      %3156 = vadd.xlane.f32.xlu0 %v3015
      %v3157 = vpop.xlane.xlu0 %3156
      %3158 = vadd.xlane.f32.xlu0 %v3016
      %v3159 = vpop.xlane.xlu0 %3158
      %3160 = vadd.xlane.f32.xlu0 %v3017
      %v3161 = vpop.xlane.xlu0 %3160
      %3162 = vadd.xlane.f32.xlu0 %v3018
      %v3163 = vpop.xlane.xlu0 %3162
      %3164 = vadd.xlane.f32.xlu0 %v3019
      %v3165 = vpop.xlane.xlu0 %3164
      %3166 = vadd.xlane.f32.xlu0 %v3020
      %v3167 = vpop.xlane.xlu0 %3166
      %3168 = vadd.xlane.f32.xlu0 %v3021
      %v3169 = vpop.xlane.xlu0 %3168
      %3170 = vadd.xlane.f32.xlu0 %v3022
      %v3171 = vpop.xlane.xlu0 %3170
      %3172 = vadd.xlane.f32.xlu0 %v3023
      %v3173 = vpop.xlane.xlu0 %3172
      %3174 = vadd.xlane.f32.xlu0 %v3024
      %v3175 = vpop.xlane.xlu0 %3174
      %3176 = vadd.xlane.f32.xlu0 %v3025
      %v3177 = vpop.xlane.xlu0 %3176
      %3178 = vadd.xlane.f32.xlu0 %v3026
      %v3179 = vpop.xlane.xlu0 %3178
      %3180 = vadd.xlane.f32.xlu0 %v3027
      %v3181 = vpop.xlane.xlu0 %3180
      %3182 = vadd.xlane.f32.xlu0 %v3028
      %v3183 = vpop.xlane.xlu0 %3182
      %3184 = vadd.xlane.f32.xlu0 %v3029
      %v3185 = vpop.xlane.xlu0 %3184
      %3186 = vadd.xlane.f32.xlu0 %v3030
      %v3187 = vpop.xlane.xlu0 %3186
      %3188 = vadd.xlane.f32.xlu0 %v3031
      %v3189 = vpop.xlane.xlu0 %3188
      %3190 = vadd.xlane.f32.xlu0 %v3032
      %v3191 = vpop.xlane.xlu0 %3190
      %3192 = vadd.xlane.f32.xlu0 %v3033
      %v3193 = vpop.xlane.xlu0 %3192
      %3194 = vadd.xlane.f32.xlu0 %v3034
      %v3195 = vpop.xlane.xlu0 %3194
      %3196 = vadd.xlane.f32.xlu0 %v3035
      %v3197 = vpop.xlane.xlu0 %3196
      %3198 = vadd.xlane.f32.xlu0 %v3036
      %v3199 = vpop.xlane.xlu0 %3198
      %3200 = vadd.xlane.f32.xlu0 %v3037
      %v3201 = vpop.xlane.xlu0 %3200
      %3202 = vadd.xlane.f32.xlu0 %v3038
      %v3203 = vpop.xlane.xlu0 %3202
      %3204 = vadd.xlane.f32.xlu0 %v3039
      %v3205 = vpop.xlane.xlu0 %3204
      %3206 = vadd.xlane.f32.xlu0 %v3040
      %v3207 = vpop.xlane.xlu0 %3206
      %3208 = vadd.xlane.f32.xlu0 %v3041
      %v3209 = vpop.xlane.xlu0 %3208
      %3210 = vadd.xlane.f32.xlu0 %v3042
      %v3211 = vpop.xlane.xlu0 %3210
      %3212 = vadd.xlane.f32.xlu0 %v3043
      %v3213 = vpop.xlane.xlu0 %3212
      %3214 = vadd.xlane.f32.xlu0 %v3044
      %v3215 = vpop.xlane.xlu0 %3214
      %3216 = vadd.xlane.f32.xlu0 %v3045
      %v3217 = vpop.xlane.xlu0 %3216
      %3218 = vadd.xlane.f32.xlu0 %v3046
      %v3219 = vpop.xlane.xlu0 %3218
      %3220 = vadd.xlane.f32.xlu0 %v3047
      %v3221 = vpop.xlane.xlu0 %3220
      %3222 = vadd.xlane.f32.xlu0 %v3048
      %v3223 = vpop.xlane.xlu0 %3222
      %3224 = vadd.xlane.f32.xlu0 %v3049
      %v3225 = vpop.xlane.xlu0 %3224
      %3226 = vadd.xlane.f32.xlu0 %v3050
      %v3227 = vpop.xlane.xlu0 %3226
      %3228 = vadd.xlane.f32.xlu0 %v3051
      %v3229 = vpop.xlane.xlu0 %3228
      %3230 = vadd.xlane.f32.xlu0 %v3052
      %v3231 = vpop.xlane.xlu0 %3230
      %3232 = vadd.xlane.f32.xlu0 %v3053
      %v3233 = vpop.xlane.xlu0 %3232
      %3234 = vadd.xlane.f32.xlu0 %v3054
      %v3235 = vpop.xlane.xlu0 %3234
      %3236 = vadd.xlane.f32.xlu0 %v3055
      %v3237 = vpop.xlane.xlu0 %3236
      %3238 = vadd.xlane.f32.xlu0 %v3056
      %v3239 = vpop.xlane.xlu0 %3238
      %3240 = vadd.xlane.f32.xlu0 %v3057
      %v3241 = vpop.xlane.xlu0 %3240
      %3242 = vadd.xlane.f32.xlu0 %v3058
      %v3243 = vpop.xlane.xlu0 %3242
      %3244 = vadd.xlane.f32.xlu0 %v3059
      %v3245 = vpop.xlane.xlu0 %3244
      %3246 = vadd.xlane.f32.xlu0 %v3060
      %v3247 = vpop.xlane.xlu0 %3246
      %3248 = vadd.xlane.f32.xlu0 %v3061
      %v3249 = vpop.xlane.xlu0 %3248
      %3250 = vadd.xlane.f32.xlu0 %v3062
      %v3251 = vpop.xlane.xlu0 %3250
      %3252 = vadd.xlane.f32.xlu0 %v3063
      %v3253 = vpop.xlane.xlu0 %3252
      %3254 = vadd.xlane.f32.xlu0 %v3064
      %v3255 = vpop.xlane.xlu0 %3254
      %3256 = vadd.xlane.f32.xlu0 %v3065
      %v3257 = vpop.xlane.xlu0 %3256
      %3258 = vadd.xlane.f32.xlu0 %v3066
      %v3259 = vpop.xlane.xlu0 %3258
      %3260 = vadd.xlane.f32.xlu0 %v3067
      %v3261 = vpop.xlane.xlu0 %3260
      %3262 = vadd.xlane.f32.xlu0 %v3068
      %v3263 = vpop.xlane.xlu0 %3262
      %3264 = vadd.xlane.f32.xlu0 %v3069
      %v3265 = vpop.xlane.xlu0 %3264
      %3266 = vadd.xlane.f32.xlu0 %v3070
      %v3267 = vpop.xlane.xlu0 %3266
      %3268 = vadd.xlane.f32.xlu0 %v3071
      %v3269 = vpop.xlane.xlu0 %3268
      %3270 = vadd.xlane.f32.xlu0 %v3072
      %v3271 = vpop.xlane.xlu0 %3270
      %3272 = vadd.xlane.f32.xlu0 %v3073
      %v3273 = vpop.xlane.xlu0 %3272
      %3274 = vadd.xlane.f32.xlu0 %v3074
      %v3275 = vpop.xlane.xlu0 %3274
      %3276 = vadd.xlane.f32.xlu0 %v3075
      %v3277 = vpop.xlane.xlu0 %3276
      %3278 = vadd.xlane.f32.xlu0 %v3076
      %v3279 = vpop.xlane.xlu0 %3278
      %3280 = vadd.xlane.f32.xlu0 %v3077
      %v3281 = vpop.xlane.xlu0 %3280
      %3282 = vadd.xlane.f32.xlu0 %v3078
      %v3283 = vpop.xlane.xlu0 %3282
      %3284 = vadd.xlane.f32.xlu0 %v3079
      %v3285 = vpop.xlane.xlu0 %3284
      %3286 = vadd.xlane.f32.xlu0 %v3080
      %v3287 = vpop.xlane.xlu0 %3286
      %3288 = vadd.xlane.f32.xlu0 %v3081
      %v3289 = vpop.xlane.xlu0 %3288
      %3290 = vadd.xlane.f32.xlu0 %v3082
      %v3291 = vpop.xlane.xlu0 %3290
      %3292 = vadd.xlane.f32.xlu0 %v3083
      %v3293 = vpop.xlane.xlu0 %3292
      %3294 = vadd.xlane.f32.xlu0 %v3084
      %v3295 = vpop.xlane.xlu0 %3294
      %3296 = vadd.xlane.f32.xlu0 %v3085
      %v3297 = vpop.xlane.xlu0 %3296
      %3298 = vadd.xlane.f32.xlu0 %v3086
      %v3299 = vpop.xlane.xlu0 %3298
      %3300 = vadd.xlane.f32.xlu0 %v3087
      %v3301 = vpop.xlane.xlu0 %3300
      %3302 = vadd.xlane.f32.xlu0 %v3088
      %v3303 = vpop.xlane.xlu0 %3302
      %3304 = vadd.xlane.f32.xlu0 %v3089
      %v3305 = vpop.xlane.xlu0 %3304
      %3306 = vadd.xlane.f32.xlu0 %v3090
      %v3307 = vpop.xlane.xlu0 %3306
      %3308 = vadd.xlane.f32.xlu0 %v3091
      %v3309 = vpop.xlane.xlu0 %3308
      %3310 = vadd.xlane.f32.xlu0 %v3092
      %v3311 = vpop.xlane.xlu0 %3310
      %3312 = vadd.xlane.f32.xlu0 %v3093
      %v3313 = vpop.xlane.xlu0 %3312
      %3314 = vadd.xlane.f32.xlu0 %v3094
      %v3315 = vpop.xlane.xlu0 %3314
      %3316 = vadd.xlane.f32.xlu0 %v3095
      %v3317 = vpop.xlane.xlu0 %3316
      %3318 = vadd.xlane.f32.xlu0 %v3096
      %v3319 = vpop.xlane.xlu0 %3318
      %3320 = vadd.xlane.f32.xlu0 %v3097
      %v3321 = vpop.xlane.xlu0 %3320
      %3322 = vadd.xlane.f32.xlu0 %v3098
      %v3323 = vpop.xlane.xlu0 %3322
      %3324 = vadd.xlane.f32.xlu0 %v3099
      %v3325 = vpop.xlane.xlu0 %3324
      %3326 = vadd.xlane.f32.xlu0 %v3100
      %v3327 = vpop.xlane.xlu0 %3326
      %3328 = vadd.xlane.f32.xlu0 %v3101
      %v3329 = vpop.xlane.xlu0 %3328
      %3330 = vadd.xlane.f32.xlu0 %v3102
      %v3331 = vpop.xlane.xlu0 %3330
      %3332 = vadd.xlane.f32.xlu0 %v3103
      %v3333 = vpop.xlane.xlu0 %3332
      %3334 = vadd.xlane.f32.xlu0 %v3104
      %v3335 = vpop.xlane.xlu0 %3334
      %3336 = vadd.xlane.f32.xlu0 %v3105
      %v3337 = vpop.xlane.xlu0 %3336
      %3338 = vadd.xlane.f32.xlu0 %v3106
      %v3339 = vpop.xlane.xlu0 %3338
      %3340 = vadd.xlane.f32.xlu0 %v3107
      %v3341 = vpop.xlane.xlu0 %3340
      %3342 = vadd.xlane.f32.xlu0 %v3108
      %v3343 = vpop.xlane.xlu0 %3342
      %3344 = vadd.xlane.f32.xlu0 %v3109
      %v3345 = vpop.xlane.xlu0 %3344
      %3346 = vadd.xlane.f32.xlu0 %v3110
      %v3347 = vpop.xlane.xlu0 %3346
      %3348 = vadd.xlane.f32.xlu0 %v3111
      %v3349 = vpop.xlane.xlu0 %3348
      %3350 = vadd.xlane.f32.xlu0 %v3112
      %v3351 = vpop.xlane.xlu0 %3350
      %3352 = vadd.xlane.f32.xlu0 %v3113
      %v3353 = vpop.xlane.xlu0 %3352
      %3354 = vadd.xlane.f32.xlu0 %v3114
      %v3355 = vpop.xlane.xlu0 %3354
      %3356 = vadd.xlane.f32.xlu0 %v3115
      %v3357 = vpop.xlane.xlu0 %3356
      %3358 = vadd.xlane.f32.xlu0 %v3116
      %v3359 = vpop.xlane.xlu0 %3358
      %3360 = vadd.xlane.f32.xlu0 %v3117
      %v3361 = vpop.xlane.xlu0 %3360
      %3362 = vadd.xlane.f32.xlu0 %v3118
      %v3363 = vpop.xlane.xlu0 %3362
      %3364 = vadd.xlane.f32.xlu0 %v3119
      %v3365 = vpop.xlane.xlu0 %3364
      %3366 = vadd.xlane.f32.xlu0 %v3120
      %v3367 = vpop.xlane.xlu0 %3366
      %3368 = vadd.xlane.f32.xlu0 %v3121
      %v3369 = vpop.xlane.xlu0 %3368
      %3370 = vadd.xlane.f32.xlu0 %v3122
      %v3371 = vpop.xlane.xlu0 %3370
      %3372 = vadd.xlane.f32.xlu0 %v3123
      %v3373 = vpop.xlane.xlu0 %3372
      %3374 = vadd.xlane.f32.xlu0 %v3124
      %v3375 = vpop.xlane.xlu0 %3374
      %3376 = vadd.xlane.f32.xlu0 %v3125
      %v3377 = vpop.xlane.xlu0 %3376
      %3378 = vadd.xlane.f32.xlu0 %v3126
      %v3379 = vpop.xlane.xlu0 %3378
      %3380 = vadd.xlane.f32.xlu0 %v3127
      %v3381 = vpop.xlane.xlu0 %3380
      %3382 = vadd.xlane.f32.xlu0 %v3128
      %v3383 = vpop.xlane.xlu0 %3382
      %3384 = vadd.xlane.f32.xlu0 %v3129
      %v3385 = vpop.xlane.xlu0 %3384
      %v3386 = vld [vmem:[#allocation2] sm:$0x1]
      %v3388 = vlaneseq
      %v3389 = vshrl.u32 %v3388, 7
      %v3390 = vsub.s32 0, %v3389
      %v3391 = vrot.slane %v3386, %v3390
      %v3393 = vadd.f32 %v3131, %v3391
      %v3394 = vadd.f32 %v3133, %v3391
      %v3395 = vadd.f32 %v3135, %v3391
      %v3396 = vadd.f32 %v3137, %v3391
      %v3397 = vadd.f32 %v3139, %v3391
      %v3398 = vadd.f32 %v3141, %v3391
      %v3399 = vadd.f32 %v3143, %v3391
      %v3400 = vadd.f32 %v3145, %v3391
      %v3401 = vadd.f32 %v3147, %v3391
      %v3402 = vadd.f32 %v3149, %v3391
      %v3403 = vadd.f32 %v3151, %v3391
      %v3404 = vadd.f32 %v3153, %v3391
      %v3405 = vadd.f32 %v3155, %v3391
      %v3406 = vadd.f32 %v3157, %v3391
      %v3407 = vadd.f32 %v3159, %v3391
      %v3408 = vadd.f32 %v3161, %v3391
      %v3409 = vadd.f32 %v3163, %v3391
      %v3410 = vadd.f32 %v3165, %v3391
      %v3411 = vadd.f32 %v3167, %v3391
      %v3412 = vadd.f32 %v3169, %v3391
      %v3413 = vadd.f32 %v3171, %v3391
      %v3414 = vadd.f32 %v3173, %v3391
      %v3415 = vadd.f32 %v3175, %v3391
      %v3416 = vadd.f32 %v3177, %v3391
      %v3417 = vadd.f32 %v3179, %v3391
      %v3418 = vadd.f32 %v3181, %v3391
      %v3419 = vadd.f32 %v3183, %v3391
      %v3420 = vadd.f32 %v3185, %v3391
      %v3421 = vadd.f32 %v3187, %v3391
      %v3422 = vadd.f32 %v3189, %v3391
      %v3423 = vadd.f32 %v3191, %v3391
      %v3424 = vadd.f32 %v3193, %v3391
      %v3425 = vadd.f32 %v3195, %v3391
      %v3426 = vadd.f32 %v3197, %v3391
      %v3427 = vadd.f32 %v3199, %v3391
      %v3428 = vadd.f32 %v3201, %v3391
      %v3429 = vadd.f32 %v3203, %v3391
      %v3430 = vadd.f32 %v3205, %v3391
      %v3431 = vadd.f32 %v3207, %v3391
      %v3432 = vadd.f32 %v3209, %v3391
      %v3433 = vadd.f32 %v3211, %v3391
      %v3434 = vadd.f32 %v3213, %v3391
      %v3435 = vadd.f32 %v3215, %v3391
      %v3436 = vadd.f32 %v3217, %v3391
      %v3437 = vadd.f32 %v3219, %v3391
      %v3438 = vadd.f32 %v3221, %v3391
      %v3439 = vadd.f32 %v3223, %v3391
      %v3440 = vadd.f32 %v3225, %v3391
      %v3441 = vadd.f32 %v3227, %v3391
      %v3442 = vadd.f32 %v3229, %v3391
      %v3443 = vadd.f32 %v3231, %v3391
      %v3444 = vadd.f32 %v3233, %v3391
      %v3445 = vadd.f32 %v3235, %v3391
      %v3446 = vadd.f32 %v3237, %v3391
      %v3447 = vadd.f32 %v3239, %v3391
      %v3448 = vadd.f32 %v3241, %v3391
      %v3449 = vadd.f32 %v3243, %v3391
      %v3450 = vadd.f32 %v3245, %v3391
      %v3451 = vadd.f32 %v3247, %v3391
      %v3452 = vadd.f32 %v3249, %v3391
      %v3453 = vadd.f32 %v3251, %v3391
      %v3454 = vadd.f32 %v3253, %v3391
      %v3455 = vadd.f32 %v3255, %v3391
      %v3456 = vadd.f32 %v3257, %v3391
      %v3457 = vadd.f32 %v3259, %v3391
      %v3458 = vadd.f32 %v3261, %v3391
      %v3459 = vadd.f32 %v3263, %v3391
      %v3460 = vadd.f32 %v3265, %v3391
      %v3461 = vadd.f32 %v3267, %v3391
      %v3462 = vadd.f32 %v3269, %v3391
      %v3463 = vadd.f32 %v3271, %v3391
      %v3464 = vadd.f32 %v3273, %v3391
      %v3465 = vadd.f32 %v3275, %v3391
      %v3466 = vadd.f32 %v3277, %v3391
      %v3467 = vadd.f32 %v3279, %v3391
      %v3468 = vadd.f32 %v3281, %v3391
      %v3469 = vadd.f32 %v3283, %v3391
      %v3470 = vadd.f32 %v3285, %v3391
      %v3471 = vadd.f32 %v3287, %v3391
      %v3472 = vadd.f32 %v3289, %v3391
      %v3473 = vadd.f32 %v3291, %v3391
      %v3474 = vadd.f32 %v3293, %v3391
      %v3475 = vadd.f32 %v3295, %v3391
      %v3476 = vadd.f32 %v3297, %v3391
      %v3477 = vadd.f32 %v3299, %v3391
      %v3478 = vadd.f32 %v3301, %v3391
      %v3479 = vadd.f32 %v3303, %v3391
      %v3480 = vadd.f32 %v3305, %v3391
      %v3481 = vadd.f32 %v3307, %v3391
      %v3482 = vadd.f32 %v3309, %v3391
      %v3483 = vadd.f32 %v3311, %v3391
      %v3484 = vadd.f32 %v3313, %v3391
      %v3485 = vadd.f32 %v3315, %v3391
      %v3486 = vadd.f32 %v3317, %v3391
      %v3487 = vadd.f32 %v3319, %v3391
      %v3488 = vadd.f32 %v3321, %v3391
      %v3489 = vadd.f32 %v3323, %v3391
      %v3490 = vadd.f32 %v3325, %v3391
      %v3491 = vadd.f32 %v3327, %v3391
      %v3492 = vadd.f32 %v3329, %v3391
      %v3493 = vadd.f32 %v3331, %v3391
      %v3494 = vadd.f32 %v3333, %v3391
      %v3495 = vadd.f32 %v3335, %v3391
      %v3496 = vadd.f32 %v3337, %v3391
      %v3497 = vadd.f32 %v3339, %v3391
      %v3498 = vadd.f32 %v3341, %v3391
      %v3499 = vadd.f32 %v3343, %v3391
      %v3500 = vadd.f32 %v3345, %v3391
      %v3501 = vadd.f32 %v3347, %v3391
      %v3502 = vadd.f32 %v3349, %v3391
      %v3503 = vadd.f32 %v3351, %v3391
      %v3504 = vadd.f32 %v3353, %v3391
      %v3505 = vadd.f32 %v3355, %v3391
      %v3506 = vadd.f32 %v3357, %v3391
      %v3507 = vadd.f32 %v3359, %v3391
      %v3508 = vadd.f32 %v3361, %v3391
      %v3509 = vadd.f32 %v3363, %v3391
      %v3510 = vadd.f32 %v3365, %v3391
      %v3511 = vadd.f32 %v3367, %v3391
      %v3512 = vadd.f32 %v3369, %v3391
      %v3513 = vadd.f32 %v3371, %v3391
      %v3514 = vadd.f32 %v3373, %v3391
      %v3515 = vadd.f32 %v3375, %v3391
      %v3516 = vadd.f32 %v3377, %v3391
      %v3517 = vadd.f32 %v3379, %v3391
      %v3518 = vadd.f32 %v3381, %v3391
      %v3519 = vadd.f32 %v3383, %v3391
      %v3520 = vadd.f32 %v3385, %v3391
      %v3521 = vmul.f32 %v3393, %v2867
      %v3522 = vmul.f32 %v3394, %v2868
      %v3523 = vmul.f32 %v3395, %v2869
      %v3524 = vmul.f32 %v3396, %v2870
      %v3525 = vmul.f32 %v3397, %v2871
      %v3526 = vmul.f32 %v3398, %v2872
      %v3527 = vmul.f32 %v3399, %v2873
      %v3528 = vmul.f32 %v3400, %v2874
      %v3529 = vmul.f32 %v3401, %v2875
      %v3530 = vmul.f32 %v3402, %v2876
      %v3531 = vmul.f32 %v3403, %v2877
      %v3532 = vmul.f32 %v3404, %v2878
      %v3533 = vmul.f32 %v3405, %v2879
      %v3534 = vmul.f32 %v3406, %v2880
      %v3535 = vmul.f32 %v3407, %v2881
      %v3536 = vmul.f32 %v3408, %v2882
      %v3537 = vmul.f32 %v3409, %v2883
      %v3538 = vmul.f32 %v3410, %v2884
      %v3539 = vmul.f32 %v3411, %v2885
      %v3540 = vmul.f32 %v3412, %v2886
      %v3541 = vmul.f32 %v3413, %v2887
      %v3542 = vmul.f32 %v3414, %v2888
      %v3543 = vmul.f32 %v3415, %v2889
      %v3544 = vmul.f32 %v3416, %v2890
      %v3545 = vmul.f32 %v3417, %v2891
      %v3546 = vmul.f32 %v3418, %v2892
      %v3547 = vmul.f32 %v3419, %v2893
      %v3548 = vmul.f32 %v3420, %v2894
      %v3549 = vmul.f32 %v3421, %v2895
      %v3550 = vmul.f32 %v3422, %v2896
      %v3551 = vmul.f32 %v3423, %v2897
      %v3552 = vmul.f32 %v3424, %v2898
      %v3553 = vmul.f32 %v3425, %v2899
      %v3554 = vmul.f32 %v3426, %v2900
      %v3555 = vmul.f32 %v3427, %v2901
      %v3556 = vmul.f32 %v3428, %v2902
      %v3557 = vmul.f32 %v3429, %v2903
      %v3558 = vmul.f32 %v3430, %v2904
      %v3559 = vmul.f32 %v3431, %v2905
      %v3560 = vmul.f32 %v3432, %v2906
      %v3561 = vmul.f32 %v3433, %v2907
      %v3562 = vmul.f32 %v3434, %v2908
      %v3563 = vmul.f32 %v3435, %v2909
      %v3564 = vmul.f32 %v3436, %v2910
      %v3565 = vmul.f32 %v3437, %v2911
      %v3566 = vmul.f32 %v3438, %v2912
      %v3567 = vmul.f32 %v3439, %v2913
      %v3568 = vmul.f32 %v3440, %v2914
      %v3569 = vmul.f32 %v3441, %v2915
      %v3570 = vmul.f32 %v3442, %v2916
      %v3571 = vmul.f32 %v3443, %v2917
      %v3572 = vmul.f32 %v3444, %v2918
      %v3573 = vmul.f32 %v3445, %v2919
      %v3574 = vmul.f32 %v3446, %v2920
      %v3575 = vmul.f32 %v3447, %v2921
      %v3576 = vmul.f32 %v3448, %v2922
      %v3577 = vmul.f32 %v3449, %v2923
      %v3578 = vmul.f32 %v3450, %v2924
      %v3579 = vmul.f32 %v3451, %v2925
      %v3580 = vmul.f32 %v3452, %v2926
      %v3581 = vmul.f32 %v3453, %v2927
      %v3582 = vmul.f32 %v3454, %v2928
      %v3583 = vmul.f32 %v3455, %v2929
      %v3584 = vmul.f32 %v3456, %v2930
      %v3585 = vmul.f32 %v3457, %v2931
      %v3586 = vmul.f32 %v3458, %v2932
      %v3587 = vmul.f32 %v3459, %v2933
      %v3588 = vmul.f32 %v3460, %v2934
      %v3589 = vmul.f32 %v3461, %v2935
      %v3590 = vmul.f32 %v3462, %v2936
      %v3591 = vmul.f32 %v3463, %v2937
      %v3592 = vmul.f32 %v3464, %v2938
      %v3593 = vmul.f32 %v3465, %v2939
      %v3594 = vmul.f32 %v3466, %v2940
      %v3595 = vmul.f32 %v3467, %v2941
      %v3596 = vmul.f32 %v3468, %v2942
      %v3597 = vmul.f32 %v3469, %v2943
      %v3598 = vmul.f32 %v3470, %v2944
      %v3599 = vmul.f32 %v3471, %v2945
      %v3600 = vmul.f32 %v3472, %v2946
      %v3601 = vmul.f32 %v3473, %v2947
      %v3602 = vmul.f32 %v3474, %v2948
      %v3603 = vmul.f32 %v3475, %v2949
      %v3604 = vmul.f32 %v3476, %v2950
      %v3605 = vmul.f32 %v3477, %v2951
      %v3606 = vmul.f32 %v3478, %v2952
      %v3607 = vmul.f32 %v3479, %v2953
      %v3608 = vmul.f32 %v3480, %v2954
      %v3609 = vmul.f32 %v3481, %v2955
      %v3610 = vmul.f32 %v3482, %v2956
      %v3611 = vmul.f32 %v3483, %v2957
      %v3612 = vmul.f32 %v3484, %v2958
      %v3613 = vmul.f32 %v3485, %v2959
      %v3614 = vmul.f32 %v3486, %v2960
      %v3615 = vmul.f32 %v3487, %v2961
      %v3616 = vmul.f32 %v3488, %v2962
      %v3617 = vmul.f32 %v3489, %v2963
      %v3618 = vmul.f32 %v3490, %v2964
      %v3619 = vmul.f32 %v3491, %v2965
      %v3620 = vmul.f32 %v3492, %v2966
      %v3621 = vmul.f32 %v3493, %v2967
      %v3622 = vmul.f32 %v3494, %v2968
      %v3623 = vmul.f32 %v3495, %v2969
      %v3624 = vmul.f32 %v3496, %v2970
      %v3625 = vmul.f32 %v3497, %v2971
      %v3626 = vmul.f32 %v3498, %v2972
      %v3627 = vmul.f32 %v3499, %v2973
      %v3628 = vmul.f32 %v3500, %v2974
      %v3629 = vmul.f32 %v3501, %v2975
      %v3630 = vmul.f32 %v3502, %v2976
      %v3631 = vmul.f32 %v3503, %v2977
      %v3632 = vmul.f32 %v3504, %v2978
      %v3633 = vmul.f32 %v3505, %v2979
      %v3634 = vmul.f32 %v3506, %v2980
      %v3635 = vmul.f32 %v3507, %v2981
      %v3636 = vmul.f32 %v3508, %v2982
      %v3637 = vmul.f32 %v3509, %v2983
      %v3638 = vmul.f32 %v3510, %v2984
      %v3639 = vmul.f32 %v3511, %v2985
      %v3640 = vmul.f32 %v3512, %v2986
      %v3641 = vmul.f32 %v3513, %v2987
      %v3642 = vmul.f32 %v3514, %v2988
      %v3643 = vmul.f32 %v3515, %v2989
      %v3644 = vmul.f32 %v3516, %v2990
      %v3645 = vmul.f32 %v3517, %v2991
      %v3646 = vmul.f32 %v3518, %v2992
      %v3647 = vmul.f32 %v3519, %v2993
      %v3648 = vmul.f32 %v3520, %v2994
      %v3649 = vxor.u32 %v3521, 2147483648
      %v3650 = vxor.u32 %v3522, 2147483648
      %v3651 = vxor.u32 %v3523, 2147483648
      %v3652 = vxor.u32 %v3524, 2147483648
      %v3653 = vxor.u32 %v3525, 2147483648
      %v3654 = vxor.u32 %v3526, 2147483648
      %v3655 = vxor.u32 %v3527, 2147483648
      %v3656 = vxor.u32 %v3528, 2147483648
      %v3657 = vxor.u32 %v3529, 2147483648
      %v3658 = vxor.u32 %v3530, 2147483648
      %v3659 = vxor.u32 %v3531, 2147483648
      %v3660 = vxor.u32 %v3532, 2147483648
      %v3661 = vxor.u32 %v3533, 2147483648
      %v3662 = vxor.u32 %v3534, 2147483648
      %v3663 = vxor.u32 %v3535, 2147483648
      %v3664 = vxor.u32 %v3536, 2147483648
      %v3665 = vxor.u32 %v3537, 2147483648
      %v3666 = vxor.u32 %v3538, 2147483648
      %v3667 = vxor.u32 %v3539, 2147483648
      %v3668 = vxor.u32 %v3540, 2147483648
      %v3669 = vxor.u32 %v3541, 2147483648
      %v3670 = vxor.u32 %v3542, 2147483648
      %v3671 = vxor.u32 %v3543, 2147483648
      %v3672 = vxor.u32 %v3544, 2147483648
      %v3673 = vxor.u32 %v3545, 2147483648
      %v3674 = vxor.u32 %v3546, 2147483648
      %v3675 = vxor.u32 %v3547, 2147483648
      %v3676 = vxor.u32 %v3548, 2147483648
      %v3677 = vxor.u32 %v3549, 2147483648
      %v3678 = vxor.u32 %v3550, 2147483648
      %v3679 = vxor.u32 %v3551, 2147483648
      %v3680 = vxor.u32 %v3552, 2147483648
      %v3681 = vxor.u32 %v3553, 2147483648
      %v3682 = vxor.u32 %v3554, 2147483648
      %v3683 = vxor.u32 %v3555, 2147483648
      %v3684 = vxor.u32 %v3556, 2147483648
      %v3685 = vxor.u32 %v3557, 2147483648
      %v3686 = vxor.u32 %v3558, 2147483648
      %v3687 = vxor.u32 %v3559, 2147483648
      %v3688 = vxor.u32 %v3560, 2147483648
      %v3689 = vxor.u32 %v3561, 2147483648
      %v3690 = vxor.u32 %v3562, 2147483648
      %v3691 = vxor.u32 %v3563, 2147483648
      %v3692 = vxor.u32 %v3564, 2147483648
      %v3693 = vxor.u32 %v3565, 2147483648
      %v3694 = vxor.u32 %v3566, 2147483648
      %v3695 = vxor.u32 %v3567, 2147483648
      %v3696 = vxor.u32 %v3568, 2147483648
      %v3697 = vxor.u32 %v3569, 2147483648
      %v3698 = vxor.u32 %v3570, 2147483648
      %v3699 = vxor.u32 %v3571, 2147483648
      %v3700 = vxor.u32 %v3572, 2147483648
      %v3701 = vxor.u32 %v3573, 2147483648
      %v3702 = vxor.u32 %v3574, 2147483648
      %v3703 = vxor.u32 %v3575, 2147483648
      %v3704 = vxor.u32 %v3576, 2147483648
      %v3705 = vxor.u32 %v3577, 2147483648
      %v3706 = vxor.u32 %v3578, 2147483648
      %v3707 = vxor.u32 %v3579, 2147483648
      %v3708 = vxor.u32 %v3580, 2147483648
      %v3709 = vxor.u32 %v3581, 2147483648
      %v3710 = vxor.u32 %v3582, 2147483648
      %v3711 = vxor.u32 %v3583, 2147483648
      %v3712 = vxor.u32 %v3584, 2147483648
      %v3713 = vxor.u32 %v3585, 2147483648
      %v3714 = vxor.u32 %v3586, 2147483648
      %v3715 = vxor.u32 %v3587, 2147483648
      %v3716 = vxor.u32 %v3588, 2147483648
      %v3717 = vxor.u32 %v3589, 2147483648
      %v3718 = vxor.u32 %v3590, 2147483648
      %v3719 = vxor.u32 %v3591, 2147483648
      %v3720 = vxor.u32 %v3592, 2147483648
      %v3721 = vxor.u32 %v3593, 2147483648
      %v3722 = vxor.u32 %v3594, 2147483648
      %v3723 = vxor.u32 %v3595, 2147483648
      %v3724 = vxor.u32 %v3596, 2147483648
      %v3725 = vxor.u32 %v3597, 2147483648
      %v3726 = vxor.u32 %v3598, 2147483648
      %v3727 = vxor.u32 %v3599, 2147483648
      %v3728 = vxor.u32 %v3600, 2147483648
      %v3729 = vxor.u32 %v3601, 2147483648
      %v3730 = vxor.u32 %v3602, 2147483648
      %v3731 = vxor.u32 %v3603, 2147483648
      %v3732 = vxor.u32 %v3604, 2147483648
      %v3733 = vxor.u32 %v3605, 2147483648
      %v3734 = vxor.u32 %v3606, 2147483648
      %v3735 = vxor.u32 %v3607, 2147483648
      %v3736 = vxor.u32 %v3608, 2147483648
      %v3737 = vxor.u32 %v3609, 2147483648
      %v3738 = vxor.u32 %v3610, 2147483648
      %v3739 = vxor.u32 %v3611, 2147483648
      %v3740 = vxor.u32 %v3612, 2147483648
      %v3741 = vxor.u32 %v3613, 2147483648
      %v3742 = vxor.u32 %v3614, 2147483648
      %v3743 = vxor.u32 %v3615, 2147483648
      %v3744 = vxor.u32 %v3616, 2147483648
      %v3745 = vxor.u32 %v3617, 2147483648
      %v3746 = vxor.u32 %v3618, 2147483648
      %v3747 = vxor.u32 %v3619, 2147483648
      %v3748 = vxor.u32 %v3620, 2147483648
      %v3749 = vxor.u32 %v3621, 2147483648
      %v3750 = vxor.u32 %v3622, 2147483648
      %v3751 = vxor.u32 %v3623, 2147483648
      %v3752 = vxor.u32 %v3624, 2147483648
      %v3753 = vxor.u32 %v3625, 2147483648
      %v3754 = vxor.u32 %v3626, 2147483648
      %v3755 = vxor.u32 %v3627, 2147483648
      %v3756 = vxor.u32 %v3628, 2147483648
      %v3757 = vxor.u32 %v3629, 2147483648
      %v3758 = vxor.u32 %v3630, 2147483648
      %v3759 = vxor.u32 %v3631, 2147483648
      %v3760 = vxor.u32 %v3632, 2147483648
      %v3761 = vxor.u32 %v3633, 2147483648
      %v3762 = vxor.u32 %v3634, 2147483648
      %v3763 = vxor.u32 %v3635, 2147483648
      %v3764 = vxor.u32 %v3636, 2147483648
      %v3765 = vxor.u32 %v3637, 2147483648
      %v3766 = vxor.u32 %v3638, 2147483648
      %v3767 = vxor.u32 %v3639, 2147483648
      %v3768 = vxor.u32 %v3640, 2147483648
      %v3769 = vxor.u32 %v3641, 2147483648
      %v3770 = vxor.u32 %v3642, 2147483648
      %v3771 = vxor.u32 %v3643, 2147483648
      %v3772 = vxor.u32 %v3644, 2147483648
      %v3773 = vxor.u32 %v3645, 2147483648
      %v3774 = vxor.u32 %v3646, 2147483648
      %v3775 = vxor.u32 %v3647, 2147483648
      %v3776 = vxor.u32 %v3648, 2147483648
      %v3777 = vmul.f32 %v3649, 1.442695
      %v3778 = vpow.pop %v3777
      %v3779 = vmul.f32 %v3650, 1.442695
      %v3780 = vpow.pop %v3779
      %v3781 = vmul.f32 %v3651, 1.442695
      %v3782 = vpow.pop %v3781
      %v3783 = vmul.f32 %v3652, 1.442695
      %v3784 = vpow.pop %v3783
      %v3785 = vmul.f32 %v3653, 1.442695
      %v3786 = vpow.pop %v3785
      %v3787 = vmul.f32 %v3654, 1.442695
      %v3788 = vpow.pop %v3787
      %v3789 = vmul.f32 %v3655, 1.442695
      %v3790 = vpow.pop %v3789
      %v3791 = vmul.f32 %v3656, 1.442695
      %v3792 = vpow.pop %v3791
      %v3793 = vmul.f32 %v3657, 1.442695
      %v3794 = vpow.pop %v3793
      %v3795 = vmul.f32 %v3658, 1.442695
      %v3796 = vpow.pop %v3795
      %v3797 = vmul.f32 %v3659, 1.442695
      %v3798 = vpow.pop %v3797
      %v3799 = vmul.f32 %v3660, 1.442695
      %v3800 = vpow.pop %v3799
      %v3801 = vmul.f32 %v3661, 1.442695
      %v3802 = vpow.pop %v3801
      %v3803 = vmul.f32 %v3662, 1.442695
      %v3804 = vpow.pop %v3803
      %v3805 = vmul.f32 %v3663, 1.442695
      %v3806 = vpow.pop %v3805
      %v3807 = vmul.f32 %v3664, 1.442695
      %v3808 = vpow.pop %v3807
      %v3809 = vmul.f32 %v3665, 1.442695
      %v3810 = vpow.pop %v3809
      %v3811 = vmul.f32 %v3666, 1.442695
      %v3812 = vpow.pop %v3811
      %v3813 = vmul.f32 %v3667, 1.442695
      %v3814 = vpow.pop %v3813
      %v3815 = vmul.f32 %v3668, 1.442695
      %v3816 = vpow.pop %v3815
      %v3817 = vmul.f32 %v3669, 1.442695
      %v3818 = vpow.pop %v3817
      %v3819 = vmul.f32 %v3670, 1.442695
      %v3820 = vpow.pop %v3819
      %v3821 = vmul.f32 %v3671, 1.442695
      %v3822 = vpow.pop %v3821
      %v3823 = vmul.f32 %v3672, 1.442695
      %v3824 = vpow.pop %v3823
      %v3825 = vmul.f32 %v3673, 1.442695
      %v3826 = vpow.pop %v3825
      %v3827 = vmul.f32 %v3674, 1.442695
      %v3828 = vpow.pop %v3827
      %v3829 = vmul.f32 %v3675, 1.442695
      %v3830 = vpow.pop %v3829
      %v3831 = vmul.f32 %v3676, 1.442695
      %v3832 = vpow.pop %v3831
      %v3833 = vmul.f32 %v3677, 1.442695
      %v3834 = vpow.pop %v3833
      %v3835 = vmul.f32 %v3678, 1.442695
      %v3836 = vpow.pop %v3835
      %v3837 = vmul.f32 %v3679, 1.442695
      %v3838 = vpow.pop %v3837
      %v3839 = vmul.f32 %v3680, 1.442695
      %v3840 = vpow.pop %v3839
      %v3841 = vmul.f32 %v3681, 1.442695
      %v3842 = vpow.pop %v3841
      %v3843 = vmul.f32 %v3682, 1.442695
      %v3844 = vpow.pop %v3843
      %v3845 = vmul.f32 %v3683, 1.442695
      %v3846 = vpow.pop %v3845
      %v3847 = vmul.f32 %v3684, 1.442695
      %v3848 = vpow.pop %v3847
      %v3849 = vmul.f32 %v3685, 1.442695
      %v3850 = vpow.pop %v3849
      %v3851 = vmul.f32 %v3686, 1.442695
      %v3852 = vpow.pop %v3851
      %v3853 = vmul.f32 %v3687, 1.442695
      %v3854 = vpow.pop %v3853
      %v3855 = vmul.f32 %v3688, 1.442695
      %v3856 = vpow.pop %v3855
      %v3857 = vmul.f32 %v3689, 1.442695
      %v3858 = vpow.pop %v3857
      %v3859 = vmul.f32 %v3690, 1.442695
      %v3860 = vpow.pop %v3859
      %v3861 = vmul.f32 %v3691, 1.442695
      %v3862 = vpow.pop %v3861
      %v3863 = vmul.f32 %v3692, 1.442695
      %v3864 = vpow.pop %v3863
      %v3865 = vmul.f32 %v3693, 1.442695
      %v3866 = vpow.pop %v3865
      %v3867 = vmul.f32 %v3694, 1.442695
      %v3868 = vpow.pop %v3867
      %v3869 = vmul.f32 %v3695, 1.442695
      %v3870 = vpow.pop %v3869
      %v3871 = vmul.f32 %v3696, 1.442695
      %v3872 = vpow.pop %v3871
      %v3873 = vmul.f32 %v3697, 1.442695
      %v3874 = vpow.pop %v3873
      %v3875 = vmul.f32 %v3698, 1.442695
      %v3876 = vpow.pop %v3875
      %v3877 = vmul.f32 %v3699, 1.442695
      %v3878 = vpow.pop %v3877
      %v3879 = vmul.f32 %v3700, 1.442695
      %v3880 = vpow.pop %v3879
      %v3881 = vmul.f32 %v3701, 1.442695
      %v3882 = vpow.pop %v3881
      %v3883 = vmul.f32 %v3702, 1.442695
      %v3884 = vpow.pop %v3883
      %v3885 = vmul.f32 %v3703, 1.442695
      %v3886 = vpow.pop %v3885
      %v3887 = vmul.f32 %v3704, 1.442695
      %v3888 = vpow.pop %v3887
      %v3889 = vmul.f32 %v3705, 1.442695
      %v3890 = vpow.pop %v3889
      %v3891 = vmul.f32 %v3706, 1.442695
      %v3892 = vpow.pop %v3891
      %v3893 = vmul.f32 %v3707, 1.442695
      %v3894 = vpow.pop %v3893
      %v3895 = vmul.f32 %v3708, 1.442695
      %v3896 = vpow.pop %v3895
      %v3897 = vmul.f32 %v3709, 1.442695
      %v3898 = vpow.pop %v3897
      %v3899 = vmul.f32 %v3710, 1.442695
      %v3900 = vpow.pop %v3899
      %v3901 = vmul.f32 %v3711, 1.442695
      %v3902 = vpow.pop %v3901
      %v3903 = vmul.f32 %v3712, 1.442695
      %v3904 = vpow.pop %v3903
      %v3905 = vmul.f32 %v3713, 1.442695
      %v3906 = vpow.pop %v3905
      %v3907 = vmul.f32 %v3714, 1.442695
      %v3908 = vpow.pop %v3907
      %v3909 = vmul.f32 %v3715, 1.442695
      %v3910 = vpow.pop %v3909
      %v3911 = vmul.f32 %v3716, 1.442695
      %v3912 = vpow.pop %v3911
      %v3913 = vmul.f32 %v3717, 1.442695
      %v3914 = vpow.pop %v3913
      %v3915 = vmul.f32 %v3718, 1.442695
      %v3916 = vpow.pop %v3915
      %v3917 = vmul.f32 %v3719, 1.442695
      %v3918 = vpow.pop %v3917
      %v3919 = vmul.f32 %v3720, 1.442695
      %v3920 = vpow.pop %v3919
      %v3921 = vmul.f32 %v3721, 1.442695
      %v3922 = vpow.pop %v3921
      %v3923 = vmul.f32 %v3722, 1.442695
      %v3924 = vpow.pop %v3923
      %v3925 = vmul.f32 %v3723, 1.442695
      %v3926 = vpow.pop %v3925
      %v3927 = vmul.f32 %v3724, 1.442695
      %v3928 = vpow.pop %v3927
      %v3929 = vmul.f32 %v3725, 1.442695
      %v3930 = vpow.pop %v3929
      %v3931 = vmul.f32 %v3726, 1.442695
      %v3932 = vpow.pop %v3931
      %v3933 = vmul.f32 %v3727, 1.442695
      %v3934 = vpow.pop %v3933
      %v3935 = vmul.f32 %v3728, 1.442695
      %v3936 = vpow.pop %v3935
      %v3937 = vmul.f32 %v3729, 1.442695
      %v3938 = vpow.pop %v3937
      %v3939 = vmul.f32 %v3730, 1.442695
      %v3940 = vpow.pop %v3939
      %v3941 = vmul.f32 %v3731, 1.442695
      %v3942 = vpow.pop %v3941
      %v3943 = vmul.f32 %v3732, 1.442695
      %v3944 = vpow.pop %v3943
      %v3945 = vmul.f32 %v3733, 1.442695
      %v3946 = vpow.pop %v3945
      %v3947 = vmul.f32 %v3734, 1.442695
      %v3948 = vpow.pop %v3947
      %v3949 = vmul.f32 %v3735, 1.442695
      %v3950 = vpow.pop %v3949
      %v3951 = vmul.f32 %v3736, 1.442695
      %v3952 = vpow.pop %v3951
      %v3953 = vmul.f32 %v3737, 1.442695
      %v3954 = vpow.pop %v3953
      %v3955 = vmul.f32 %v3738, 1.442695
      %v3956 = vpow.pop %v3955
      %v3957 = vmul.f32 %v3739, 1.442695
      %v3958 = vpow.pop %v3957
      %v3959 = vmul.f32 %v3740, 1.442695
      %v3960 = vpow.pop %v3959
      %v3961 = vmul.f32 %v3741, 1.442695
      %v3962 = vpow.pop %v3961
      %v3963 = vmul.f32 %v3742, 1.442695
      %v3964 = vpow.pop %v3963
      %v3965 = vmul.f32 %v3743, 1.442695
      %v3966 = vpow.pop %v3965
      %v3967 = vmul.f32 %v3744, 1.442695
      %v3968 = vpow.pop %v3967
      %v3969 = vmul.f32 %v3745, 1.442695
      %v3970 = vpow.pop %v3969
      %v3971 = vmul.f32 %v3746, 1.442695
      %v3972 = vpow.pop %v3971
      %v3973 = vmul.f32 %v3747, 1.442695
      %v3974 = vpow.pop %v3973
      %v3975 = vmul.f32 %v3748, 1.442695
      %v3976 = vpow.pop %v3975
      %v3977 = vmul.f32 %v3749, 1.442695
      %v3978 = vpow.pop %v3977
      %v3979 = vmul.f32 %v3750, 1.442695
      %v3980 = vpow.pop %v3979
      %v3981 = vmul.f32 %v3751, 1.442695
      %v3982 = vpow.pop %v3981
      %v3983 = vmul.f32 %v3752, 1.442695
      %v3984 = vpow.pop %v3983
      %v3985 = vmul.f32 %v3753, 1.442695
      %v3986 = vpow.pop %v3985
      %v3987 = vmul.f32 %v3754, 1.442695
      %v3988 = vpow.pop %v3987
      %v3989 = vmul.f32 %v3755, 1.442695
      %v3990 = vpow.pop %v3989
      %v3991 = vmul.f32 %v3756, 1.442695
      %v3992 = vpow.pop %v3991
      %v3993 = vmul.f32 %v3757, 1.442695
      %v3994 = vpow.pop %v3993
      %v3995 = vmul.f32 %v3758, 1.442695
      %v3996 = vpow.pop %v3995
      %v3997 = vmul.f32 %v3759, 1.442695
      %v3998 = vpow.pop %v3997
      %v3999 = vmul.f32 %v3760, 1.442695
      %v4000 = vpow.pop %v3999
      %v4001 = vmul.f32 %v3761, 1.442695
      %v4002 = vpow.pop %v4001
      %v4003 = vmul.f32 %v3762, 1.442695
      %v4004 = vpow.pop %v4003
      %v4005 = vmul.f32 %v3763, 1.442695
      %v4006 = vpow.pop %v4005
      %v4007 = vmul.f32 %v3764, 1.442695
      %v4008 = vpow.pop %v4007
      %v4009 = vmul.f32 %v3765, 1.442695
      %v4010 = vpow.pop %v4009
      %v4011 = vmul.f32 %v3766, 1.442695
      %v4012 = vpow.pop %v4011
      %v4013 = vmul.f32 %v3767, 1.442695
      %v4014 = vpow.pop %v4013
      %v4015 = vmul.f32 %v3768, 1.442695
      %v4016 = vpow.pop %v4015
      %v4017 = vmul.f32 %v3769, 1.442695
      %v4018 = vpow.pop %v4017
      %v4019 = vmul.f32 %v3770, 1.442695
      %v4020 = vpow.pop %v4019
      %v4021 = vmul.f32 %v3771, 1.442695
      %v4022 = vpow.pop %v4021
      %v4023 = vmul.f32 %v3772, 1.442695
      %v4024 = vpow.pop %v4023
      %v4025 = vmul.f32 %v3773, 1.442695
      %v4026 = vpow.pop %v4025
      %v4027 = vmul.f32 %v3774, 1.442695
      %v4028 = vpow.pop %v4027
      %v4029 = vmul.f32 %v3775, 1.442695
      %v4030 = vpow.pop %v4029
      %v4031 = vmul.f32 %v3776, 1.442695
      %v4032 = vpow.pop %v4031
      %v4033 = vadd.f32 %v3778, 1.0
      %v4034 = vadd.f32 %v3780, 1.0
      %v4035 = vadd.f32 %v3782, 1.0
      %v4036 = vadd.f32 %v3784, 1.0
      %v4037 = vadd.f32 %v3786, 1.0
      %v4038 = vadd.f32 %v3788, 1.0
      %v4039 = vadd.f32 %v3790, 1.0
      %v4040 = vadd.f32 %v3792, 1.0
      %v4041 = vadd.f32 %v3794, 1.0
      %v4042 = vadd.f32 %v3796, 1.0
      %v4043 = vadd.f32 %v3798, 1.0
      %v4044 = vadd.f32 %v3800, 1.0
      %v4045 = vadd.f32 %v3802, 1.0
      %v4046 = vadd.f32 %v3804, 1.0
      %v4047 = vadd.f32 %v3806, 1.0
      %v4048 = vadd.f32 %v3808, 1.0
      %v4049 = vadd.f32 %v3810, 1.0
      %v4050 = vadd.f32 %v3812, 1.0
      %v4051 = vadd.f32 %v3814, 1.0
      %v4052 = vadd.f32 %v3816, 1.0
      %v4053 = vadd.f32 %v3818, 1.0
      %v4054 = vadd.f32 %v3820, 1.0
      %v4055 = vadd.f32 %v3822, 1.0
      %v4056 = vadd.f32 %v3824, 1.0
      %v4057 = vadd.f32 %v3826, 1.0
      %v4058 = vadd.f32 %v3828, 1.0
      %v4059 = vadd.f32 %v3830, 1.0
      %v4060 = vadd.f32 %v3832, 1.0
      %v4061 = vadd.f32 %v3834, 1.0
      %v4062 = vadd.f32 %v3836, 1.0
      %v4063 = vadd.f32 %v3838, 1.0
      %v4064 = vadd.f32 %v3840, 1.0
      %v4065 = vadd.f32 %v3842, 1.0
      %v4066 = vadd.f32 %v3844, 1.0
      %v4067 = vadd.f32 %v3846, 1.0
      %v4068 = vadd.f32 %v3848, 1.0
      %v4069 = vadd.f32 %v3850, 1.0
      %v4070 = vadd.f32 %v3852, 1.0
      %v4071 = vadd.f32 %v3854, 1.0
      %v4072 = vadd.f32 %v3856, 1.0
      %v4073 = vadd.f32 %v3858, 1.0
      %v4074 = vadd.f32 %v3860, 1.0
      %v4075 = vadd.f32 %v3862, 1.0
      %v4076 = vadd.f32 %v3864, 1.0
      %v4077 = vadd.f32 %v3866, 1.0
      %v4078 = vadd.f32 %v3868, 1.0
      %v4079 = vadd.f32 %v3870, 1.0
      %v4080 = vadd.f32 %v3872, 1.0
      %v4081 = vadd.f32 %v3874, 1.0
      %v4082 = vadd.f32 %v3876, 1.0
      %v4083 = vadd.f32 %v3878, 1.0
      %v4084 = vadd.f32 %v3880, 1.0
      %v4085 = vadd.f32 %v3882, 1.0
      %v4086 = vadd.f32 %v3884, 1.0
      %v4087 = vadd.f32 %v3886, 1.0
      %v4088 = vadd.f32 %v3888, 1.0
      %v4089 = vadd.f32 %v3890, 1.0
      %v4090 = vadd.f32 %v3892, 1.0
      %v4091 = vadd.f32 %v3894, 1.0
      %v4092 = vadd.f32 %v3896, 1.0
      %v4093 = vadd.f32 %v3898, 1.0
      %v4094 = vadd.f32 %v3900, 1.0
      %v4095 = vadd.f32 %v3902, 1.0
      %v4096 = vadd.f32 %v3904, 1.0
      %v4097 = vadd.f32 %v3906, 1.0
      %v4098 = vadd.f32 %v3908, 1.0
      %v4099 = vadd.f32 %v3910, 1.0
      %v4100 = vadd.f32 %v3912, 1.0
      %v4101 = vadd.f32 %v3914, 1.0
      %v4102 = vadd.f32 %v3916, 1.0
      %v4103 = vadd.f32 %v3918, 1.0
      %v4104 = vadd.f32 %v3920, 1.0
      %v4105 = vadd.f32 %v3922, 1.0
      %v4106 = vadd.f32 %v3924, 1.0
      %v4107 = vadd.f32 %v3926, 1.0
      %v4108 = vadd.f32 %v3928, 1.0
      %v4109 = vadd.f32 %v3930, 1.0
      %v4110 = vadd.f32 %v3932, 1.0
      %v4111 = vadd.f32 %v3934, 1.0
      %v4112 = vadd.f32 %v3936, 1.0
      %v4113 = vadd.f32 %v3938, 1.0
      %v4114 = vadd.f32 %v3940, 1.0
      %v4115 = vadd.f32 %v3942, 1.0
      %v4116 = vadd.f32 %v3944, 1.0
      %v4117 = vadd.f32 %v3946, 1.0
      %v4118 = vadd.f32 %v3948, 1.0
      %v4119 = vadd.f32 %v3950, 1.0
      %v4120 = vadd.f32 %v3952, 1.0
      %v4121 = vadd.f32 %v3954, 1.0
      %v4122 = vadd.f32 %v3956, 1.0
      %v4123 = vadd.f32 %v3958, 1.0
      %v4124 = vadd.f32 %v3960, 1.0
      %v4125 = vadd.f32 %v3962, 1.0
      %v4126 = vadd.f32 %v3964, 1.0
      %v4127 = vadd.f32 %v3966, 1.0
      %v4128 = vadd.f32 %v3968, 1.0
      %v4129 = vadd.f32 %v3970, 1.0
      %v4130 = vadd.f32 %v3972, 1.0
      %v4131 = vadd.f32 %v3974, 1.0
      %v4132 = vadd.f32 %v3976, 1.0
      %v4133 = vadd.f32 %v3978, 1.0
      %v4134 = vadd.f32 %v3980, 1.0
      %v4135 = vadd.f32 %v3982, 1.0
      %v4136 = vadd.f32 %v3984, 1.0
      %v4137 = vadd.f32 %v3986, 1.0
      %v4138 = vadd.f32 %v3988, 1.0
      %v4139 = vadd.f32 %v3990, 1.0
      %v4140 = vadd.f32 %v3992, 1.0
      %v4141 = vadd.f32 %v3994, 1.0
      %v4142 = vadd.f32 %v3996, 1.0
      %v4143 = vadd.f32 %v3998, 1.0
      %v4144 = vadd.f32 %v4000, 1.0
      %v4145 = vadd.f32 %v4002, 1.0
      %v4146 = vadd.f32 %v4004, 1.0
      %v4147 = vadd.f32 %v4006, 1.0
      %v4148 = vadd.f32 %v4008, 1.0
      %v4149 = vadd.f32 %v4010, 1.0
      %v4150 = vadd.f32 %v4012, 1.0
      %v4151 = vadd.f32 %v4014, 1.0
      %v4152 = vadd.f32 %v4016, 1.0
      %v4153 = vadd.f32 %v4018, 1.0
      %v4154 = vadd.f32 %v4020, 1.0
      %v4155 = vadd.f32 %v4022, 1.0
      %v4156 = vadd.f32 %v4024, 1.0
      %v4157 = vadd.f32 %v4026, 1.0
      %v4158 = vadd.f32 %v4028, 1.0
      %v4159 = vadd.f32 %v4030, 1.0
      %v4160 = vadd.f32 %v4032, 1.0
      %v4161 = vrcp.pop %v4033
      %v4162 = vmul.f32 1.0, %v4161
      %v4163 = vrcp.pop %v4034
      %v4164 = vmul.f32 1.0, %v4163
      %v4165 = vrcp.pop %v4035
      %v4166 = vmul.f32 1.0, %v4165
      %v4167 = vrcp.pop %v4036
      %v4168 = vmul.f32 1.0, %v4167
      %v4169 = vrcp.pop %v4037
      %v4170 = vmul.f32 1.0, %v4169
      %v4171 = vrcp.pop %v4038
      %v4172 = vmul.f32 1.0, %v4171
      %v4173 = vrcp.pop %v4039
      %v4174 = vmul.f32 1.0, %v4173
      %v4175 = vrcp.pop %v4040
      %v4176 = vmul.f32 1.0, %v4175
      %v4177 = vrcp.pop %v4041
      %v4178 = vmul.f32 1.0, %v4177
      %v4179 = vrcp.pop %v4042
      %v4180 = vmul.f32 1.0, %v4179
      %v4181 = vrcp.pop %v4043
      %v4182 = vmul.f32 1.0, %v4181
      %v4183 = vrcp.pop %v4044
      %v4184 = vmul.f32 1.0, %v4183
      %v4185 = vrcp.pop %v4045
      %v4186 = vmul.f32 1.0, %v4185
      %v4187 = vrcp.pop %v4046
      %v4188 = vmul.f32 1.0, %v4187
      %v4189 = vrcp.pop %v4047
      %v4190 = vmul.f32 1.0, %v4189
      %v4191 = vrcp.pop %v4048
      %v4192 = vmul.f32 1.0, %v4191
      %v4193 = vrcp.pop %v4049
      %v4194 = vmul.f32 1.0, %v4193
      %v4195 = vrcp.pop %v4050
      %v4196 = vmul.f32 1.0, %v4195
      %v4197 = vrcp.pop %v4051
      %v4198 = vmul.f32 1.0, %v4197
      %v4199 = vrcp.pop %v4052
      %v4200 = vmul.f32 1.0, %v4199
      %v4201 = vrcp.pop %v4053
      %v4202 = vmul.f32 1.0, %v4201
      %v4203 = vrcp.pop %v4054
      %v4204 = vmul.f32 1.0, %v4203
      %v4205 = vrcp.pop %v4055
      %v4206 = vmul.f32 1.0, %v4205
      %v4207 = vrcp.pop %v4056
      %v4208 = vmul.f32 1.0, %v4207
      %v4209 = vrcp.pop %v4057
      %v4210 = vmul.f32 1.0, %v4209
      %v4211 = vrcp.pop %v4058
      %v4212 = vmul.f32 1.0, %v4211
      %v4213 = vrcp.pop %v4059
      %v4214 = vmul.f32 1.0, %v4213
      %v4215 = vrcp.pop %v4060
      %v4216 = vmul.f32 1.0, %v4215
      %v4217 = vrcp.pop %v4061
      %v4218 = vmul.f32 1.0, %v4217
      %v4219 = vrcp.pop %v4062
      %v4220 = vmul.f32 1.0, %v4219
      %v4221 = vrcp.pop %v4063
      %v4222 = vmul.f32 1.0, %v4221
      %v4223 = vrcp.pop %v4064
      %v4224 = vmul.f32 1.0, %v4223
      %v4225 = vrcp.pop %v4065
      %v4226 = vmul.f32 1.0, %v4225
      %v4227 = vrcp.pop %v4066
      %v4228 = vmul.f32 1.0, %v4227
      %v4229 = vrcp.pop %v4067
      %v4230 = vmul.f32 1.0, %v4229
      %v4231 = vrcp.pop %v4068
      %v4232 = vmul.f32 1.0, %v4231
      %v4233 = vrcp.pop %v4069
      %v4234 = vmul.f32 1.0, %v4233
      %v4235 = vrcp.pop %v4070
      %v4236 = vmul.f32 1.0, %v4235
      %v4237 = vrcp.pop %v4071
      %v4238 = vmul.f32 1.0, %v4237
      %v4239 = vrcp.pop %v4072
      %v4240 = vmul.f32 1.0, %v4239
      %v4241 = vrcp.pop %v4073
      %v4242 = vmul.f32 1.0, %v4241
      %v4243 = vrcp.pop %v4074
      %v4244 = vmul.f32 1.0, %v4243
      %v4245 = vrcp.pop %v4075
      %v4246 = vmul.f32 1.0, %v4245
      %v4247 = vrcp.pop %v4076
      %v4248 = vmul.f32 1.0, %v4247
      %v4249 = vrcp.pop %v4077
      %v4250 = vmul.f32 1.0, %v4249
      %v4251 = vrcp.pop %v4078
      %v4252 = vmul.f32 1.0, %v4251
      %v4253 = vrcp.pop %v4079
      %v4254 = vmul.f32 1.0, %v4253
      %v4255 = vrcp.pop %v4080
      %v4256 = vmul.f32 1.0, %v4255
      %v4257 = vrcp.pop %v4081
      %v4258 = vmul.f32 1.0, %v4257
      %v4259 = vrcp.pop %v4082
      %v4260 = vmul.f32 1.0, %v4259
      %v4261 = vrcp.pop %v4083
      %v4262 = vmul.f32 1.0, %v4261
      %v4263 = vrcp.pop %v4084
      %v4264 = vmul.f32 1.0, %v4263
      %v4265 = vrcp.pop %v4085
      %v4266 = vmul.f32 1.0, %v4265
      %v4267 = vrcp.pop %v4086
      %v4268 = vmul.f32 1.0, %v4267
      %v4269 = vrcp.pop %v4087
      %v4270 = vmul.f32 1.0, %v4269
      %v4271 = vrcp.pop %v4088
      %v4272 = vmul.f32 1.0, %v4271
      %v4273 = vrcp.pop %v4089
      %v4274 = vmul.f32 1.0, %v4273
      %v4275 = vrcp.pop %v4090
      %v4276 = vmul.f32 1.0, %v4275
      %v4277 = vrcp.pop %v4091
      %v4278 = vmul.f32 1.0, %v4277
      %v4279 = vrcp.pop %v4092
      %v4280 = vmul.f32 1.0, %v4279
      %v4281 = vrcp.pop %v4093
      %v4282 = vmul.f32 1.0, %v4281
      %v4283 = vrcp.pop %v4094
      %v4284 = vmul.f32 1.0, %v4283
      %v4285 = vrcp.pop %v4095
      %v4286 = vmul.f32 1.0, %v4285
      %v4287 = vrcp.pop %v4096
      %v4288 = vmul.f32 1.0, %v4287
      %v4289 = vrcp.pop %v4097
      %v4290 = vmul.f32 1.0, %v4289
      %v4291 = vrcp.pop %v4098
      %v4292 = vmul.f32 1.0, %v4291
      %v4293 = vrcp.pop %v4099
      %v4294 = vmul.f32 1.0, %v4293
      %v4295 = vrcp.pop %v4100
      %v4296 = vmul.f32 1.0, %v4295
      %v4297 = vrcp.pop %v4101
      %v4298 = vmul.f32 1.0, %v4297
      %v4299 = vrcp.pop %v4102
      %v4300 = vmul.f32 1.0, %v4299
      %v4301 = vrcp.pop %v4103
      %v4302 = vmul.f32 1.0, %v4301
      %v4303 = vrcp.pop %v4104
      %v4304 = vmul.f32 1.0, %v4303
      %v4305 = vrcp.pop %v4105
      %v4306 = vmul.f32 1.0, %v4305
      %v4307 = vrcp.pop %v4106
      %v4308 = vmul.f32 1.0, %v4307
      %v4309 = vrcp.pop %v4107
      %v4310 = vmul.f32 1.0, %v4309
      %v4311 = vrcp.pop %v4108
      %v4312 = vmul.f32 1.0, %v4311
      %v4313 = vrcp.pop %v4109
      %v4314 = vmul.f32 1.0, %v4313
      %v4315 = vrcp.pop %v4110
      %v4316 = vmul.f32 1.0, %v4315
      %v4317 = vrcp.pop %v4111
      %v4318 = vmul.f32 1.0, %v4317
      %v4319 = vrcp.pop %v4112
      %v4320 = vmul.f32 1.0, %v4319
      %v4321 = vrcp.pop %v4113
      %v4322 = vmul.f32 1.0, %v4321
      %v4323 = vrcp.pop %v4114
      %v4324 = vmul.f32 1.0, %v4323
      %v4325 = vrcp.pop %v4115
      %v4326 = vmul.f32 1.0, %v4325
      %v4327 = vrcp.pop %v4116
      %v4328 = vmul.f32 1.0, %v4327
      %v4329 = vrcp.pop %v4117
      %v4330 = vmul.f32 1.0, %v4329
      %v4331 = vrcp.pop %v4118
      %v4332 = vmul.f32 1.0, %v4331
      %v4333 = vrcp.pop %v4119
      %v4334 = vmul.f32 1.0, %v4333
      %v4335 = vrcp.pop %v4120
      %v4336 = vmul.f32 1.0, %v4335
      %v4337 = vrcp.pop %v4121
      %v4338 = vmul.f32 1.0, %v4337
      %v4339 = vrcp.pop %v4122
      %v4340 = vmul.f32 1.0, %v4339
      %v4341 = vrcp.pop %v4123
      %v4342 = vmul.f32 1.0, %v4341
      %v4343 = vrcp.pop %v4124
      %v4344 = vmul.f32 1.0, %v4343
      %v4345 = vrcp.pop %v4125
      %v4346 = vmul.f32 1.0, %v4345
      %v4347 = vrcp.pop %v4126
      %v4348 = vmul.f32 1.0, %v4347
      %v4349 = vrcp.pop %v4127
      %v4350 = vmul.f32 1.0, %v4349
      %v4351 = vrcp.pop %v4128
      %v4352 = vmul.f32 1.0, %v4351
      %v4353 = vrcp.pop %v4129
      %v4354 = vmul.f32 1.0, %v4353
      %v4355 = vrcp.pop %v4130
      %v4356 = vmul.f32 1.0, %v4355
      %v4357 = vrcp.pop %v4131
      %v4358 = vmul.f32 1.0, %v4357
      %v4359 = vrcp.pop %v4132
      %v4360 = vmul.f32 1.0, %v4359
      %v4361 = vrcp.pop %v4133
      %v4362 = vmul.f32 1.0, %v4361
      %v4363 = vrcp.pop %v4134
      %v4364 = vmul.f32 1.0, %v4363
      %v4365 = vrcp.pop %v4135
      %v4366 = vmul.f32 1.0, %v4365
      %v4367 = vrcp.pop %v4136
      %v4368 = vmul.f32 1.0, %v4367
      %v4369 = vrcp.pop %v4137
      %v4370 = vmul.f32 1.0, %v4369
      %v4371 = vrcp.pop %v4138
      %v4372 = vmul.f32 1.0, %v4371
      %v4373 = vrcp.pop %v4139
      %v4374 = vmul.f32 1.0, %v4373
      %v4375 = vrcp.pop %v4140
      %v4376 = vmul.f32 1.0, %v4375
      %v4377 = vrcp.pop %v4141
      %v4378 = vmul.f32 1.0, %v4377
      %v4379 = vrcp.pop %v4142
      %v4380 = vmul.f32 1.0, %v4379
      %v4381 = vrcp.pop %v4143
      %v4382 = vmul.f32 1.0, %v4381
      %v4383 = vrcp.pop %v4144
      %v4384 = vmul.f32 1.0, %v4383
      %v4385 = vrcp.pop %v4145
      %v4386 = vmul.f32 1.0, %v4385
      %v4387 = vrcp.pop %v4146
      %v4388 = vmul.f32 1.0, %v4387
      %v4389 = vrcp.pop %v4147
      %v4390 = vmul.f32 1.0, %v4389
      %v4391 = vrcp.pop %v4148
      %v4392 = vmul.f32 1.0, %v4391
      %v4393 = vrcp.pop %v4149
      %v4394 = vmul.f32 1.0, %v4393
      %v4395 = vrcp.pop %v4150
      %v4396 = vmul.f32 1.0, %v4395
      %v4397 = vrcp.pop %v4151
      %v4398 = vmul.f32 1.0, %v4397
      %v4399 = vrcp.pop %v4152
      %v4400 = vmul.f32 1.0, %v4399
      %v4401 = vrcp.pop %v4153
      %v4402 = vmul.f32 1.0, %v4401
      %v4403 = vrcp.pop %v4154
      %v4404 = vmul.f32 1.0, %v4403
      %v4405 = vrcp.pop %v4155
      %v4406 = vmul.f32 1.0, %v4405
      %v4407 = vrcp.pop %v4156
      %v4408 = vmul.f32 1.0, %v4407
      %v4409 = vrcp.pop %v4157
      %v4410 = vmul.f32 1.0, %v4409
      %v4411 = vrcp.pop %v4158
      %v4412 = vmul.f32 1.0, %v4411
      %v4413 = vrcp.pop %v4159
      %v4414 = vmul.f32 1.0, %v4413
      %v4415 = vrcp.pop %v4160
      %v4416 = vmul.f32 1.0, %v4415
      %4545 = vrot.lane.b32.xlu0 %v2867, 127
      %v4546 = vpop.permute.xlu0 %4545
      %4547 = vrot.lane.b32.xlu0 %v2868, 127
      %v4548 = vpop.permute.xlu0 %4547
      %4549 = vrot.lane.b32.xlu0 %v2869, 127
      %v4550 = vpop.permute.xlu0 %4549
      %4551 = vrot.lane.b32.xlu0 %v2870, 127
      %v4552 = vpop.permute.xlu0 %4551
      %4553 = vrot.lane.b32.xlu0 %v2871, 127
      %v4554 = vpop.permute.xlu0 %4553
      %4555 = vrot.lane.b32.xlu0 %v2872, 127
      %v4556 = vpop.permute.xlu0 %4555
      %4557 = vrot.lane.b32.xlu0 %v2873, 127
      %v4558 = vpop.permute.xlu0 %4557
      %4559 = vrot.lane.b32.xlu0 %v2874, 127
      %v4560 = vpop.permute.xlu0 %4559
      %4561 = vrot.lane.b32.xlu0 %v2875, 127
      %v4562 = vpop.permute.xlu0 %4561
      %4563 = vrot.lane.b32.xlu0 %v2876, 127
      %v4564 = vpop.permute.xlu0 %4563
      %4565 = vrot.lane.b32.xlu0 %v2877, 127
      %v4566 = vpop.permute.xlu0 %4565
      %4567 = vrot.lane.b32.xlu0 %v2878, 127
      %v4568 = vpop.permute.xlu0 %4567
      %4569 = vrot.lane.b32.xlu0 %v2879, 127
      %v4570 = vpop.permute.xlu0 %4569
      %4571 = vrot.lane.b32.xlu0 %v2880, 127
      %v4572 = vpop.permute.xlu0 %4571
      %4573 = vrot.lane.b32.xlu0 %v2881, 127
      %v4574 = vpop.permute.xlu0 %4573
      %4575 = vrot.lane.b32.xlu0 %v2882, 127
      %v4576 = vpop.permute.xlu0 %4575
      %4577 = vrot.lane.b32.xlu0 %v2883, 127
      %v4578 = vpop.permute.xlu0 %4577
      %4579 = vrot.lane.b32.xlu0 %v2884, 127
      %v4580 = vpop.permute.xlu0 %4579
      %4581 = vrot.lane.b32.xlu0 %v2885, 127
      %v4582 = vpop.permute.xlu0 %4581
      %4583 = vrot.lane.b32.xlu0 %v2886, 127
      %v4584 = vpop.permute.xlu0 %4583
      %4585 = vrot.lane.b32.xlu0 %v2887, 127
      %v4586 = vpop.permute.xlu0 %4585
      %4587 = vrot.lane.b32.xlu0 %v2888, 127
      %v4588 = vpop.permute.xlu0 %4587
      %4589 = vrot.lane.b32.xlu0 %v2889, 127
      %v4590 = vpop.permute.xlu0 %4589
      %4591 = vrot.lane.b32.xlu0 %v2890, 127
      %v4592 = vpop.permute.xlu0 %4591
      %4593 = vrot.lane.b32.xlu0 %v2891, 127
      %v4594 = vpop.permute.xlu0 %4593
      %4595 = vrot.lane.b32.xlu0 %v2892, 127
      %v4596 = vpop.permute.xlu0 %4595
      %4597 = vrot.lane.b32.xlu0 %v2893, 127
      %v4598 = vpop.permute.xlu0 %4597
      %4599 = vrot.lane.b32.xlu0 %v2894, 127
      %v4600 = vpop.permute.xlu0 %4599
      %4601 = vrot.lane.b32.xlu0 %v2895, 127
      %v4602 = vpop.permute.xlu0 %4601
      %4603 = vrot.lane.b32.xlu0 %v2896, 127
      %v4604 = vpop.permute.xlu0 %4603
      %4605 = vrot.lane.b32.xlu0 %v2897, 127
      %v4606 = vpop.permute.xlu0 %4605
      %4607 = vrot.lane.b32.xlu0 %v2898, 127
      %v4608 = vpop.permute.xlu0 %4607
      %4609 = vrot.lane.b32.xlu0 %v2899, 127
      %v4610 = vpop.permute.xlu0 %4609
      %4611 = vrot.lane.b32.xlu0 %v2900, 127
      %v4612 = vpop.permute.xlu0 %4611
      %4613 = vrot.lane.b32.xlu0 %v2901, 127
      %v4614 = vpop.permute.xlu0 %4613
      %4615 = vrot.lane.b32.xlu0 %v2902, 127
      %v4616 = vpop.permute.xlu0 %4615
      %4617 = vrot.lane.b32.xlu0 %v2903, 127
      %v4618 = vpop.permute.xlu0 %4617
      %4619 = vrot.lane.b32.xlu0 %v2904, 127
      %v4620 = vpop.permute.xlu0 %4619
      %4621 = vrot.lane.b32.xlu0 %v2905, 127
      %v4622 = vpop.permute.xlu0 %4621
      %4623 = vrot.lane.b32.xlu0 %v2906, 127
      %v4624 = vpop.permute.xlu0 %4623
      %4625 = vrot.lane.b32.xlu0 %v2907, 127
      %v4626 = vpop.permute.xlu0 %4625
      %4627 = vrot.lane.b32.xlu0 %v2908, 127
      %v4628 = vpop.permute.xlu0 %4627
      %4629 = vrot.lane.b32.xlu0 %v2909, 127
      %v4630 = vpop.permute.xlu0 %4629
      %4631 = vrot.lane.b32.xlu0 %v2910, 127
      %v4632 = vpop.permute.xlu0 %4631
      %4633 = vrot.lane.b32.xlu0 %v2911, 127
      %v4634 = vpop.permute.xlu0 %4633
      %4635 = vrot.lane.b32.xlu0 %v2912, 127
      %v4636 = vpop.permute.xlu0 %4635
      %4637 = vrot.lane.b32.xlu0 %v2913, 127
      %v4638 = vpop.permute.xlu0 %4637
      %4639 = vrot.lane.b32.xlu0 %v2914, 127
      %v4640 = vpop.permute.xlu0 %4639
      %4641 = vrot.lane.b32.xlu0 %v2915, 127
      %v4642 = vpop.permute.xlu0 %4641
      %4643 = vrot.lane.b32.xlu0 %v2916, 127
      %v4644 = vpop.permute.xlu0 %4643
      %4645 = vrot.lane.b32.xlu0 %v2917, 127
      %v4646 = vpop.permute.xlu0 %4645
      %4647 = vrot.lane.b32.xlu0 %v2918, 127
      %v4648 = vpop.permute.xlu0 %4647
      %4649 = vrot.lane.b32.xlu0 %v2919, 127
      %v4650 = vpop.permute.xlu0 %4649
      %4651 = vrot.lane.b32.xlu0 %v2920, 127
      %v4652 = vpop.permute.xlu0 %4651
      %4653 = vrot.lane.b32.xlu0 %v2921, 127
      %v4654 = vpop.permute.xlu0 %4653
      %4655 = vrot.lane.b32.xlu0 %v2922, 127
      %v4656 = vpop.permute.xlu0 %4655
      %4657 = vrot.lane.b32.xlu0 %v2923, 127
      %v4658 = vpop.permute.xlu0 %4657
      %4659 = vrot.lane.b32.xlu0 %v2924, 127
      %v4660 = vpop.permute.xlu0 %4659
      %4661 = vrot.lane.b32.xlu0 %v2925, 127
      %v4662 = vpop.permute.xlu0 %4661
      %4663 = vrot.lane.b32.xlu0 %v2926, 127
      %v4664 = vpop.permute.xlu0 %4663
      %4665 = vrot.lane.b32.xlu0 %v2927, 127
      %v4666 = vpop.permute.xlu0 %4665
      %4667 = vrot.lane.b32.xlu0 %v2928, 127
      %v4668 = vpop.permute.xlu0 %4667
      %4669 = vrot.lane.b32.xlu0 %v2929, 127
      %v4670 = vpop.permute.xlu0 %4669
      %4671 = vrot.lane.b32.xlu0 %v2930, 127
      %v4672 = vpop.permute.xlu0 %4671
      %4673 = vrot.lane.b32.xlu0 %v2931, 127
      %v4674 = vpop.permute.xlu0 %4673
      %4675 = vrot.lane.b32.xlu0 %v2932, 127
      %v4676 = vpop.permute.xlu0 %4675
      %4677 = vrot.lane.b32.xlu0 %v2933, 127
      %v4678 = vpop.permute.xlu0 %4677
      %4679 = vrot.lane.b32.xlu0 %v2934, 127
      %v4680 = vpop.permute.xlu0 %4679
      %4681 = vrot.lane.b32.xlu0 %v2935, 127
      %v4682 = vpop.permute.xlu0 %4681
      %4683 = vrot.lane.b32.xlu0 %v2936, 127
      %v4684 = vpop.permute.xlu0 %4683
      %4685 = vrot.lane.b32.xlu0 %v2937, 127
      %v4686 = vpop.permute.xlu0 %4685
      %4687 = vrot.lane.b32.xlu0 %v2938, 127
      %v4688 = vpop.permute.xlu0 %4687
      %4689 = vrot.lane.b32.xlu0 %v2939, 127
      %v4690 = vpop.permute.xlu0 %4689
      %4691 = vrot.lane.b32.xlu0 %v2940, 127
      %v4692 = vpop.permute.xlu0 %4691
      %4693 = vrot.lane.b32.xlu0 %v2941, 127
      %v4694 = vpop.permute.xlu0 %4693
      %4695 = vrot.lane.b32.xlu0 %v2942, 127
      %v4696 = vpop.permute.xlu0 %4695
      %4697 = vrot.lane.b32.xlu0 %v2943, 127
      %v4698 = vpop.permute.xlu0 %4697
      %4699 = vrot.lane.b32.xlu0 %v2944, 127
      %v4700 = vpop.permute.xlu0 %4699
      %4701 = vrot.lane.b32.xlu0 %v2945, 127
      %v4702 = vpop.permute.xlu0 %4701
      %4703 = vrot.lane.b32.xlu0 %v2946, 127
      %v4704 = vpop.permute.xlu0 %4703
      %4705 = vrot.lane.b32.xlu0 %v2947, 127
      %v4706 = vpop.permute.xlu0 %4705
      %4707 = vrot.lane.b32.xlu0 %v2948, 127
      %v4708 = vpop.permute.xlu0 %4707
      %4709 = vrot.lane.b32.xlu0 %v2949, 127
      %v4710 = vpop.permute.xlu0 %4709
      %4711 = vrot.lane.b32.xlu0 %v2950, 127
      %v4712 = vpop.permute.xlu0 %4711
      %4713 = vrot.lane.b32.xlu0 %v2951, 127
      %v4714 = vpop.permute.xlu0 %4713
      %4715 = vrot.lane.b32.xlu0 %v2952, 127
      %v4716 = vpop.permute.xlu0 %4715
      %4717 = vrot.lane.b32.xlu0 %v2953, 127
      %v4718 = vpop.permute.xlu0 %4717
      %4719 = vrot.lane.b32.xlu0 %v2954, 127
      %v4720 = vpop.permute.xlu0 %4719
      %4721 = vrot.lane.b32.xlu0 %v2955, 127
      %v4722 = vpop.permute.xlu0 %4721
      %4723 = vrot.lane.b32.xlu0 %v2956, 127
      %v4724 = vpop.permute.xlu0 %4723
      %4725 = vrot.lane.b32.xlu0 %v2957, 127
      %v4726 = vpop.permute.xlu0 %4725
      %4727 = vrot.lane.b32.xlu0 %v2958, 127
      %v4728 = vpop.permute.xlu0 %4727
      %4729 = vrot.lane.b32.xlu0 %v2959, 127
      %v4730 = vpop.permute.xlu0 %4729
      %4731 = vrot.lane.b32.xlu0 %v2960, 127
      %v4732 = vpop.permute.xlu0 %4731
      %4733 = vrot.lane.b32.xlu0 %v2961, 127
      %v4734 = vpop.permute.xlu0 %4733
      %4735 = vrot.lane.b32.xlu0 %v2962, 127
      %v4736 = vpop.permute.xlu0 %4735
      %4737 = vrot.lane.b32.xlu0 %v2963, 127
      %v4738 = vpop.permute.xlu0 %4737
      %4739 = vrot.lane.b32.xlu0 %v2964, 127
      %v4740 = vpop.permute.xlu0 %4739
      %4741 = vrot.lane.b32.xlu0 %v2965, 127
      %v4742 = vpop.permute.xlu0 %4741
      %4743 = vrot.lane.b32.xlu0 %v2966, 127
      %v4744 = vpop.permute.xlu0 %4743
      %4745 = vrot.lane.b32.xlu0 %v2967, 127
      %v4746 = vpop.permute.xlu0 %4745
      %4747 = vrot.lane.b32.xlu0 %v2968, 127
      %v4748 = vpop.permute.xlu0 %4747
      %4749 = vrot.lane.b32.xlu0 %v2969, 127
      %v4750 = vpop.permute.xlu0 %4749
      %4751 = vrot.lane.b32.xlu0 %v2970, 127
      %v4752 = vpop.permute.xlu0 %4751
      %4753 = vrot.lane.b32.xlu0 %v2971, 127
      %v4754 = vpop.permute.xlu0 %4753
      %4755 = vrot.lane.b32.xlu0 %v2972, 127
      %v4756 = vpop.permute.xlu0 %4755
      %4757 = vrot.lane.b32.xlu0 %v2973, 127
      %v4758 = vpop.permute.xlu0 %4757
      %4759 = vrot.lane.b32.xlu0 %v2974, 127
      %v4760 = vpop.permute.xlu0 %4759
      %4761 = vrot.lane.b32.xlu0 %v2975, 127
      %v4762 = vpop.permute.xlu0 %4761
      %4763 = vrot.lane.b32.xlu0 %v2976, 127
      %v4764 = vpop.permute.xlu0 %4763
      %4765 = vrot.lane.b32.xlu0 %v2977, 127
      %v4766 = vpop.permute.xlu0 %4765
      %4767 = vrot.lane.b32.xlu0 %v2978, 127
      %v4768 = vpop.permute.xlu0 %4767
      %4769 = vrot.lane.b32.xlu0 %v2979, 127
      %v4770 = vpop.permute.xlu0 %4769
      %4771 = vrot.lane.b32.xlu0 %v2980, 127
      %v4772 = vpop.permute.xlu0 %4771
      %4773 = vrot.lane.b32.xlu0 %v2981, 127
      %v4774 = vpop.permute.xlu0 %4773
      %4775 = vrot.lane.b32.xlu0 %v2982, 127
      %v4776 = vpop.permute.xlu0 %4775
      %4777 = vrot.lane.b32.xlu0 %v2983, 127
      %v4778 = vpop.permute.xlu0 %4777
      %4779 = vrot.lane.b32.xlu0 %v2984, 127
      %v4780 = vpop.permute.xlu0 %4779
      %4781 = vrot.lane.b32.xlu0 %v2985, 127
      %v4782 = vpop.permute.xlu0 %4781
      %4783 = vrot.lane.b32.xlu0 %v2986, 127
      %v4784 = vpop.permute.xlu0 %4783
      %4785 = vrot.lane.b32.xlu0 %v2987, 127
      %v4786 = vpop.permute.xlu0 %4785
      %4787 = vrot.lane.b32.xlu0 %v2988, 127
      %v4788 = vpop.permute.xlu0 %4787
      %4789 = vrot.lane.b32.xlu0 %v2989, 127
      %v4790 = vpop.permute.xlu0 %4789
      %4791 = vrot.lane.b32.xlu0 %v2990, 127
      %v4792 = vpop.permute.xlu0 %4791
      %4793 = vrot.lane.b32.xlu0 %v2991, 127
      %v4794 = vpop.permute.xlu0 %4793
      %4795 = vrot.lane.b32.xlu0 %v2992, 127
      %v4796 = vpop.permute.xlu0 %4795
      %4797 = vrot.lane.b32.xlu0 %v2993, 127
      %v4798 = vpop.permute.xlu0 %4797
      %4799 = vrot.lane.b32.xlu0 %v2994, 127
      %v4800 = vpop.permute.xlu0 %4799
      %v4929 = vmul.f32 %v4162, %v4546
      %v4930 = vmul.f32 %v4164, %v4548
      %v4931 = vmul.f32 %v4166, %v4550
      %v4932 = vmul.f32 %v4168, %v4552
      %v4933 = vmul.f32 %v4170, %v4554
      %v4934 = vmul.f32 %v4172, %v4556
      %v4935 = vmul.f32 %v4174, %v4558
      %v4936 = vmul.f32 %v4176, %v4560
      %v4937 = vmul.f32 %v4178, %v4562
      %v4938 = vmul.f32 %v4180, %v4564
      %v4939 = vmul.f32 %v4182, %v4566
      %v4940 = vmul.f32 %v4184, %v4568
      %v4941 = vmul.f32 %v4186, %v4570
      %v4942 = vmul.f32 %v4188, %v4572
      %v4943 = vmul.f32 %v4190, %v4574
      %v4944 = vmul.f32 %v4192, %v4576
      %v4945 = vmul.f32 %v4194, %v4578
      %v4946 = vmul.f32 %v4196, %v4580
      %v4947 = vmul.f32 %v4198, %v4582
      %v4948 = vmul.f32 %v4200, %v4584
      %v4949 = vmul.f32 %v4202, %v4586
      %v4950 = vmul.f32 %v4204, %v4588
      %v4951 = vmul.f32 %v4206, %v4590
      %v4952 = vmul.f32 %v4208, %v4592
      %v4953 = vmul.f32 %v4210, %v4594
      %v4954 = vmul.f32 %v4212, %v4596
      %v4955 = vmul.f32 %v4214, %v4598
      %v4956 = vmul.f32 %v4216, %v4600
      %v4957 = vmul.f32 %v4218, %v4602
      %v4958 = vmul.f32 %v4220, %v4604
      %v4959 = vmul.f32 %v4222, %v4606
      %v4960 = vmul.f32 %v4224, %v4608
      %v4961 = vmul.f32 %v4226, %v4610
      %v4962 = vmul.f32 %v4228, %v4612
      %v4963 = vmul.f32 %v4230, %v4614
      %v4964 = vmul.f32 %v4232, %v4616
      %v4965 = vmul.f32 %v4234, %v4618
      %v4966 = vmul.f32 %v4236, %v4620
      %v4967 = vmul.f32 %v4238, %v4622
      %v4968 = vmul.f32 %v4240, %v4624
      %v4969 = vmul.f32 %v4242, %v4626
      %v4970 = vmul.f32 %v4244, %v4628
      %v4971 = vmul.f32 %v4246, %v4630
      %v4972 = vmul.f32 %v4248, %v4632
      %v4973 = vmul.f32 %v4250, %v4634
      %v4974 = vmul.f32 %v4252, %v4636
      %v4975 = vmul.f32 %v4254, %v4638
      %v4976 = vmul.f32 %v4256, %v4640
      %v4977 = vmul.f32 %v4258, %v4642
      %v4978 = vmul.f32 %v4260, %v4644
      %v4979 = vmul.f32 %v4262, %v4646
      %v4980 = vmul.f32 %v4264, %v4648
      %v4981 = vmul.f32 %v4266, %v4650
      %v4982 = vmul.f32 %v4268, %v4652
      %v4983 = vmul.f32 %v4270, %v4654
      %v4984 = vmul.f32 %v4272, %v4656
      %v4985 = vmul.f32 %v4274, %v4658
      %v4986 = vmul.f32 %v4276, %v4660
      %v4987 = vmul.f32 %v4278, %v4662
      %v4988 = vmul.f32 %v4280, %v4664
      %v4989 = vmul.f32 %v4282, %v4666
      %v4990 = vmul.f32 %v4284, %v4668
      %v4991 = vmul.f32 %v4286, %v4670
      %v4992 = vmul.f32 %v4288, %v4672
      %v4993 = vmul.f32 %v4290, %v4674
      %v4994 = vmul.f32 %v4292, %v4676
      %v4995 = vmul.f32 %v4294, %v4678
      %v4996 = vmul.f32 %v4296, %v4680
      %v4997 = vmul.f32 %v4298, %v4682
      %v4998 = vmul.f32 %v4300, %v4684
      %v4999 = vmul.f32 %v4302, %v4686
      %v5000 = vmul.f32 %v4304, %v4688
      %v5001 = vmul.f32 %v4306, %v4690
      %v5002 = vmul.f32 %v4308, %v4692
      %v5003 = vmul.f32 %v4310, %v4694
      %v5004 = vmul.f32 %v4312, %v4696
      %v5005 = vmul.f32 %v4314, %v4698
      %v5006 = vmul.f32 %v4316, %v4700
      %v5007 = vmul.f32 %v4318, %v4702
      %v5008 = vmul.f32 %v4320, %v4704
      %v5009 = vmul.f32 %v4322, %v4706
      %v5010 = vmul.f32 %v4324, %v4708
      %v5011 = vmul.f32 %v4326, %v4710
      %v5012 = vmul.f32 %v4328, %v4712
      %v5013 = vmul.f32 %v4330, %v4714
      %v5014 = vmul.f32 %v4332, %v4716
      %v5015 = vmul.f32 %v4334, %v4718
      %v5016 = vmul.f32 %v4336, %v4720
      %v5017 = vmul.f32 %v4338, %v4722
      %v5018 = vmul.f32 %v4340, %v4724
      %v5019 = vmul.f32 %v4342, %v4726
      %v5020 = vmul.f32 %v4344, %v4728
      %v5021 = vmul.f32 %v4346, %v4730
      %v5022 = vmul.f32 %v4348, %v4732
      %v5023 = vmul.f32 %v4350, %v4734
      %v5024 = vmul.f32 %v4352, %v4736
      %v5025 = vmul.f32 %v4354, %v4738
      %v5026 = vmul.f32 %v4356, %v4740
      %v5027 = vmul.f32 %v4358, %v4742
      %v5028 = vmul.f32 %v4360, %v4744
      %v5029 = vmul.f32 %v4362, %v4746
      %v5030 = vmul.f32 %v4364, %v4748
      %v5031 = vmul.f32 %v4366, %v4750
      %v5032 = vmul.f32 %v4368, %v4752
      %v5033 = vmul.f32 %v4370, %v4754
      %v5034 = vmul.f32 %v4372, %v4756
      %v5035 = vmul.f32 %v4374, %v4758
      %v5036 = vmul.f32 %v4376, %v4760
      %v5037 = vmul.f32 %v4378, %v4762
      %v5038 = vmul.f32 %v4380, %v4764
      %v5039 = vmul.f32 %v4382, %v4766
      %v5040 = vmul.f32 %v4384, %v4768
      %v5041 = vmul.f32 %v4386, %v4770
      %v5042 = vmul.f32 %v4388, %v4772
      %v5043 = vmul.f32 %v4390, %v4774
      %v5044 = vmul.f32 %v4392, %v4776
      %v5045 = vmul.f32 %v4394, %v4778
      %v5046 = vmul.f32 %v4396, %v4780
      %v5047 = vmul.f32 %v4398, %v4782
      %v5048 = vmul.f32 %v4400, %v4784
      %v5049 = vmul.f32 %v4402, %v4786
      %v5050 = vmul.f32 %v4404, %v4788
      %v5051 = vmul.f32 %v4406, %v4790
      %v5052 = vmul.f32 %v4408, %v4792
      %v5053 = vmul.f32 %v4410, %v4794
      %v5054 = vmul.f32 %v4412, %v4796
      %v5055 = vmul.f32 %v4414, %v4798
      %v5056 = vmul.f32 %v4416, %v4800
      %5058 = vset.pattern.permute.xlu0 0
      %5059 = vperm.xlu0 %5058, %v4929
      %v5060 = vpop.permute.xlu0 %5059
      %5063 = vset.pattern.permute.xlu0 0
      %5064 = vperm.xlu0 %5063, %v4930
      %v5065 = vpop.permute.xlu0 %5064
      %5068 = vset.pattern.permute.xlu0 0
      %5069 = vperm.xlu0 %5068, %v4931
      %v5070 = vpop.permute.xlu0 %5069
      %5073 = vset.pattern.permute.xlu0 0
      %5074 = vperm.xlu0 %5073, %v4932
      %v5075 = vpop.permute.xlu0 %5074
      %5078 = vset.pattern.permute.xlu0 0
      %5079 = vperm.xlu0 %5078, %v4933
      %v5080 = vpop.permute.xlu0 %5079
      %5083 = vset.pattern.permute.xlu0 0
      %5084 = vperm.xlu0 %5083, %v4934
      %v5085 = vpop.permute.xlu0 %5084
      %5088 = vset.pattern.permute.xlu0 0
      %5089 = vperm.xlu0 %5088, %v4935
      %v5090 = vpop.permute.xlu0 %5089
      %5093 = vset.pattern.permute.xlu0 0
      %5094 = vperm.xlu0 %5093, %v4936
      %v5095 = vpop.permute.xlu0 %5094
      %5098 = vset.pattern.permute.xlu0 0
      %5099 = vperm.xlu0 %5098, %v4937
      %v5100 = vpop.permute.xlu0 %5099
      %5103 = vset.pattern.permute.xlu0 0
      %5104 = vperm.xlu0 %5103, %v4938
      %v5105 = vpop.permute.xlu0 %5104
      %5108 = vset.pattern.permute.xlu0 0
      %5109 = vperm.xlu0 %5108, %v4939
      %v5110 = vpop.permute.xlu0 %5109
      %5113 = vset.pattern.permute.xlu0 0
      %5114 = vperm.xlu0 %5113, %v4940
      %v5115 = vpop.permute.xlu0 %5114
      %5118 = vset.pattern.permute.xlu0 0
      %5119 = vperm.xlu0 %5118, %v4941
      %v5120 = vpop.permute.xlu0 %5119
      %5123 = vset.pattern.permute.xlu0 0
      %5124 = vperm.xlu0 %5123, %v4942
      %v5125 = vpop.permute.xlu0 %5124
      %5128 = vset.pattern.permute.xlu0 0
      %5129 = vperm.xlu0 %5128, %v4943
      %v5130 = vpop.permute.xlu0 %5129
      %5133 = vset.pattern.permute.xlu0 0
      %5134 = vperm.xlu0 %5133, %v4944
      %v5135 = vpop.permute.xlu0 %5134
      %5138 = vset.pattern.permute.xlu0 0
      %5139 = vperm.xlu0 %5138, %v4945
      %v5140 = vpop.permute.xlu0 %5139
      %5143 = vset.pattern.permute.xlu0 0
      %5144 = vperm.xlu0 %5143, %v4946
      %v5145 = vpop.permute.xlu0 %5144
      %5148 = vset.pattern.permute.xlu0 0
      %5149 = vperm.xlu0 %5148, %v4947
      %v5150 = vpop.permute.xlu0 %5149
      %5153 = vset.pattern.permute.xlu0 0
      %5154 = vperm.xlu0 %5153, %v4948
      %v5155 = vpop.permute.xlu0 %5154
      %5158 = vset.pattern.permute.xlu0 0
      %5159 = vperm.xlu0 %5158, %v4949
      %v5160 = vpop.permute.xlu0 %5159
      %5163 = vset.pattern.permute.xlu0 0
      %5164 = vperm.xlu0 %5163, %v4950
      %v5165 = vpop.permute.xlu0 %5164
      %5168 = vset.pattern.permute.xlu0 0
      %5169 = vperm.xlu0 %5168, %v4951
      %v5170 = vpop.permute.xlu0 %5169
      %5173 = vset.pattern.permute.xlu0 0
      %5174 = vperm.xlu0 %5173, %v4952
      %v5175 = vpop.permute.xlu0 %5174
      %5178 = vset.pattern.permute.xlu0 0
      %5179 = vperm.xlu0 %5178, %v4953
      %v5180 = vpop.permute.xlu0 %5179
      %5183 = vset.pattern.permute.xlu0 0
      %5184 = vperm.xlu0 %5183, %v4954
      %v5185 = vpop.permute.xlu0 %5184
      %5188 = vset.pattern.permute.xlu0 0
      %5189 = vperm.xlu0 %5188, %v4955
      %v5190 = vpop.permute.xlu0 %5189
      %5193 = vset.pattern.permute.xlu0 0
      %5194 = vperm.xlu0 %5193, %v4956
      %v5195 = vpop.permute.xlu0 %5194
      %5198 = vset.pattern.permute.xlu0 0
      %5199 = vperm.xlu0 %5198, %v4957
      %v5200 = vpop.permute.xlu0 %5199
      %5203 = vset.pattern.permute.xlu0 0
      %5204 = vperm.xlu0 %5203, %v4958
      %v5205 = vpop.permute.xlu0 %5204
      %5208 = vset.pattern.permute.xlu0 0
      %5209 = vperm.xlu0 %5208, %v4959
      %v5210 = vpop.permute.xlu0 %5209
      %5213 = vset.pattern.permute.xlu0 0
      %5214 = vperm.xlu0 %5213, %v4960
      %v5215 = vpop.permute.xlu0 %5214
      %5218 = vset.pattern.permute.xlu0 0
      %5219 = vperm.xlu0 %5218, %v4961
      %v5220 = vpop.permute.xlu0 %5219
      %5223 = vset.pattern.permute.xlu0 0
      %5224 = vperm.xlu0 %5223, %v4962
      %v5225 = vpop.permute.xlu0 %5224
      %5228 = vset.pattern.permute.xlu0 0
      %5229 = vperm.xlu0 %5228, %v4963
      %v5230 = vpop.permute.xlu0 %5229
      %5233 = vset.pattern.permute.xlu0 0
      %5234 = vperm.xlu0 %5233, %v4964
      %v5235 = vpop.permute.xlu0 %5234
      %5238 = vset.pattern.permute.xlu0 0
      %5239 = vperm.xlu0 %5238, %v4965
      %v5240 = vpop.permute.xlu0 %5239
      %5243 = vset.pattern.permute.xlu0 0
      %5244 = vperm.xlu0 %5243, %v4966
      %v5245 = vpop.permute.xlu0 %5244
      %5248 = vset.pattern.permute.xlu0 0
      %5249 = vperm.xlu0 %5248, %v4967
      %v5250 = vpop.permute.xlu0 %5249
      %5253 = vset.pattern.permute.xlu0 0
      %5254 = vperm.xlu0 %5253, %v4968
      %v5255 = vpop.permute.xlu0 %5254
      %5258 = vset.pattern.permute.xlu0 0
      %5259 = vperm.xlu0 %5258, %v4969
      %v5260 = vpop.permute.xlu0 %5259
      %5263 = vset.pattern.permute.xlu0 0
      %5264 = vperm.xlu0 %5263, %v4970
      %v5265 = vpop.permute.xlu0 %5264
      %5268 = vset.pattern.permute.xlu0 0
      %5269 = vperm.xlu0 %5268, %v4971
      %v5270 = vpop.permute.xlu0 %5269
      %5273 = vset.pattern.permute.xlu0 0
      %5274 = vperm.xlu0 %5273, %v4972
      %v5275 = vpop.permute.xlu0 %5274
      %5278 = vset.pattern.permute.xlu0 0
      %5279 = vperm.xlu0 %5278, %v4973
      %v5280 = vpop.permute.xlu0 %5279
      %5283 = vset.pattern.permute.xlu0 0
      %5284 = vperm.xlu0 %5283, %v4974
      %v5285 = vpop.permute.xlu0 %5284
      %5288 = vset.pattern.permute.xlu0 0
      %5289 = vperm.xlu0 %5288, %v4975
      %v5290 = vpop.permute.xlu0 %5289
      %5293 = vset.pattern.permute.xlu0 0
      %5294 = vperm.xlu0 %5293, %v4976
      %v5295 = vpop.permute.xlu0 %5294
      %5298 = vset.pattern.permute.xlu0 0
      %5299 = vperm.xlu0 %5298, %v4977
      %v5300 = vpop.permute.xlu0 %5299
      %5303 = vset.pattern.permute.xlu0 0
      %5304 = vperm.xlu0 %5303, %v4978
      %v5305 = vpop.permute.xlu0 %5304
      %5308 = vset.pattern.permute.xlu0 0
      %5309 = vperm.xlu0 %5308, %v4979
      %v5310 = vpop.permute.xlu0 %5309
      %5313 = vset.pattern.permute.xlu0 0
      %5314 = vperm.xlu0 %5313, %v4980
      %v5315 = vpop.permute.xlu0 %5314
      %5318 = vset.pattern.permute.xlu0 0
      %5319 = vperm.xlu0 %5318, %v4981
      %v5320 = vpop.permute.xlu0 %5319
      %5323 = vset.pattern.permute.xlu0 0
      %5324 = vperm.xlu0 %5323, %v4982
      %v5325 = vpop.permute.xlu0 %5324
      %5328 = vset.pattern.permute.xlu0 0
      %5329 = vperm.xlu0 %5328, %v4983
      %v5330 = vpop.permute.xlu0 %5329
      %5333 = vset.pattern.permute.xlu0 0
      %5334 = vperm.xlu0 %5333, %v4984
      %v5335 = vpop.permute.xlu0 %5334
      %5338 = vset.pattern.permute.xlu0 0
      %5339 = vperm.xlu0 %5338, %v4985
      %v5340 = vpop.permute.xlu0 %5339
      %5343 = vset.pattern.permute.xlu0 0
      %5344 = vperm.xlu0 %5343, %v4986
      %v5345 = vpop.permute.xlu0 %5344
      %5348 = vset.pattern.permute.xlu0 0
      %5349 = vperm.xlu0 %5348, %v4987
      %v5350 = vpop.permute.xlu0 %5349
      %5353 = vset.pattern.permute.xlu0 0
      %5354 = vperm.xlu0 %5353, %v4988
      %v5355 = vpop.permute.xlu0 %5354
      %5358 = vset.pattern.permute.xlu0 0
      %5359 = vperm.xlu0 %5358, %v4989
      %v5360 = vpop.permute.xlu0 %5359
      %5363 = vset.pattern.permute.xlu0 0
      %5364 = vperm.xlu0 %5363, %v4990
      %v5365 = vpop.permute.xlu0 %5364
      %5368 = vset.pattern.permute.xlu0 0
      %5369 = vperm.xlu0 %5368, %v4991
      %v5370 = vpop.permute.xlu0 %5369
      %5373 = vset.pattern.permute.xlu0 0
      %5374 = vperm.xlu0 %5373, %v4992
      %v5375 = vpop.permute.xlu0 %5374
      %5378 = vset.pattern.permute.xlu0 0
      %5379 = vperm.xlu0 %5378, %v4993
      %v5380 = vpop.permute.xlu0 %5379
      %5383 = vset.pattern.permute.xlu0 0
      %5384 = vperm.xlu0 %5383, %v4994
      %v5385 = vpop.permute.xlu0 %5384
      %5388 = vset.pattern.permute.xlu0 0
      %5389 = vperm.xlu0 %5388, %v4995
      %v5390 = vpop.permute.xlu0 %5389
      %5393 = vset.pattern.permute.xlu0 0
      %5394 = vperm.xlu0 %5393, %v4996
      %v5395 = vpop.permute.xlu0 %5394
      %5398 = vset.pattern.permute.xlu0 0
      %5399 = vperm.xlu0 %5398, %v4997
      %v5400 = vpop.permute.xlu0 %5399
      %5403 = vset.pattern.permute.xlu0 0
      %5404 = vperm.xlu0 %5403, %v4998
      %v5405 = vpop.permute.xlu0 %5404
      %5408 = vset.pattern.permute.xlu0 0
      %5409 = vperm.xlu0 %5408, %v4999
      %v5410 = vpop.permute.xlu0 %5409
      %5413 = vset.pattern.permute.xlu0 0
      %5414 = vperm.xlu0 %5413, %v5000
      %v5415 = vpop.permute.xlu0 %5414
      %5418 = vset.pattern.permute.xlu0 0
      %5419 = vperm.xlu0 %5418, %v5001
      %v5420 = vpop.permute.xlu0 %5419
      %5423 = vset.pattern.permute.xlu0 0
      %5424 = vperm.xlu0 %5423, %v5002
      %v5425 = vpop.permute.xlu0 %5424
      %5428 = vset.pattern.permute.xlu0 0
      %5429 = vperm.xlu0 %5428, %v5003
      %v5430 = vpop.permute.xlu0 %5429
      %5433 = vset.pattern.permute.xlu0 0
      %5434 = vperm.xlu0 %5433, %v5004
      %v5435 = vpop.permute.xlu0 %5434
      %5438 = vset.pattern.permute.xlu0 0
      %5439 = vperm.xlu0 %5438, %v5005
      %v5440 = vpop.permute.xlu0 %5439
      %5443 = vset.pattern.permute.xlu0 0
      %5444 = vperm.xlu0 %5443, %v5006
      %v5445 = vpop.permute.xlu0 %5444
      %5448 = vset.pattern.permute.xlu0 0
      %5449 = vperm.xlu0 %5448, %v5007
      %v5450 = vpop.permute.xlu0 %5449
      %5453 = vset.pattern.permute.xlu0 0
      %5454 = vperm.xlu0 %5453, %v5008
      %v5455 = vpop.permute.xlu0 %5454
      %5458 = vset.pattern.permute.xlu0 0
      %5459 = vperm.xlu0 %5458, %v5009
      %v5460 = vpop.permute.xlu0 %5459
      %5463 = vset.pattern.permute.xlu0 0
      %5464 = vperm.xlu0 %5463, %v5010
      %v5465 = vpop.permute.xlu0 %5464
      %5468 = vset.pattern.permute.xlu0 0
      %5469 = vperm.xlu0 %5468, %v5011
      %v5470 = vpop.permute.xlu0 %5469
      %5473 = vset.pattern.permute.xlu0 0
      %5474 = vperm.xlu0 %5473, %v5012
      %v5475 = vpop.permute.xlu0 %5474
      %5478 = vset.pattern.permute.xlu0 0
      %5479 = vperm.xlu0 %5478, %v5013
      %v5480 = vpop.permute.xlu0 %5479
      %5483 = vset.pattern.permute.xlu0 0
      %5484 = vperm.xlu0 %5483, %v5014
      %v5485 = vpop.permute.xlu0 %5484
      %5488 = vset.pattern.permute.xlu0 0
      %5489 = vperm.xlu0 %5488, %v5015
      %v5490 = vpop.permute.xlu0 %5489
      %5493 = vset.pattern.permute.xlu0 0
      %5494 = vperm.xlu0 %5493, %v5016
      %v5495 = vpop.permute.xlu0 %5494
      %5498 = vset.pattern.permute.xlu0 0
      %5499 = vperm.xlu0 %5498, %v5017
      %v5500 = vpop.permute.xlu0 %5499
      %5503 = vset.pattern.permute.xlu0 0
      %5504 = vperm.xlu0 %5503, %v5018
      %v5505 = vpop.permute.xlu0 %5504
      %5508 = vset.pattern.permute.xlu0 0
      %5509 = vperm.xlu0 %5508, %v5019
      %v5510 = vpop.permute.xlu0 %5509
      %5513 = vset.pattern.permute.xlu0 0
      %5514 = vperm.xlu0 %5513, %v5020
      %v5515 = vpop.permute.xlu0 %5514
      %5518 = vset.pattern.permute.xlu0 0
      %5519 = vperm.xlu0 %5518, %v5021
      %v5520 = vpop.permute.xlu0 %5519
      %5523 = vset.pattern.permute.xlu0 0
      %5524 = vperm.xlu0 %5523, %v5022
      %v5525 = vpop.permute.xlu0 %5524
      %5528 = vset.pattern.permute.xlu0 0
      %5529 = vperm.xlu0 %5528, %v5023
      %v5530 = vpop.permute.xlu0 %5529
      %5533 = vset.pattern.permute.xlu0 0
      %5534 = vperm.xlu0 %5533, %v5024
      %v5535 = vpop.permute.xlu0 %5534
      %5538 = vset.pattern.permute.xlu0 0
      %5539 = vperm.xlu0 %5538, %v5025
      %v5540 = vpop.permute.xlu0 %5539
      %5543 = vset.pattern.permute.xlu0 0
      %5544 = vperm.xlu0 %5543, %v5026
      %v5545 = vpop.permute.xlu0 %5544
      %5548 = vset.pattern.permute.xlu0 0
      %5549 = vperm.xlu0 %5548, %v5027
      %v5550 = vpop.permute.xlu0 %5549
      %5553 = vset.pattern.permute.xlu0 0
      %5554 = vperm.xlu0 %5553, %v5028
      %v5555 = vpop.permute.xlu0 %5554
      %5558 = vset.pattern.permute.xlu0 0
      %5559 = vperm.xlu0 %5558, %v5029
      %v5560 = vpop.permute.xlu0 %5559
      %5563 = vset.pattern.permute.xlu0 0
      %5564 = vperm.xlu0 %5563, %v5030
      %v5565 = vpop.permute.xlu0 %5564
      %5568 = vset.pattern.permute.xlu0 0
      %5569 = vperm.xlu0 %5568, %v5031
      %v5570 = vpop.permute.xlu0 %5569
      %5573 = vset.pattern.permute.xlu0 0
      %5574 = vperm.xlu0 %5573, %v5032
      %v5575 = vpop.permute.xlu0 %5574
      %5578 = vset.pattern.permute.xlu0 0
      %5579 = vperm.xlu0 %5578, %v5033
      %v5580 = vpop.permute.xlu0 %5579
      %5583 = vset.pattern.permute.xlu0 0
      %5584 = vperm.xlu0 %5583, %v5034
      %v5585 = vpop.permute.xlu0 %5584
      %5588 = vset.pattern.permute.xlu0 0
      %5589 = vperm.xlu0 %5588, %v5035
      %v5590 = vpop.permute.xlu0 %5589
      %5593 = vset.pattern.permute.xlu0 0
      %5594 = vperm.xlu0 %5593, %v5036
      %v5595 = vpop.permute.xlu0 %5594
      %5598 = vset.pattern.permute.xlu0 0
      %5599 = vperm.xlu0 %5598, %v5037
      %v5600 = vpop.permute.xlu0 %5599
      %5603 = vset.pattern.permute.xlu0 0
      %5604 = vperm.xlu0 %5603, %v5038
      %v5605 = vpop.permute.xlu0 %5604
      %5608 = vset.pattern.permute.xlu0 0
      %5609 = vperm.xlu0 %5608, %v5039
      %v5610 = vpop.permute.xlu0 %5609
      %5613 = vset.pattern.permute.xlu0 0
      %5614 = vperm.xlu0 %5613, %v5040
      %v5615 = vpop.permute.xlu0 %5614
      %5618 = vset.pattern.permute.xlu0 0
      %5619 = vperm.xlu0 %5618, %v5041
      %v5620 = vpop.permute.xlu0 %5619
      %5623 = vset.pattern.permute.xlu0 0
      %5624 = vperm.xlu0 %5623, %v5042
      %v5625 = vpop.permute.xlu0 %5624
      %5628 = vset.pattern.permute.xlu0 0
      %5629 = vperm.xlu0 %5628, %v5043
      %v5630 = vpop.permute.xlu0 %5629
      %5633 = vset.pattern.permute.xlu0 0
      %5634 = vperm.xlu0 %5633, %v5044
      %v5635 = vpop.permute.xlu0 %5634
      %5638 = vset.pattern.permute.xlu0 0
      %5639 = vperm.xlu0 %5638, %v5045
      %v5640 = vpop.permute.xlu0 %5639
      %5643 = vset.pattern.permute.xlu0 0
      %5644 = vperm.xlu0 %5643, %v5046
      %v5645 = vpop.permute.xlu0 %5644
      %5648 = vset.pattern.permute.xlu0 0
      %5649 = vperm.xlu0 %5648, %v5047
      %v5650 = vpop.permute.xlu0 %5649
      %5653 = vset.pattern.permute.xlu0 0
      %5654 = vperm.xlu0 %5653, %v5048
      %v5655 = vpop.permute.xlu0 %5654
      %5658 = vset.pattern.permute.xlu0 0
      %5659 = vperm.xlu0 %5658, %v5049
      %v5660 = vpop.permute.xlu0 %5659
      %5663 = vset.pattern.permute.xlu0 0
      %5664 = vperm.xlu0 %5663, %v5050
      %v5665 = vpop.permute.xlu0 %5664
      %5668 = vset.pattern.permute.xlu0 0
      %5669 = vperm.xlu0 %5668, %v5051
      %v5670 = vpop.permute.xlu0 %5669
      %5673 = vset.pattern.permute.xlu0 0
      %5674 = vperm.xlu0 %5673, %v5052
      %v5675 = vpop.permute.xlu0 %5674
      %5678 = vset.pattern.permute.xlu0 0
      %5679 = vperm.xlu0 %5678, %v5053
      %v5680 = vpop.permute.xlu0 %5679
      %5683 = vset.pattern.permute.xlu0 0
      %5684 = vperm.xlu0 %5683, %v5054
      %v5685 = vpop.permute.xlu0 %5684
      %5688 = vset.pattern.permute.xlu0 0
      %5689 = vperm.xlu0 %5688, %v5055
      %v5690 = vpop.permute.xlu0 %5689
      %5693 = vset.pattern.permute.xlu0 0
      %5694 = vperm.xlu0 %5693, %v5056
      %v5695 = vpop.permute.xlu0 %5694
      %v5697 = vmul.f32 %v2739, %v5060
      %v5698 = vmul.f32 %v2740, %v5065
      %v5699 = vmul.f32 %v2741, %v5070
      %v5700 = vmul.f32 %v2742, %v5075
      %v5701 = vmul.f32 %v2743, %v5080
      %v5702 = vmul.f32 %v2744, %v5085
      %v5703 = vmul.f32 %v2745, %v5090
      %v5704 = vmul.f32 %v2746, %v5095
      %v5705 = vmul.f32 %v2747, %v5100
      %v5706 = vmul.f32 %v2748, %v5105
      %v5707 = vmul.f32 %v2749, %v5110
      %v5708 = vmul.f32 %v2750, %v5115
      %v5709 = vmul.f32 %v2751, %v5120
      %v5710 = vmul.f32 %v2752, %v5125
      %v5711 = vmul.f32 %v2753, %v5130
      %v5712 = vmul.f32 %v2754, %v5135
      %v5713 = vmul.f32 %v2755, %v5140
      %v5714 = vmul.f32 %v2756, %v5145
      %v5715 = vmul.f32 %v2757, %v5150
      %v5716 = vmul.f32 %v2758, %v5155
      %v5717 = vmul.f32 %v2759, %v5160
      %v5718 = vmul.f32 %v2760, %v5165
      %v5719 = vmul.f32 %v2761, %v5170
      %v5720 = vmul.f32 %v2762, %v5175
      %v5721 = vmul.f32 %v2763, %v5180
      %v5722 = vmul.f32 %v2764, %v5185
      %v5723 = vmul.f32 %v2765, %v5190
      %v5724 = vmul.f32 %v2766, %v5195
      %v5725 = vmul.f32 %v2767, %v5200
      %v5726 = vmul.f32 %v2768, %v5205
      %v5727 = vmul.f32 %v2769, %v5210
      %v5728 = vmul.f32 %v2770, %v5215
      %v5729 = vmul.f32 %v2771, %v5220
      %v5730 = vmul.f32 %v2772, %v5225
      %v5731 = vmul.f32 %v2773, %v5230
      %v5732 = vmul.f32 %v2774, %v5235
      %v5733 = vmul.f32 %v2775, %v5240
      %v5734 = vmul.f32 %v2776, %v5245
      %v5735 = vmul.f32 %v2777, %v5250
      %v5736 = vmul.f32 %v2778, %v5255
      %v5737 = vmul.f32 %v2779, %v5260
      %v5738 = vmul.f32 %v2780, %v5265
      %v5739 = vmul.f32 %v2781, %v5270
      %v5740 = vmul.f32 %v2782, %v5275
      %v5741 = vmul.f32 %v2783, %v5280
      %v5742 = vmul.f32 %v2784, %v5285
      %v5743 = vmul.f32 %v2785, %v5290
      %v5744 = vmul.f32 %v2786, %v5295
      %v5745 = vmul.f32 %v2787, %v5300
      %v5746 = vmul.f32 %v2788, %v5305
      %v5747 = vmul.f32 %v2789, %v5310
      %v5748 = vmul.f32 %v2790, %v5315
      %v5749 = vmul.f32 %v2791, %v5320
      %v5750 = vmul.f32 %v2792, %v5325
      %v5751 = vmul.f32 %v2793, %v5330
      %v5752 = vmul.f32 %v2794, %v5335
      %v5753 = vmul.f32 %v2795, %v5340
      %v5754 = vmul.f32 %v2796, %v5345
      %v5755 = vmul.f32 %v2797, %v5350
      %v5756 = vmul.f32 %v2798, %v5355
      %v5757 = vmul.f32 %v2799, %v5360
      %v5758 = vmul.f32 %v2800, %v5365
      %v5759 = vmul.f32 %v2801, %v5370
      %v5760 = vmul.f32 %v2802, %v5375
      %v5761 = vmul.f32 %v2803, %v5380
      %v5762 = vmul.f32 %v2804, %v5385
      %v5763 = vmul.f32 %v2805, %v5390
      %v5764 = vmul.f32 %v2806, %v5395
      %v5765 = vmul.f32 %v2807, %v5400
      %v5766 = vmul.f32 %v2808, %v5405
      %v5767 = vmul.f32 %v2809, %v5410
      %v5768 = vmul.f32 %v2810, %v5415
      %v5769 = vmul.f32 %v2811, %v5420
      %v5770 = vmul.f32 %v2812, %v5425
      %v5771 = vmul.f32 %v2813, %v5430
      %v5772 = vmul.f32 %v2814, %v5435
      %v5773 = vmul.f32 %v2815, %v5440
      %v5774 = vmul.f32 %v2816, %v5445
      %v5775 = vmul.f32 %v2817, %v5450
      %v5776 = vmul.f32 %v2818, %v5455
      %v5777 = vmul.f32 %v2819, %v5460
      %v5778 = vmul.f32 %v2820, %v5465
      %v5779 = vmul.f32 %v2821, %v5470
      %v5780 = vmul.f32 %v2822, %v5475
      %v5781 = vmul.f32 %v2823, %v5480
      %v5782 = vmul.f32 %v2824, %v5485
      %v5783 = vmul.f32 %v2825, %v5490
      %v5784 = vmul.f32 %v2826, %v5495
      %v5785 = vmul.f32 %v2827, %v5500
      %v5786 = vmul.f32 %v2828, %v5505
      %v5787 = vmul.f32 %v2829, %v5510
      %v5788 = vmul.f32 %v2830, %v5515
      %v5789 = vmul.f32 %v2831, %v5520
      %v5790 = vmul.f32 %v2832, %v5525
      %v5791 = vmul.f32 %v2833, %v5530
      %v5792 = vmul.f32 %v2834, %v5535
      %v5793 = vmul.f32 %v2835, %v5540
      %v5794 = vmul.f32 %v2836, %v5545
      %v5795 = vmul.f32 %v2837, %v5550
      %v5796 = vmul.f32 %v2838, %v5555
      %v5797 = vmul.f32 %v2839, %v5560
      %v5798 = vmul.f32 %v2840, %v5565
      %v5799 = vmul.f32 %v2841, %v5570
      %v5800 = vmul.f32 %v2842, %v5575
      %v5801 = vmul.f32 %v2843, %v5580
      %v5802 = vmul.f32 %v2844, %v5585
      %v5803 = vmul.f32 %v2845, %v5590
      %v5804 = vmul.f32 %v2846, %v5595
      %v5805 = vmul.f32 %v2847, %v5600
      %v5806 = vmul.f32 %v2848, %v5605
      %v5807 = vmul.f32 %v2849, %v5610
      %v5808 = vmul.f32 %v2850, %v5615
      %v5809 = vmul.f32 %v2851, %v5620
      %v5810 = vmul.f32 %v2852, %v5625
      %v5811 = vmul.f32 %v2853, %v5630
      %v5812 = vmul.f32 %v2854, %v5635
      %v5813 = vmul.f32 %v2855, %v5640
      %v5814 = vmul.f32 %v2856, %v5645
      %v5815 = vmul.f32 %v2857, %v5650
      %v5816 = vmul.f32 %v2858, %v5655
      %v5817 = vmul.f32 %v2859, %v5660
      %v5818 = vmul.f32 %v2860, %v5665
      %v5819 = vmul.f32 %v2861, %v5670
      %v5820 = vmul.f32 %v2862, %v5675
      %v5821 = vmul.f32 %v2863, %v5680
      %v5822 = vmul.f32 %v2864, %v5685
      %v5823 = vmul.f32 %v2865, %v5690
      %v5824 = vmul.f32 %v2866, %v5695
      %v5825 = vadd.f32 %v5697, %v5698
      %v5826 = vrot.slane %v5825, 4
      %v5827 = vadd.f32 %v5825, %v5826
      %v5828 = vrot.slane %v5827, 2
      %v5829 = vadd.f32 %v5827, %v5828
      %v5830 = vrot.slane %v5829, 1
      %v5831 = vadd.f32 %v5829, %v5830
      %v5832 = vadd.f32 %v5699, %v5700
      %v5833 = vrot.slane %v5832, 4
      %v5834 = vadd.f32 %v5832, %v5833
      %v5835 = vrot.slane %v5834, 2
      %v5836 = vadd.f32 %v5834, %v5835
      %v5837 = vrot.slane %v5836, 1
      %v5838 = vadd.f32 %v5836, %v5837
      %v5839 = vadd.f32 %v5701, %v5702
      %v5840 = vrot.slane %v5839, 4
      %v5841 = vadd.f32 %v5839, %v5840
      %v5842 = vrot.slane %v5841, 2
      %v5843 = vadd.f32 %v5841, %v5842
      %v5844 = vrot.slane %v5843, 1
      %v5845 = vadd.f32 %v5843, %v5844
      %v5846 = vadd.f32 %v5703, %v5704
      %v5847 = vrot.slane %v5846, 4
      %v5848 = vadd.f32 %v5846, %v5847
      %v5849 = vrot.slane %v5848, 2
      %v5850 = vadd.f32 %v5848, %v5849
      %v5851 = vrot.slane %v5850, 1
      %v5852 = vadd.f32 %v5850, %v5851
      %v5853 = vadd.f32 %v5705, %v5706
      %v5854 = vrot.slane %v5853, 4
      %v5855 = vadd.f32 %v5853, %v5854
      %v5856 = vrot.slane %v5855, 2
      %v5857 = vadd.f32 %v5855, %v5856
      %v5858 = vrot.slane %v5857, 1
      %v5859 = vadd.f32 %v5857, %v5858
      %v5860 = vadd.f32 %v5707, %v5708
      %v5861 = vrot.slane %v5860, 4
      %v5862 = vadd.f32 %v5860, %v5861
      %v5863 = vrot.slane %v5862, 2
      %v5864 = vadd.f32 %v5862, %v5863
      %v5865 = vrot.slane %v5864, 1
      %v5866 = vadd.f32 %v5864, %v5865
      %v5867 = vadd.f32 %v5709, %v5710
      %v5868 = vrot.slane %v5867, 4
      %v5869 = vadd.f32 %v5867, %v5868
      %v5870 = vrot.slane %v5869, 2
      %v5871 = vadd.f32 %v5869, %v5870
      %v5872 = vrot.slane %v5871, 1
      %v5873 = vadd.f32 %v5871, %v5872
      %v5874 = vadd.f32 %v5711, %v5712
      %v5875 = vrot.slane %v5874, 4
      %v5876 = vadd.f32 %v5874, %v5875
      %v5877 = vrot.slane %v5876, 2
      %v5878 = vadd.f32 %v5876, %v5877
      %v5879 = vrot.slane %v5878, 1
      %v5880 = vadd.f32 %v5878, %v5879
      %v5881 = vadd.f32 %v5713, %v5714
      %v5882 = vrot.slane %v5881, 4
      %v5883 = vadd.f32 %v5881, %v5882
      %v5884 = vrot.slane %v5883, 2
      %v5885 = vadd.f32 %v5883, %v5884
      %v5886 = vrot.slane %v5885, 1
      %v5887 = vadd.f32 %v5885, %v5886
      %v5888 = vadd.f32 %v5715, %v5716
      %v5889 = vrot.slane %v5888, 4
      %v5890 = vadd.f32 %v5888, %v5889
      %v5891 = vrot.slane %v5890, 2
      %v5892 = vadd.f32 %v5890, %v5891
      %v5893 = vrot.slane %v5892, 1
      %v5894 = vadd.f32 %v5892, %v5893
      %v5895 = vadd.f32 %v5717, %v5718
      %v5896 = vrot.slane %v5895, 4
      %v5897 = vadd.f32 %v5895, %v5896
      %v5898 = vrot.slane %v5897, 2
      %v5899 = vadd.f32 %v5897, %v5898
      %v5900 = vrot.slane %v5899, 1
      %v5901 = vadd.f32 %v5899, %v5900
      %v5902 = vadd.f32 %v5719, %v5720
      %v5903 = vrot.slane %v5902, 4
      %v5904 = vadd.f32 %v5902, %v5903
      %v5905 = vrot.slane %v5904, 2
      %v5906 = vadd.f32 %v5904, %v5905
      %v5907 = vrot.slane %v5906, 1
      %v5908 = vadd.f32 %v5906, %v5907
      %v5909 = vadd.f32 %v5721, %v5722
      %v5910 = vrot.slane %v5909, 4
      %v5911 = vadd.f32 %v5909, %v5910
      %v5912 = vrot.slane %v5911, 2
      %v5913 = vadd.f32 %v5911, %v5912
      %v5914 = vrot.slane %v5913, 1
      %v5915 = vadd.f32 %v5913, %v5914
      %v5916 = vadd.f32 %v5723, %v5724
      %v5917 = vrot.slane %v5916, 4
      %v5918 = vadd.f32 %v5916, %v5917
      %v5919 = vrot.slane %v5918, 2
      %v5920 = vadd.f32 %v5918, %v5919
      %v5921 = vrot.slane %v5920, 1
      %v5922 = vadd.f32 %v5920, %v5921
      %v5923 = vadd.f32 %v5725, %v5726
      %v5924 = vrot.slane %v5923, 4
      %v5925 = vadd.f32 %v5923, %v5924
      %v5926 = vrot.slane %v5925, 2
      %v5927 = vadd.f32 %v5925, %v5926
      %v5928 = vrot.slane %v5927, 1
      %v5929 = vadd.f32 %v5927, %v5928
      %v5930 = vadd.f32 %v5727, %v5728
      %v5931 = vrot.slane %v5930, 4
      %v5932 = vadd.f32 %v5930, %v5931
      %v5933 = vrot.slane %v5932, 2
      %v5934 = vadd.f32 %v5932, %v5933
      %v5935 = vrot.slane %v5934, 1
      %v5936 = vadd.f32 %v5934, %v5935
      %v5937 = vadd.f32 %v5729, %v5730
      %v5938 = vrot.slane %v5937, 4
      %v5939 = vadd.f32 %v5937, %v5938
      %v5940 = vrot.slane %v5939, 2
      %v5941 = vadd.f32 %v5939, %v5940
      %v5942 = vrot.slane %v5941, 1
      %v5943 = vadd.f32 %v5941, %v5942
      %v5944 = vadd.f32 %v5731, %v5732
      %v5945 = vrot.slane %v5944, 4
      %v5946 = vadd.f32 %v5944, %v5945
      %v5947 = vrot.slane %v5946, 2
      %v5948 = vadd.f32 %v5946, %v5947
      %v5949 = vrot.slane %v5948, 1
      %v5950 = vadd.f32 %v5948, %v5949
      %v5951 = vadd.f32 %v5733, %v5734
      %v5952 = vrot.slane %v5951, 4
      %v5953 = vadd.f32 %v5951, %v5952
      %v5954 = vrot.slane %v5953, 2
      %v5955 = vadd.f32 %v5953, %v5954
      %v5956 = vrot.slane %v5955, 1
      %v5957 = vadd.f32 %v5955, %v5956
      %v5958 = vadd.f32 %v5735, %v5736
      %v5959 = vrot.slane %v5958, 4
      %v5960 = vadd.f32 %v5958, %v5959
      %v5961 = vrot.slane %v5960, 2
      %v5962 = vadd.f32 %v5960, %v5961
      %v5963 = vrot.slane %v5962, 1
      %v5964 = vadd.f32 %v5962, %v5963
      %v5965 = vadd.f32 %v5737, %v5738
      %v5966 = vrot.slane %v5965, 4
      %v5967 = vadd.f32 %v5965, %v5966
      %v5968 = vrot.slane %v5967, 2
      %v5969 = vadd.f32 %v5967, %v5968
      %v5970 = vrot.slane %v5969, 1
      %v5971 = vadd.f32 %v5969, %v5970
      %v5972 = vadd.f32 %v5739, %v5740
      %v5973 = vrot.slane %v5972, 4
      %v5974 = vadd.f32 %v5972, %v5973
      %v5975 = vrot.slane %v5974, 2
      %v5976 = vadd.f32 %v5974, %v5975
      %v5977 = vrot.slane %v5976, 1
      %v5978 = vadd.f32 %v5976, %v5977
      %v5979 = vadd.f32 %v5741, %v5742
      %v5980 = vrot.slane %v5979, 4
      %v5981 = vadd.f32 %v5979, %v5980
      %v5982 = vrot.slane %v5981, 2
      %v5983 = vadd.f32 %v5981, %v5982
      %v5984 = vrot.slane %v5983, 1
      %v5985 = vadd.f32 %v5983, %v5984
      %v5986 = vadd.f32 %v5743, %v5744
      %v5987 = vrot.slane %v5986, 4
      %v5988 = vadd.f32 %v5986, %v5987
      %v5989 = vrot.slane %v5988, 2
      %v5990 = vadd.f32 %v5988, %v5989
      %v5991 = vrot.slane %v5990, 1
      %v5992 = vadd.f32 %v5990, %v5991
      %v5993 = vadd.f32 %v5745, %v5746
      %v5994 = vrot.slane %v5993, 4
      %v5995 = vadd.f32 %v5993, %v5994
      %v5996 = vrot.slane %v5995, 2
      %v5997 = vadd.f32 %v5995, %v5996
      %v5998 = vrot.slane %v5997, 1
      %v5999 = vadd.f32 %v5997, %v5998
      %v6000 = vadd.f32 %v5747, %v5748
      %v6001 = vrot.slane %v6000, 4
      %v6002 = vadd.f32 %v6000, %v6001
      %v6003 = vrot.slane %v6002, 2
      %v6004 = vadd.f32 %v6002, %v6003
      %v6005 = vrot.slane %v6004, 1
      %v6006 = vadd.f32 %v6004, %v6005
      %v6007 = vadd.f32 %v5749, %v5750
      %v6008 = vrot.slane %v6007, 4
      %v6009 = vadd.f32 %v6007, %v6008
      %v6010 = vrot.slane %v6009, 2
      %v6011 = vadd.f32 %v6009, %v6010
      %v6012 = vrot.slane %v6011, 1
      %v6013 = vadd.f32 %v6011, %v6012
      %v6014 = vadd.f32 %v5751, %v5752
      %v6015 = vrot.slane %v6014, 4
      %v6016 = vadd.f32 %v6014, %v6015
      %v6017 = vrot.slane %v6016, 2
      %v6018 = vadd.f32 %v6016, %v6017
      %v6019 = vrot.slane %v6018, 1
      %v6020 = vadd.f32 %v6018, %v6019
      %v6021 = vadd.f32 %v5753, %v5754
      %v6022 = vrot.slane %v6021, 4
      %v6023 = vadd.f32 %v6021, %v6022
      %v6024 = vrot.slane %v6023, 2
      %v6025 = vadd.f32 %v6023, %v6024
      %v6026 = vrot.slane %v6025, 1
      %v6027 = vadd.f32 %v6025, %v6026
      %v6028 = vadd.f32 %v5755, %v5756
      %v6029 = vrot.slane %v6028, 4
      %v6030 = vadd.f32 %v6028, %v6029
      %v6031 = vrot.slane %v6030, 2
      %v6032 = vadd.f32 %v6030, %v6031
      %v6033 = vrot.slane %v6032, 1
      %v6034 = vadd.f32 %v6032, %v6033
      %v6035 = vadd.f32 %v5757, %v5758
      %v6036 = vrot.slane %v6035, 4
      %v6037 = vadd.f32 %v6035, %v6036
      %v6038 = vrot.slane %v6037, 2
      %v6039 = vadd.f32 %v6037, %v6038
      %v6040 = vrot.slane %v6039, 1
      %v6041 = vadd.f32 %v6039, %v6040
      %v6042 = vadd.f32 %v5759, %v5760
      %v6043 = vrot.slane %v6042, 4
      %v6044 = vadd.f32 %v6042, %v6043
      %v6045 = vrot.slane %v6044, 2
      %v6046 = vadd.f32 %v6044, %v6045
      %v6047 = vrot.slane %v6046, 1
      %v6048 = vadd.f32 %v6046, %v6047
      %v6049 = vadd.f32 %v5761, %v5762
      %v6050 = vrot.slane %v6049, 4
      %v6051 = vadd.f32 %v6049, %v6050
      %v6052 = vrot.slane %v6051, 2
      %v6053 = vadd.f32 %v6051, %v6052
      %v6054 = vrot.slane %v6053, 1
      %v6055 = vadd.f32 %v6053, %v6054
      %v6056 = vadd.f32 %v5763, %v5764
      %v6057 = vrot.slane %v6056, 4
      %v6058 = vadd.f32 %v6056, %v6057
      %v6059 = vrot.slane %v6058, 2
      %v6060 = vadd.f32 %v6058, %v6059
      %v6061 = vrot.slane %v6060, 1
      %v6062 = vadd.f32 %v6060, %v6061
      %v6063 = vadd.f32 %v5765, %v5766
      %v6064 = vrot.slane %v6063, 4
      %v6065 = vadd.f32 %v6063, %v6064
      %v6066 = vrot.slane %v6065, 2
      %v6067 = vadd.f32 %v6065, %v6066
      %v6068 = vrot.slane %v6067, 1
      %v6069 = vadd.f32 %v6067, %v6068
      %v6070 = vadd.f32 %v5767, %v5768
      %v6071 = vrot.slane %v6070, 4
      %v6072 = vadd.f32 %v6070, %v6071
      %v6073 = vrot.slane %v6072, 2
      %v6074 = vadd.f32 %v6072, %v6073
      %v6075 = vrot.slane %v6074, 1
      %v6076 = vadd.f32 %v6074, %v6075
      %v6077 = vadd.f32 %v5769, %v5770
      %v6078 = vrot.slane %v6077, 4
      %v6079 = vadd.f32 %v6077, %v6078
      %v6080 = vrot.slane %v6079, 2
      %v6081 = vadd.f32 %v6079, %v6080
      %v6082 = vrot.slane %v6081, 1
      %v6083 = vadd.f32 %v6081, %v6082
      %v6084 = vadd.f32 %v5771, %v5772
      %v6085 = vrot.slane %v6084, 4
      %v6086 = vadd.f32 %v6084, %v6085
      %v6087 = vrot.slane %v6086, 2
      %v6088 = vadd.f32 %v6086, %v6087
      %v6089 = vrot.slane %v6088, 1
      %v6090 = vadd.f32 %v6088, %v6089
      %v6091 = vadd.f32 %v5773, %v5774
      %v6092 = vrot.slane %v6091, 4
      %v6093 = vadd.f32 %v6091, %v6092
      %v6094 = vrot.slane %v6093, 2
      %v6095 = vadd.f32 %v6093, %v6094
      %v6096 = vrot.slane %v6095, 1
      %v6097 = vadd.f32 %v6095, %v6096
      %v6098 = vadd.f32 %v5775, %v5776
      %v6099 = vrot.slane %v6098, 4
      %v6100 = vadd.f32 %v6098, %v6099
      %v6101 = vrot.slane %v6100, 2
      %v6102 = vadd.f32 %v6100, %v6101
      %v6103 = vrot.slane %v6102, 1
      %v6104 = vadd.f32 %v6102, %v6103
      %v6105 = vadd.f32 %v5777, %v5778
      %v6106 = vrot.slane %v6105, 4
      %v6107 = vadd.f32 %v6105, %v6106
      %v6108 = vrot.slane %v6107, 2
      %v6109 = vadd.f32 %v6107, %v6108
      %v6110 = vrot.slane %v6109, 1
      %v6111 = vadd.f32 %v6109, %v6110
      %v6112 = vadd.f32 %v5779, %v5780
      %v6113 = vrot.slane %v6112, 4
      %v6114 = vadd.f32 %v6112, %v6113
      %v6115 = vrot.slane %v6114, 2
      %v6116 = vadd.f32 %v6114, %v6115
      %v6117 = vrot.slane %v6116, 1
      %v6118 = vadd.f32 %v6116, %v6117
      %v6119 = vadd.f32 %v5781, %v5782
      %v6120 = vrot.slane %v6119, 4
      %v6121 = vadd.f32 %v6119, %v6120
      %v6122 = vrot.slane %v6121, 2
      %v6123 = vadd.f32 %v6121, %v6122
      %v6124 = vrot.slane %v6123, 1
      %v6125 = vadd.f32 %v6123, %v6124
      %v6126 = vadd.f32 %v5783, %v5784
      %v6127 = vrot.slane %v6126, 4
      %v6128 = vadd.f32 %v6126, %v6127
      %v6129 = vrot.slane %v6128, 2
      %v6130 = vadd.f32 %v6128, %v6129
      %v6131 = vrot.slane %v6130, 1
      %v6132 = vadd.f32 %v6130, %v6131
      %v6133 = vadd.f32 %v5785, %v5786
      %v6134 = vrot.slane %v6133, 4
      %v6135 = vadd.f32 %v6133, %v6134
      %v6136 = vrot.slane %v6135, 2
      %v6137 = vadd.f32 %v6135, %v6136
      %v6138 = vrot.slane %v6137, 1
      %v6139 = vadd.f32 %v6137, %v6138
      %v6140 = vadd.f32 %v5787, %v5788
      %v6141 = vrot.slane %v6140, 4
      %v6142 = vadd.f32 %v6140, %v6141
      %v6143 = vrot.slane %v6142, 2
      %v6144 = vadd.f32 %v6142, %v6143
      %v6145 = vrot.slane %v6144, 1
      %v6146 = vadd.f32 %v6144, %v6145
      %v6147 = vadd.f32 %v5789, %v5790
      %v6148 = vrot.slane %v6147, 4
      %v6149 = vadd.f32 %v6147, %v6148
      %v6150 = vrot.slane %v6149, 2
      %v6151 = vadd.f32 %v6149, %v6150
      %v6152 = vrot.slane %v6151, 1
      %v6153 = vadd.f32 %v6151, %v6152
      %v6154 = vadd.f32 %v5791, %v5792
      %v6155 = vrot.slane %v6154, 4
      %v6156 = vadd.f32 %v6154, %v6155
      %v6157 = vrot.slane %v6156, 2
      %v6158 = vadd.f32 %v6156, %v6157
      %v6159 = vrot.slane %v6158, 1
      %v6160 = vadd.f32 %v6158, %v6159
      %v6161 = vadd.f32 %v5793, %v5794
      %v6162 = vrot.slane %v6161, 4
      %v6163 = vadd.f32 %v6161, %v6162
      %v6164 = vrot.slane %v6163, 2
      %v6165 = vadd.f32 %v6163, %v6164
      %v6166 = vrot.slane %v6165, 1
      %v6167 = vadd.f32 %v6165, %v6166
      %v6168 = vadd.f32 %v5795, %v5796
      %v6169 = vrot.slane %v6168, 4
      %v6170 = vadd.f32 %v6168, %v6169
      %v6171 = vrot.slane %v6170, 2
      %v6172 = vadd.f32 %v6170, %v6171
      %v6173 = vrot.slane %v6172, 1
      %v6174 = vadd.f32 %v6172, %v6173
      %v6175 = vadd.f32 %v5797, %v5798
      %v6176 = vrot.slane %v6175, 4
      %v6177 = vadd.f32 %v6175, %v6176
      %v6178 = vrot.slane %v6177, 2
      %v6179 = vadd.f32 %v6177, %v6178
      %v6180 = vrot.slane %v6179, 1
      %v6181 = vadd.f32 %v6179, %v6180
      %v6182 = vadd.f32 %v5799, %v5800
      %v6183 = vrot.slane %v6182, 4
      %v6184 = vadd.f32 %v6182, %v6183
      %v6185 = vrot.slane %v6184, 2
      %v6186 = vadd.f32 %v6184, %v6185
      %v6187 = vrot.slane %v6186, 1
      %v6188 = vadd.f32 %v6186, %v6187
      %v6189 = vadd.f32 %v5801, %v5802
      %v6190 = vrot.slane %v6189, 4
      %v6191 = vadd.f32 %v6189, %v6190
      %v6192 = vrot.slane %v6191, 2
      %v6193 = vadd.f32 %v6191, %v6192
      %v6194 = vrot.slane %v6193, 1
      %v6195 = vadd.f32 %v6193, %v6194
      %v6196 = vadd.f32 %v5803, %v5804
      %v6197 = vrot.slane %v6196, 4
      %v6198 = vadd.f32 %v6196, %v6197
      %v6199 = vrot.slane %v6198, 2
      %v6200 = vadd.f32 %v6198, %v6199
      %v6201 = vrot.slane %v6200, 1
      %v6202 = vadd.f32 %v6200, %v6201
      %v6203 = vadd.f32 %v5805, %v5806
      %v6204 = vrot.slane %v6203, 4
      %v6205 = vadd.f32 %v6203, %v6204
      %v6206 = vrot.slane %v6205, 2
      %v6207 = vadd.f32 %v6205, %v6206
      %v6208 = vrot.slane %v6207, 1
      %v6209 = vadd.f32 %v6207, %v6208
      %v6210 = vadd.f32 %v5807, %v5808
      %v6211 = vrot.slane %v6210, 4
      %v6212 = vadd.f32 %v6210, %v6211
      %v6213 = vrot.slane %v6212, 2
      %v6214 = vadd.f32 %v6212, %v6213
      %v6215 = vrot.slane %v6214, 1
      %v6216 = vadd.f32 %v6214, %v6215
      %v6217 = vadd.f32 %v5809, %v5810
      %v6218 = vrot.slane %v6217, 4
      %v6219 = vadd.f32 %v6217, %v6218
      %v6220 = vrot.slane %v6219, 2
      %v6221 = vadd.f32 %v6219, %v6220
      %v6222 = vrot.slane %v6221, 1
      %v6223 = vadd.f32 %v6221, %v6222
      %v6224 = vadd.f32 %v5811, %v5812
      %v6225 = vrot.slane %v6224, 4
      %v6226 = vadd.f32 %v6224, %v6225
      %v6227 = vrot.slane %v6226, 2
      %v6228 = vadd.f32 %v6226, %v6227
      %v6229 = vrot.slane %v6228, 1
      %v6230 = vadd.f32 %v6228, %v6229
      %v6231 = vadd.f32 %v5813, %v5814
      %v6232 = vrot.slane %v6231, 4
      %v6233 = vadd.f32 %v6231, %v6232
      %v6234 = vrot.slane %v6233, 2
      %v6235 = vadd.f32 %v6233, %v6234
      %v6236 = vrot.slane %v6235, 1
      %v6237 = vadd.f32 %v6235, %v6236
      %v6238 = vadd.f32 %v5815, %v5816
      %v6239 = vrot.slane %v6238, 4
      %v6240 = vadd.f32 %v6238, %v6239
      %v6241 = vrot.slane %v6240, 2
      %v6242 = vadd.f32 %v6240, %v6241
      %v6243 = vrot.slane %v6242, 1
      %v6244 = vadd.f32 %v6242, %v6243
      %v6245 = vadd.f32 %v5817, %v5818
      %v6246 = vrot.slane %v6245, 4
      %v6247 = vadd.f32 %v6245, %v6246
      %v6248 = vrot.slane %v6247, 2
      %v6249 = vadd.f32 %v6247, %v6248
      %v6250 = vrot.slane %v6249, 1
      %v6251 = vadd.f32 %v6249, %v6250
      %v6252 = vadd.f32 %v5819, %v5820
      %v6253 = vrot.slane %v6252, 4
      %v6254 = vadd.f32 %v6252, %v6253
      %v6255 = vrot.slane %v6254, 2
      %v6256 = vadd.f32 %v6254, %v6255
      %v6257 = vrot.slane %v6256, 1
      %v6258 = vadd.f32 %v6256, %v6257
      %v6259 = vadd.f32 %v5821, %v5822
      %v6260 = vrot.slane %v6259, 4
      %v6261 = vadd.f32 %v6259, %v6260
      %v6262 = vrot.slane %v6261, 2
      %v6263 = vadd.f32 %v6261, %v6262
      %v6264 = vrot.slane %v6263, 1
      %v6265 = vadd.f32 %v6263, %v6264
      %v6266 = vadd.f32 %v5823, %v5824
      %v6267 = vrot.slane %v6266, 4
      %v6268 = vadd.f32 %v6266, %v6267
      %v6269 = vrot.slane %v6268, 2
      %v6270 = vadd.f32 %v6268, %v6269
      %v6271 = vrot.slane %v6270, 1
      %v6272 = vadd.f32 %v6270, %v6271
      %v6273 = vpack.c.bf16 %v5831, %v5831
      %v6274 = vpack.c.bf16 %v5838, %v5838
      %v6275 = vpack.c.bf16 %v5845, %v5845
      %v6276 = vpack.c.bf16 %v5852, %v5852
      %v6277 = vpack.c.bf16 %v5859, %v5859
      %v6278 = vpack.c.bf16 %v5866, %v5866
      %v6279 = vpack.c.bf16 %v5873, %v5873
      %v6280 = vpack.c.bf16 %v5880, %v5880
      %v6281 = vpack.c.bf16 %v5887, %v5887
      %v6282 = vpack.c.bf16 %v5894, %v5894
      %v6283 = vpack.c.bf16 %v5901, %v5901
      %v6284 = vpack.c.bf16 %v5908, %v5908
      %v6285 = vpack.c.bf16 %v5915, %v5915
      %v6286 = vpack.c.bf16 %v5922, %v5922
      %v6287 = vpack.c.bf16 %v5929, %v5929
      %v6288 = vpack.c.bf16 %v5936, %v5936
      %v6289 = vpack.c.bf16 %v5943, %v5943
      %v6290 = vpack.c.bf16 %v5950, %v5950
      %v6291 = vpack.c.bf16 %v5957, %v5957
      %v6292 = vpack.c.bf16 %v5964, %v5964
      %v6293 = vpack.c.bf16 %v5971, %v5971
      %v6294 = vpack.c.bf16 %v5978, %v5978
      %v6295 = vpack.c.bf16 %v5985, %v5985
      %v6296 = vpack.c.bf16 %v5992, %v5992
      %v6297 = vpack.c.bf16 %v5999, %v5999
      %v6298 = vpack.c.bf16 %v6006, %v6006
      %v6299 = vpack.c.bf16 %v6013, %v6013
      %v6300 = vpack.c.bf16 %v6020, %v6020
      %v6301 = vpack.c.bf16 %v6027, %v6027
      %v6302 = vpack.c.bf16 %v6034, %v6034
      %v6303 = vpack.c.bf16 %v6041, %v6041
      %v6304 = vpack.c.bf16 %v6048, %v6048
      %v6305 = vpack.c.bf16 %v6055, %v6055
      %v6306 = vpack.c.bf16 %v6062, %v6062
      %v6307 = vpack.c.bf16 %v6069, %v6069
      %v6308 = vpack.c.bf16 %v6076, %v6076
      %v6309 = vpack.c.bf16 %v6083, %v6083
      %v6310 = vpack.c.bf16 %v6090, %v6090
      %v6311 = vpack.c.bf16 %v6097, %v6097
      %v6312 = vpack.c.bf16 %v6104, %v6104
      %v6313 = vpack.c.bf16 %v6111, %v6111
      %v6314 = vpack.c.bf16 %v6118, %v6118
      %v6315 = vpack.c.bf16 %v6125, %v6125
      %v6316 = vpack.c.bf16 %v6132, %v6132
      %v6317 = vpack.c.bf16 %v6139, %v6139
      %v6318 = vpack.c.bf16 %v6146, %v6146
      %v6319 = vpack.c.bf16 %v6153, %v6153
      %v6320 = vpack.c.bf16 %v6160, %v6160
      %v6321 = vpack.c.bf16 %v6167, %v6167
      %v6322 = vpack.c.bf16 %v6174, %v6174
      %v6323 = vpack.c.bf16 %v6181, %v6181
      %v6324 = vpack.c.bf16 %v6188, %v6188
      %v6325 = vpack.c.bf16 %v6195, %v6195
      %v6326 = vpack.c.bf16 %v6202, %v6202
      %v6327 = vpack.c.bf16 %v6209, %v6209
      %v6328 = vpack.c.bf16 %v6216, %v6216
      %v6329 = vpack.c.bf16 %v6223, %v6223
      %v6330 = vpack.c.bf16 %v6230, %v6230
      %v6331 = vpack.c.bf16 %v6237, %v6237
      %v6332 = vpack.c.bf16 %v6244, %v6244
      %v6333 = vpack.c.bf16 %v6251, %v6251
      %v6334 = vpack.c.bf16 %v6258, %v6258
      %v6335 = vpack.c.bf16 %v6265, %v6265
      %v6336 = vpack.c.bf16 %v6272, %v6272
      %v6401 = vunpack.c.l.b16 %v6273
      %v6402 = vunpack.c.l.b16 %v6274
      %v6403 = vunpack.c.l.b16 %v6275
      %v6404 = vunpack.c.l.b16 %v6276
      %v6405 = vunpack.c.l.b16 %v6277
      %v6406 = vunpack.c.l.b16 %v6278
      %v6407 = vunpack.c.l.b16 %v6279
      %v6408 = vunpack.c.l.b16 %v6280
      %v6409 = vunpack.c.l.b16 %v6281
      %v6410 = vunpack.c.l.b16 %v6282
      %v6411 = vunpack.c.l.b16 %v6283
      %v6412 = vunpack.c.l.b16 %v6284
      %v6413 = vunpack.c.l.b16 %v6285
      %v6414 = vunpack.c.l.b16 %v6286
      %v6415 = vunpack.c.l.b16 %v6287
      %v6416 = vunpack.c.l.b16 %v6288
      %v6417 = vunpack.c.l.b16 %v6289
      %v6418 = vunpack.c.l.b16 %v6290
      %v6419 = vunpack.c.l.b16 %v6291
      %v6420 = vunpack.c.l.b16 %v6292
      %v6421 = vunpack.c.l.b16 %v6293
      %v6422 = vunpack.c.l.b16 %v6294
      %v6423 = vunpack.c.l.b16 %v6295
      %v6424 = vunpack.c.l.b16 %v6296
      %v6425 = vunpack.c.l.b16 %v6297
      %v6426 = vunpack.c.l.b16 %v6298
      %v6427 = vunpack.c.l.b16 %v6299
      %v6428 = vunpack.c.l.b16 %v6300
      %v6429 = vunpack.c.l.b16 %v6301
      %v6430 = vunpack.c.l.b16 %v6302
      %v6431 = vunpack.c.l.b16 %v6303
      %v6432 = vunpack.c.l.b16 %v6304
      %v6433 = vunpack.c.l.b16 %v6305
      %v6434 = vunpack.c.l.b16 %v6306
      %v6435 = vunpack.c.l.b16 %v6307
      %v6436 = vunpack.c.l.b16 %v6308
      %v6437 = vunpack.c.l.b16 %v6309
      %v6438 = vunpack.c.l.b16 %v6310
      %v6439 = vunpack.c.l.b16 %v6311
      %v6440 = vunpack.c.l.b16 %v6312
      %v6441 = vunpack.c.l.b16 %v6313
      %v6442 = vunpack.c.l.b16 %v6314
      %v6443 = vunpack.c.l.b16 %v6315
      %v6444 = vunpack.c.l.b16 %v6316
      %v6445 = vunpack.c.l.b16 %v6317
      %v6446 = vunpack.c.l.b16 %v6318
      %v6447 = vunpack.c.l.b16 %v6319
      %v6448 = vunpack.c.l.b16 %v6320
      %v6449 = vunpack.c.l.b16 %v6321
      %v6450 = vunpack.c.l.b16 %v6322
      %v6451 = vunpack.c.l.b16 %v6323
      %v6452 = vunpack.c.l.b16 %v6324
      %v6453 = vunpack.c.l.b16 %v6325
      %v6454 = vunpack.c.l.b16 %v6326
      %v6455 = vunpack.c.l.b16 %v6327
      %v6456 = vunpack.c.l.b16 %v6328
      %v6457 = vunpack.c.l.b16 %v6329
      %v6458 = vunpack.c.l.b16 %v6330
      %v6459 = vunpack.c.l.b16 %v6331
      %v6460 = vunpack.c.l.b16 %v6332
      %v6461 = vunpack.c.l.b16 %v6333
      %v6462 = vunpack.c.l.b16 %v6334
      %v6463 = vunpack.c.l.b16 %v6335
      %v6464 = vunpack.c.l.b16 %v6336
      %vm6465 = vcmask 1041409
      %v6466 = vsel %vm6465, %v6402, %v6401
      %vm6467 = vcmask 1042434
      %v6468 = vsel %vm6467, %v6403, %v6466
      %vm6469 = vcmask 1043459
      %v6470 = vsel %vm6469, %v6404, %v6468
      %vm6471 = vcmask 1044484
      %v6472 = vsel %vm6471, %v6405, %v6470
      %vm6473 = vcmask 1045509
      %v6474 = vsel %vm6473, %v6406, %v6472
      %vm6475 = vcmask 1046534
      %v6476 = vsel %vm6475, %v6407, %v6474
      %vm6477 = vcmask 1047559
      %v6478 = vsel %vm6477, %v6408, %v6476
      %v6479 = vsel %vm6465, %v6410, %v6409
      %v6480 = vsel %vm6467, %v6411, %v6479
      %v6481 = vsel %vm6469, %v6412, %v6480
      %v6482 = vsel %vm6471, %v6413, %v6481
      %v6483 = vsel %vm6473, %v6414, %v6482
      %v6484 = vsel %vm6475, %v6415, %v6483
      %v6485 = vsel %vm6477, %v6416, %v6484
      %v6486 = vsel %vm6465, %v6418, %v6417
      %v6487 = vsel %vm6467, %v6419, %v6486
      %v6488 = vsel %vm6469, %v6420, %v6487
      %v6489 = vsel %vm6471, %v6421, %v6488
      %v6490 = vsel %vm6473, %v6422, %v6489
      %v6491 = vsel %vm6475, %v6423, %v6490
      %v6492 = vsel %vm6477, %v6424, %v6491
      %v6493 = vsel %vm6465, %v6426, %v6425
      %v6494 = vsel %vm6467, %v6427, %v6493
      %v6495 = vsel %vm6469, %v6428, %v6494
      %v6496 = vsel %vm6471, %v6429, %v6495
      %v6497 = vsel %vm6473, %v6430, %v6496
      %v6498 = vsel %vm6475, %v6431, %v6497
      %v6499 = vsel %vm6477, %v6432, %v6498
      %v6500 = vsel %vm6465, %v6434, %v6433
      %v6501 = vsel %vm6467, %v6435, %v6500
      %v6502 = vsel %vm6469, %v6436, %v6501
      %v6503 = vsel %vm6471, %v6437, %v6502
      %v6504 = vsel %vm6473, %v6438, %v6503
      %v6505 = vsel %vm6475, %v6439, %v6504
      %v6506 = vsel %vm6477, %v6440, %v6505
      %v6507 = vsel %vm6465, %v6442, %v6441
      %v6508 = vsel %vm6467, %v6443, %v6507
      %v6509 = vsel %vm6469, %v6444, %v6508
      %v6510 = vsel %vm6471, %v6445, %v6509
      %v6511 = vsel %vm6473, %v6446, %v6510
      %v6512 = vsel %vm6475, %v6447, %v6511
      %v6513 = vsel %vm6477, %v6448, %v6512
      %v6514 = vsel %vm6465, %v6450, %v6449
      %v6515 = vsel %vm6467, %v6451, %v6514
      %v6516 = vsel %vm6469, %v6452, %v6515
      %v6517 = vsel %vm6471, %v6453, %v6516
      %v6518 = vsel %vm6473, %v6454, %v6517
      %v6519 = vsel %vm6475, %v6455, %v6518
      %v6520 = vsel %vm6477, %v6456, %v6519
      %v6521 = vsel %vm6465, %v6458, %v6457
      %v6522 = vsel %vm6467, %v6459, %v6521
      %v6523 = vsel %vm6469, %v6460, %v6522
      %v6524 = vsel %vm6471, %v6461, %v6523
      %v6525 = vsel %vm6473, %v6462, %v6524
      %v6526 = vsel %vm6475, %v6463, %v6525
      %v6527 = vsel %vm6477, %v6464, %v6526
      %v6528 = vpack.c.b16 %v6485, %v6478
      %v6529 = vpack.c.b16 %v6499, %v6492
      %v6530 = vpack.c.b16 %v6513, %v6506
      %v6531 = vpack.c.b16 %v6527, %v6520
      %v6536 = vld [vmem:[%s9] sm:$0xf]
      %v6537 = vld [vmem:[%s9 + $0x4] sm:$0xf]
      %v6538 = vld [vmem:[%s9 + $0x8] sm:$0xf]
      %v6539 = vld [vmem:[%s9 + $0xc] sm:$0xf]
      %v6540 = vld [vmem:[%s9 + $0x10] sm:$0xf]
      %v6541 = vld [vmem:[%s9 + $0x14] sm:$0xf]
      %v6542 = vld [vmem:[%s9 + $0x18] sm:$0xf]
      %v6543 = vld [vmem:[%s9 + $0x1c] sm:$0xf]
      %v6544 = vld [vmem:[%s9 + $0x20] sm:$0xf]
      %v6545 = vld [vmem:[%s9 + $0x24] sm:$0xf]
      %v6546 = vld [vmem:[%s9 + $0x28] sm:$0xf]
      %v6547 = vld [vmem:[%s9 + $0x2c] sm:$0xf]
      %v6548 = vld [vmem:[%s9 + $0x30] sm:$0xf]
      %v6549 = vld [vmem:[%s9 + $0x34] sm:$0xf]
      %v6550 = vld [vmem:[%s9 + $0x38] sm:$0xf]
      %v6551 = vld [vmem:[%s9 + $0x3c] sm:$0xf]
      %v6552 = vld [vmem:[%s9 + $0x40] sm:$0xf]
      %v6553 = vld [vmem:[%s9 + $0x44] sm:$0xf]
      %v6554 = vld [vmem:[%s9 + $0x48] sm:$0xf]
      %v6555 = vld [vmem:[%s9 + $0x4c] sm:$0xf]
      %v6556 = vld [vmem:[%s9 + $0x50] sm:$0xf]
      %v6557 = vld [vmem:[%s9 + $0x54] sm:$0xf]
      %v6558 = vld [vmem:[%s9 + $0x58] sm:$0xf]
      %v6559 = vld [vmem:[%s9 + $0x5c] sm:$0xf]
      %v6560 = vld [vmem:[%s9 + $0x60] sm:$0xf]
      %v6561 = vld [vmem:[%s9 + $0x64] sm:$0xf]
      %v6562 = vld [vmem:[%s9 + $0x68] sm:$0xf]
      %v6563 = vld [vmem:[%s9 + $0x6c] sm:$0xf]
      %v6564 = vld [vmem:[%s9 + $0x70] sm:$0xf]
      %v6565 = vld [vmem:[%s9 + $0x74] sm:$0xf]
      %v6566 = vld [vmem:[%s9 + $0x78] sm:$0xf]
      %v6567 = vld [vmem:[%s9 + $0x7c] sm:$0xf]
      %v6568 = vld [vmem:[%s10] sm:$0x1]
      %v6570 = vlaneseq
      %v6571 = vshrl.u32 %v6570, 7
      %v6572 = vsub.s32 0, %v6571
      %v6573 = vrot.slane %v6568, %v6572
      %v6607 = vunpack.c.l.b16 %v6536
      %v6608 = vunpack.c.l.b16 %v6537
      %v6609 = vunpack.c.l.b16 %v6538
      %v6610 = vunpack.c.l.b16 %v6539
      %v6611 = vunpack.c.l.b16 %v6540
      %v6612 = vunpack.c.l.b16 %v6541
      %v6613 = vunpack.c.l.b16 %v6542
      %v6614 = vunpack.c.l.b16 %v6543
      %v6615 = vunpack.c.l.b16 %v6544
      %v6616 = vunpack.c.l.b16 %v6545
      %v6617 = vunpack.c.l.b16 %v6546
      %v6618 = vunpack.c.l.b16 %v6547
      %v6619 = vunpack.c.l.b16 %v6548
      %v6620 = vunpack.c.l.b16 %v6549
      %v6621 = vunpack.c.l.b16 %v6550
      %v6622 = vunpack.c.l.b16 %v6551
      %v6623 = vunpack.c.l.b16 %v6552
      %v6624 = vunpack.c.l.b16 %v6553
      %v6625 = vunpack.c.l.b16 %v6554
      %v6626 = vunpack.c.l.b16 %v6555
      %v6627 = vunpack.c.l.b16 %v6556
      %v6628 = vunpack.c.l.b16 %v6557
      %v6629 = vunpack.c.l.b16 %v6558
      %v6630 = vunpack.c.l.b16 %v6559
      %v6631 = vunpack.c.l.b16 %v6560
      %v6632 = vunpack.c.l.b16 %v6561
      %v6633 = vunpack.c.l.b16 %v6562
      %v6634 = vunpack.c.l.b16 %v6563
      %v6635 = vunpack.c.l.b16 %v6564
      %v6636 = vunpack.c.l.b16 %v6565
      %v6637 = vunpack.c.l.b16 %v6566
      %v6638 = vunpack.c.l.b16 %v6567
      %v6639 = vpack.c.b16 %v6608, %v6607
      %v6640 = vpack.c.b16 %v6610, %v6609
      %v6641 = vpack.c.b16 %v6612, %v6611
      %v6642 = vpack.c.b16 %v6614, %v6613
      %v6643 = vpack.c.b16 %v6616, %v6615
      %v6644 = vpack.c.b16 %v6618, %v6617
      %v6645 = vpack.c.b16 %v6620, %v6619
      %v6646 = vpack.c.b16 %v6622, %v6621
      %v6647 = vpack.c.b16 %v6624, %v6623
      %v6648 = vpack.c.b16 %v6626, %v6625
      %v6649 = vpack.c.b16 %v6628, %v6627
      %v6650 = vpack.c.b16 %v6630, %v6629
      %v6651 = vpack.c.b16 %v6632, %v6631
      %v6652 = vpack.c.b16 %v6634, %v6633
      %v6653 = vpack.c.b16 %v6636, %v6635
      %v6654 = vpack.c.b16 %v6638, %v6637
      %6671 = vmatprep.subr.bf16.mxu0 0
      %6672 = vmatpush1.bf16.msra.mxu0 %v6639
      %6673 = vmatprep.subr.bf16.mxu0 0
      %6674 = vmatpush1.bf16.msra.mxu0 %v6640
      %6675 = vmatprep.subr.bf16.mxu0 0
      %6676 = vmatpush1.bf16.msra.mxu0 %v6641
      %6677 = vmatprep.subr.bf16.mxu0 0
      %6678 = vmatpush1.bf16.msra.mxu0 %v6642
      %6679 = vmatprep.subr.bf16.mxu0 0
      %6680 = vmatpush1.bf16.msra.mxu0 %v6643
      %6681 = vmatprep.subr.bf16.mxu0 0
      %6682 = vmatpush1.bf16.msra.mxu0 %v6644
      %6683 = vmatprep.subr.bf16.mxu0 0
      %6684 = vmatpush1.bf16.msra.mxu0 %v6645
      %6685 = vmatprep.subr.bf16.mxu0 0
      %6686 = vmatpush1.bf16.msra.mxu0 %v6646
      %6687 = vmatprep.subr.bf16.mxu0 0
      %6688 = vmatpush1.bf16.msra.mxu0 %v6647
      %6689 = vmatprep.subr.bf16.mxu0 0
      %6690 = vmatpush1.bf16.msra.mxu0 %v6648
      %6691 = vmatprep.subr.bf16.mxu0 0
      %6692 = vmatpush1.bf16.msra.mxu0 %v6649
      %6693 = vmatprep.subr.bf16.mxu0 0
      %6694 = vmatpush1.bf16.msra.mxu0 %v6650
      %6695 = vmatprep.subr.bf16.mxu0 0
      %6696 = vmatpush1.bf16.msra.mxu0 %v6651
      %6697 = vmatprep.subr.bf16.mxu0 0
      %6698 = vmatpush1.bf16.msra.mxu0 %v6652
      %6699 = vmatprep.subr.bf16.mxu0 0
      %6700 = vmatpush1.bf16.msra.mxu0 %v6653
      %6701 = vmatprep.subr.bf16.mxu0 0
      %6702 = vmatpush1.bf16.msra.mxu0 %v6654
      %6703 = vmatprep.mubr.bf16.mxu0 %v559
      %6704 = vmatmul.mubr.bf16.gmra.mrb[0].mxu0 %v6528
      %v6705 = vpop.f32.mrb[0].mxu0
      %v6706 = vadd.f32 %v6573, %v6705
      %v6707 = vpop.f32.mrb[0].mxu0
      %v6708 = vpop.f32.mrb[0].mxu0
      %v6709 = vadd.f32 %v6573, %v6708
      %v6710 = vpop.f32.mrb[0].mxu0
      %6711 = vmatprep.mubr.bf16.mxu0 %v560
      %6712 = vmatmul.mubr.bf16.gmra.mrb[0].mxu0 %v6529
      %v6713 = vpop.f32.mrb[0].mxu0
      %v6714 = vadd.f32 %v6573, %v6713
      %v6715 = vpop.f32.mrb[0].mxu0
      %v6716 = vpop.f32.mrb[0].mxu0
      %v6717 = vadd.f32 %v6573, %v6716
      %v6718 = vpop.f32.mrb[0].mxu0
      %6719 = vmatprep.mubr.bf16.mxu0 %v561
      %6720 = vmatmul.mubr.bf16.gmra.mrb[0].mxu0 %v6530
      %v6721 = vpop.f32.mrb[0].mxu0
      %v6722 = vadd.f32 %v6573, %v6721
      %v6723 = vpop.f32.mrb[0].mxu0
      %v6724 = vpop.f32.mrb[0].mxu0
      %v6725 = vadd.f32 %v6573, %v6724
      %v6726 = vpop.f32.mrb[0].mxu0
      %6727 = vmatprep.mubr.bf16.mxu0 %v562
      %6728 = vmatmul.mubr.bf16.gmra.mrb[0].mxu0 %v6531
      %v6729 = vpop.f32.mrb[0].mxu0
      %v6730 = vadd.f32 %v6573, %v6729
      %v6731 = vpop.f32.mrb[0].mxu0
      %v6732 = vpop.f32.mrb[0].mxu0
      %v6733 = vadd.f32 %v6573, %v6732
      %v6734 = vpop.f32.mrb[0].mxu0
      %6735 = vdwg.mxu0
      %v6736 = vmax.f32 %v6706, 0.0
      %v6737 = vmax.f32 %v6709, 0.0
      %v6738 = vmax.f32 %v6714, 0.0
      %v6739 = vmax.f32 %v6717, 0.0
      %v6740 = vmax.f32 %v6722, 0.0
      %v6741 = vmax.f32 %v6725, 0.0
      %v6742 = vmax.f32 %v6730, 0.0
      %v6743 = vmax.f32 %v6733, 0.0
      %v6744 = vpack.c.bf16 %v6737, %v6736
      %v6745 = vpack.c.bf16 %v6739, %v6738
      %v6746 = vpack.c.bf16 %v6741, %v6740
      %v6747 = vpack.c.bf16 %v6743, %v6742
      %v6748 = vld [vmem:[%s11] sm:$0xf]
      %v6749 = vld [vmem:[%s11 + $0x4] sm:$0xf]
      %v6750 = vld [vmem:[%s11 + $0x8] sm:$0xf]
      %v6751 = vld [vmem:[%s11 + $0xc] sm:$0xf]
      %v6752 = vld [vmem:[%s11 + $0x10] sm:$0xf]
      %v6753 = vld [vmem:[%s11 + $0x14] sm:$0xf]
      %v6754 = vld [vmem:[%s11 + $0x18] sm:$0xf]
      %v6755 = vld [vmem:[%s11 + $0x1c] sm:$0xf]
      %v6756 = vld [vmem:[%s11 + $0x20] sm:$0xf]
      %v6757 = vld [vmem:[%s11 + $0x24] sm:$0xf]
      %v6758 = vld [vmem:[%s11 + $0x28] sm:$0xf]
      %v6759 = vld [vmem:[%s11 + $0x2c] sm:$0xf]
      %v6760 = vld [vmem:[%s11 + $0x30] sm:$0xf]
      %v6761 = vld [vmem:[%s11 + $0x34] sm:$0xf]
      %v6762 = vld [vmem:[%s11 + $0x38] sm:$0xf]
      %v6763 = vld [vmem:[%s11 + $0x3c] sm:$0xf]
      %v6764 = vld [vmem:[%s12] sm:$0x1]
      %v6766 = vlaneseq
      %v6767 = vshrl.u32 %v6766, 7
      %v6768 = vsub.s32 0, %v6767
      %v6769 = vrot.slane %v6764, %v6768
      %v6787 = vunpack.c.l.b16 %v6748
      %v6788 = vunpack.c.l.b16 %v6749
      %v6789 = vunpack.c.l.b16 %v6750
      %v6790 = vunpack.c.l.b16 %v6751
      %v6791 = vunpack.c.l.b16 %v6752
      %v6792 = vunpack.c.l.b16 %v6753
      %v6793 = vunpack.c.l.b16 %v6754
      %v6794 = vunpack.c.l.b16 %v6755
      %v6795 = vunpack.c.l.b16 %v6756
      %v6796 = vunpack.c.l.b16 %v6757
      %v6797 = vunpack.c.l.b16 %v6758
      %v6798 = vunpack.c.l.b16 %v6759
      %v6799 = vunpack.c.l.b16 %v6760
      %v6800 = vunpack.c.l.b16 %v6761
      %v6801 = vunpack.c.l.b16 %v6762
      %v6802 = vunpack.c.l.b16 %v6763
      %v6803 = vpack.c.b16 %v6788, %v6787
      %v6804 = vpack.c.b16 %v6790, %v6789
      %v6805 = vpack.c.b16 %v6792, %v6791
      %v6806 = vpack.c.b16 %v6794, %v6793
      %v6807 = vpack.c.b16 %v6796, %v6795
      %v6808 = vpack.c.b16 %v6798, %v6797
      %v6809 = vpack.c.b16 %v6800, %v6799
      %v6810 = vpack.c.b16 %v6802, %v6801
      %6819 = vmatprep.subr.bf16.mxu0 0
      %6820 = vmatpush1.bf16.msra.mxu0 %v6803
      %6821 = vmatprep.subr.bf16.mxu0 0
      %6822 = vmatpush1.bf16.msra.mxu0 %v6804
      %6823 = vmatprep.subr.bf16.mxu0 0
      %6824 = vmatpush1.bf16.msra.mxu0 %v6805
      %6825 = vmatprep.subr.bf16.mxu0 0
      %6826 = vmatpush1.bf16.msra.mxu0 %v6806
      %6827 = vmatprep.subr.bf16.mxu0 0
      %6828 = vmatpush1.bf16.msra.mxu0 %v6807
      %6829 = vmatprep.subr.bf16.mxu0 0
      %6830 = vmatpush1.bf16.msra.mxu0 %v6808
      %6831 = vmatprep.subr.bf16.mxu0 0
      %6832 = vmatpush1.bf16.msra.mxu0 %v6809
      %6833 = vmatprep.subr.bf16.mxu0 0
      %6834 = vmatpush1.bf16.msra.mxu0 %v6810
      %6835 = vmatprep.subr.bf16.mxu0 0
      %6836 = vmatpush1.bf16.msra.mxu0 0
      %6837 = vmatprep.subr.bf16.mxu0 0
      %6838 = vmatpush1.bf16.msra.mxu0 0
      %6839 = vmatprep.subr.bf16.mxu0 0
      %6840 = vmatpush1.bf16.msra.mxu0 0
      %6841 = vmatprep.subr.bf16.mxu0 0
      %6842 = vmatpush1.bf16.msra.mxu0 0
      %6843 = vmatprep.subr.bf16.mxu0 0
      %6844 = vmatpush1.bf16.msra.mxu0 0
      %6845 = vmatprep.subr.bf16.mxu0 0
      %6846 = vmatpush1.bf16.msra.mxu0 0
      %6847 = vmatprep.subr.bf16.mxu0 0
      %6848 = vmatpush1.bf16.msra.mxu0 0
      %6849 = vmatprep.subr.bf16.mxu0 0
      %6850 = vmatpush1.bf16.msra.mxu0 0
      %6851 = vmatprep.mubr.bf16.mxu0 0
      %6852 = vmatmul.mubr.bf16.gmra.mrb[0].mxu0 %v6744
      %v6853 = vpop.f32.mrb[0].mxu0
      %v6854 = vadd.f32 %v6769, %v6853
      %v6855 = vpop.f32.mrb[0].mxu0
      %v6856 = vpop.f32.mrb[0].mxu0
      %v6857 = vadd.f32 %v6769, %v6856
      %v6858 = vpop.f32.mrb[0].mxu0
      %6859 = vmatprep.mubr.bf16.mxu0 0
      %6860 = vmatmul.mubr.bf16.gmra.mrb[0].mxu0 %v6745
      %v6861 = vpop.f32.mrb[0].mxu0
      %v6862 = vadd.f32 %v6769, %v6861
      %v6863 = vpop.f32.mrb[0].mxu0
      %v6864 = vpop.f32.mrb[0].mxu0
      %v6865 = vadd.f32 %v6769, %v6864
      %v6866 = vpop.f32.mrb[0].mxu0
      %6867 = vmatprep.mubr.bf16.mxu0 0
      %6868 = vmatmul.mubr.bf16.gmra.mrb[0].mxu0 %v6746
      %v6869 = vpop.f32.mrb[0].mxu0
      %v6870 = vadd.f32 %v6769, %v6869
      %v6871 = vpop.f32.mrb[0].mxu0
      %v6872 = vpop.f32.mrb[0].mxu0
      %v6873 = vadd.f32 %v6769, %v6872
      %v6874 = vpop.f32.mrb[0].mxu0
      %6875 = vmatprep.mubr.bf16.mxu0 0
      %6876 = vmatmul.mubr.bf16.gmra.mrb[0].mxu0 %v6747
      %v6877 = vpop.f32.mrb[0].mxu0
      %v6878 = vadd.f32 %v6769, %v6877
      %v6879 = vpop.f32.mrb[0].mxu0
      %v6880 = vpop.f32.mrb[0].mxu0
      %v6881 = vadd.f32 %v6769, %v6880
      %v6882 = vpop.f32.mrb[0].mxu0
      %6883 = vdwg.mxu0
      %v6884 = vadd.f32 %v551, %v6854
      %v6885 = vadd.f32 %v552, %v6857
      %v6886 = vadd.f32 %v553, %v6862
      %v6887 = vadd.f32 %v554, %v6865
      %v6888 = vadd.f32 %v555, %v6870
      %v6889 = vadd.f32 %v556, %v6873
      %v6890 = vadd.f32 %v557, %v6878
      %v6891 = vadd.f32 %v558, %v6881
      %6892 = vadd.xlane.f32.xlu0 %v6884
      %v6893 = vpop.xlane.xlu0 %6892
      %6894 = vadd.xlane.f32.xlu0 %v6885
      %v6895 = vpop.xlane.xlu0 %6894
      %6896 = vadd.xlane.f32.xlu0 %v6886
      %v6897 = vpop.xlane.xlu0 %6896
      %6898 = vadd.xlane.f32.xlu0 %v6887
      %v6899 = vpop.xlane.xlu0 %6898
      %6900 = vadd.xlane.f32.xlu0 %v6888
      %v6901 = vpop.xlane.xlu0 %6900
      %6902 = vadd.xlane.f32.xlu0 %v6889
      %v6903 = vpop.xlane.xlu0 %6902
      %6904 = vadd.xlane.f32.xlu0 %v6890
      %v6905 = vpop.xlane.xlu0 %6904
      %6906 = vadd.xlane.f32.xlu0 %v6891
      %v6907 = vpop.xlane.xlu0 %6906
      %v6908 = vrcp.pop 128.0
      %v6909 = vmul.f32 %v6893, %v6908
      %v6910 = vmul.f32 %v6895, %v6908
      %v6911 = vmul.f32 %v6897, %v6908
      %v6912 = vmul.f32 %v6899, %v6908
      %v6913 = vmul.f32 %v6901, %v6908
      %v6914 = vmul.f32 %v6903, %v6908
      %v6915 = vmul.f32 %v6905, %v6908
      %v6916 = vmul.f32 %v6907, %v6908
      %v6917 = vsub.f32 %v6884, %v6909
      %v6918 = vsub.f32 %v6885, %v6910
      %v6919 = vsub.f32 %v6886, %v6911
      %v6920 = vsub.f32 %v6887, %v6912
      %v6921 = vsub.f32 %v6888, %v6913
      %v6922 = vsub.f32 %v6889, %v6914
      %v6923 = vsub.f32 %v6890, %v6915
      %v6924 = vsub.f32 %v6891, %v6916
      %v6925 = vmul.f32 %v6917, %v6917
      %v6926 = vmul.f32 %v6918, %v6918
      %v6927 = vmul.f32 %v6919, %v6919
      %v6928 = vmul.f32 %v6920, %v6920
      %v6929 = vmul.f32 %v6921, %v6921
      %v6930 = vmul.f32 %v6922, %v6922
      %v6931 = vmul.f32 %v6923, %v6923
      %v6932 = vmul.f32 %v6924, %v6924
      %6933 = vadd.xlane.f32.xlu0 %v6925
      %v6934 = vpop.xlane.xlu0 %6933
      %6935 = vadd.xlane.f32.xlu0 %v6926
      %v6936 = vpop.xlane.xlu0 %6935
      %6937 = vadd.xlane.f32.xlu0 %v6927
      %v6938 = vpop.xlane.xlu0 %6937
      %6939 = vadd.xlane.f32.xlu0 %v6928
      %v6940 = vpop.xlane.xlu0 %6939
      %6941 = vadd.xlane.f32.xlu0 %v6929
      %v6942 = vpop.xlane.xlu0 %6941
      %6943 = vadd.xlane.f32.xlu0 %v6930
      %v6944 = vpop.xlane.xlu0 %6943
      %6945 = vadd.xlane.f32.xlu0 %v6931
      %v6946 = vpop.xlane.xlu0 %6945
      %6947 = vadd.xlane.f32.xlu0 %v6932
      %v6948 = vpop.xlane.xlu0 %6947
      %v6949 = vmul.f32 %v6934, %v6908
      %v6950 = vmul.f32 %v6936, %v6908
      %v6951 = vmul.f32 %v6938, %v6908
      %v6952 = vmul.f32 %v6940, %v6908
      %v6953 = vmul.f32 %v6942, %v6908
      %v6954 = vmul.f32 %v6944, %v6908
      %v6955 = vmul.f32 %v6946, %v6908
      %v6956 = vmul.f32 %v6948, %v6908
      %v6957 = vadd.f32 %v6949, 1e-05
      %v6958 = vadd.f32 %v6950, 1e-05
      %v6959 = vadd.f32 %v6951, 1e-05
      %v6960 = vadd.f32 %v6952, 1e-05
      %v6961 = vadd.f32 %v6953, 1e-05
      %v6962 = vadd.f32 %v6954, 1e-05
      %v6963 = vadd.f32 %v6955, 1e-05
      %v6964 = vadd.f32 %v6956, 1e-05
      %v6965 = vrsqrt.pop %v6957
      %v6966 = vrsqrt.pop %v6958
      %v6967 = vrsqrt.pop %v6959
      %v6968 = vrsqrt.pop %v6960
      %v6969 = vrsqrt.pop %v6961
      %v6970 = vrsqrt.pop %v6962
      %v6971 = vrsqrt.pop %v6963
      %v6972 = vrsqrt.pop %v6964
      %v6973 = vmul.f32 %v6917, %v6965
      %v6974 = vmul.f32 %v6918, %v6966
      %v6975 = vmul.f32 %v6919, %v6967
      %v6976 = vmul.f32 %v6920, %v6968
      %v6977 = vmul.f32 %v6921, %v6969
      %v6978 = vmul.f32 %v6922, %v6970
      %v6979 = vmul.f32 %v6923, %v6971
      %v6980 = vmul.f32 %v6924, %v6972
      %v6981 = vld [vmem:[%s13] sm:$0x1]
      %v6983 = vlaneseq
      %v6984 = vshrl.u32 %v6983, 7
      %v6985 = vsub.s32 0, %v6984
      %v6986 = vrot.slane %v6981, %v6985
      %v6988 = vmul.f32 %v6973, %v6986
      %v6989 = vmul.f32 %v6974, %v6986
      %v6990 = vmul.f32 %v6975, %v6986
      %v6991 = vmul.f32 %v6976, %v6986
      %v6992 = vmul.f32 %v6977, %v6986
      %v6993 = vmul.f32 %v6978, %v6986
      %v6994 = vmul.f32 %v6979, %v6986
      %v6995 = vmul.f32 %v6980, %v6986
      %v6996 = vld [vmem:[%s14] sm:$0x1]
      %v6998 = vlaneseq
      %v6999 = vshrl.u32 %v6998, 7
      %v7000 = vsub.s32 0, %v6999
      %v7001 = vrot.slane %v6996, %v7000
      %v7003 = vadd.f32 %v6988, %v7001
      %v7004 = vadd.f32 %v6989, %v7001
      %v7005 = vadd.f32 %v6990, %v7001
      %v7006 = vadd.f32 %v6991, %v7001
      %v7007 = vadd.f32 %v6992, %v7001
      %v7008 = vadd.f32 %v6993, %v7001
      %v7009 = vadd.f32 %v6994, %v7001
      %v7010 = vadd.f32 %v6995, %v7001
      %7011 = vst [vmem:[%s548] sm:$0xff] %v7003
      %7012 = vst [vmem:[%s548 + $0x8] sm:$0xff] %v7004
      %7013 = vst [vmem:[%s548 + $0x10] sm:$0xff] %v7005
      %7014 = vst [vmem:[%s548 + $0x18] sm:$0xff] %v7006
      %7015 = vst [vmem:[%s548 + $0x20] sm:$0xff] %v7007
      %7016 = vst [vmem:[%s548 + $0x28] sm:$0xff] %v7008
      %7017 = vst [vmem:[%s548 + $0x30] sm:$0xff] %v7009
      %7018 = vst [vmem:[%s548 + $0x38] sm:$0xff] %v7010
      %s7019 = smul.u32 8, %s28
      %p7020 = scmp.lt.s32.totalorder %s7019, 15
      %s7021 = scalar_select %p7020, %s7019, 15
      %s7022 = smul.addr %s7021, 8
      %s7023 = scalar_lea.vmem %s15, %s7022
      // Predicated region
      $region81: #{protein3d_forward.2} parent=79 // pred_check
        %p7024 = pneg %p376
      $region82: #{protein3d_forward.2} parent=79 // pred_check_branch
        %7026 = sbr.rel (%p7024) target = $region84
      $region83: #{protein3d_forward.2} parent=79 // pred_region
        %s7027 = smul.u32 8, %s28
      $region84: #{protein3d_forward.2} parent=79 // pred_fallthru
        _
    $region80: #{protein3d_forward.2} parent=5 // pred_fallthru
      _
    %p7028 = scmp.le.s32.totalorder 2, %s23
    // Predicated region
    $region85: #{protein3d_forward.2} parent=5 // pred_check
      %p7029 = pneg %p7028
    $region86: #{protein3d_forward.2} parent=5 // pred_check_branch
      %7031 = sbr.rel (%p7029) target = $region88
    $region87: #{protein3d_forward.2} parent=5 // pred_region
      %s7032 = ssub.s32 %s23, 2
      // Predicated region
      $region89: #{protein3d_forward.2} parent=87 // pred_check
        %p7033 = pneg %p382
      $region90: #{protein3d_forward.2} parent=87 // pred_check_branch
        %7035 = sbr.rel (%p7033) target = $region92
      $region91: #{protein3d_forward.2} parent=87 // pred_region
        %s7036 = smul.u32 8, %s29
        %p7037 = scmp.lt.s32.totalorder %s7036, 15
        %s7038 = scalar_select %p7037, %s7036, 15
        %s7039 = smul.addr %s7038, 8
        %s7040 = scalar_lea.vmem %s15, %s7039
      $region92: #{protein3d_forward.2} parent=87 // pred_fallthru
        _
    $region88: #{protein3d_forward.2} parent=5 // pred_fallthru
      _
  $region6: #{protein3d_forward.2} parent=0 // loop_footer
    %s27 = sadd.s32 1, %s23
  $region7: #{protein3d_forward.2} parent=0 // loop_footer_branch
    %22 = sbr.rel target = $region3
  $region8: #{protein3d_forward.2} parent=0 // loop_exit
    _

</llo_original>
